<compile_context>
chip_gen: v7x
topology: tpu7x:2x2x1
jax: 0.10.0
libtpu: 0.0.40
codegen_flags: <defaults>
</compile_context>

<pallas_src>
import numpy as np
import jax
import jax.numpy as jnp
from jax.experimental import pallas as pl
from jax.experimental.pallas import tpu as pltpu

B = 2          # batch
N = 16         # number of points (Conv1d spatial length)
C_IN = 64      # input channels (fixed by the module)
EPS = 1e-5


# ----------------------------------------------------------------------------
# Pallas kernel: single invocation, whole net.
# ----------------------------------------------------------------------------
def t2_net_kernel(x_ref,
                  w1_ref, b1_ref,
                  w2_ref, b2_ref,
                  w3_ref, b3_ref,
                  w4_ref, b4_ref,
                  w5_ref, b5_ref,
                  w6_ref, b6_ref,
                  out_ref):
    def mm(a_f32, w_ref):
        # bf16 x bf16 on the MXU, f32 accumulation.
        return jnp.dot(a_f32.astype(jnp.bfloat16), w_ref[...],
                       preferred_element_type=jnp.float32)

    x = x_ref[...]                                            # (B*N, 64) f32

    # conv1/2/3 (1x1) + folded BN + ReLU, run on all B*N points at once.
    h = jnp.maximum(mm(x, w1_ref) + b1_ref[...], 0.0)         # (B*N, 64)
    h = jnp.maximum(mm(h, w2_ref) + b2_ref[...], 0.0)         # (B*N, 128)
    h = jnp.maximum(mm(h, w3_ref) + b3_ref[...], 0.0)         # (B*N, 1024)

    # Global max-pool over the point axis (layout-preserving reshape: the
    # sublane dim 32 splits into (B=2, N=16) with N a multiple of 8).
    g = jnp.max(h.reshape(B, N, 1024), axis=1)                # (B, 1024)

    # fc1/fc2 + folded BN + ReLU, fc3 with identity folded into its bias.
    f = jnp.maximum(mm(g, w4_ref) + b4_ref[...], 0.0)         # (B, 512)
    f = jnp.maximum(mm(f, w5_ref) + b5_ref[...], 0.0)         # (B, 256)
    out_ref[...] = mm(f, w6_ref) + b6_ref[...]                # (B, 4096)


def t2_net_pallas(x_bcn, params):
    """x_bcn: (B, 64, N) float32 (PyTorch NCW layout).  Returns (B, 64, 64)."""
    (w1, b1, w2, b2, w3, b3, w4, b4, w5, b5, w6, b6) = params
    x_flat = jnp.transpose(x_bcn, (0, 2, 1)).reshape(B * N, C_IN)

    args = (x_flat, w1, b1, w2, b2, w3, b3, w4, b4, w5, b5, w6, b6)

    # Advisory cost: ~16 MFLOP of matmul, dominated by ~3.7 MB of bf16 weights.
    bytes_accessed = sum(int(np.prod(a.shape)) * a.dtype.itemsize for a in args) \
                     + B * 64 * 64 * 4
    flops = 2 * (B * N) * (64 * 64 + 64 * 128 + 128 * 1024) \
          + 2 * B * (1024 * 512 + 512 * 256 + 256 * 4096)

    out = pl.pallas_call(
        t2_net_kernel,
        out_shape=jax.ShapeDtypeStruct((B, 64 * 64), jnp.float32),
        compiler_params=pltpu.CompilerParams(vmem_limit_bytes=32 << 20),
        cost_estimate=pl.CostEstimate(flops=flops, transcendentals=0,
                                      bytes_accessed=bytes_accessed),
    )(*args)

    return out.reshape(B, 64, 64)


# ----------------------------------------------------------------------------
# Deterministic synthetic parameters (BN + identity folded into matmul/bias).
# ----------------------------------------------------------------------------
def _bn_fold(key, c_out):
    kg, kb, km, kv = jax.random.split(key, 4)
    gamma = jax.random.uniform(kg, (c_out,), jnp.float32, 0.8, 1.2)
    beta = jax.random.uniform(kb, (c_out,), jnp.float32, -0.1, 0.1)
    mean = jax.random.uniform(km, (c_out,), jnp.float32, -0.1, 0.1)
    var = jax.random.uniform(kv, (c_out,), jnp.float32, 0.9, 1.1)
    scale = gamma / jnp.sqrt(var + EPS)
    return scale, beta, mean


def make_params(key):
    ks = jax.random.split(key, 12)

    def wmat(k, c_in, c_out, scale=0.05):
        # stored already transposed: (c_in, c_out), for x @ W
        return jax.random.normal(k, (c_in, c_out), jnp.float32) * scale

    params = []
    # conv1/2/3 : Conv1d(k=1, bias=False) followed by BN -> fold into (W, b).
    for i, (ci, co) in enumerate([(64, 64), (64, 128), (128, 1024)]):
        w = wmat(ks[2 * i], ci, co)
        s, beta, mean = _bn_fold(ks[2 * i + 1], co)
        params.append((w * s[None, :]).astype(jnp.bfloat16))      # bf16 weight
        params.append((beta - mean * s)[None, :])                 # f32 bias
    # fc1, fc2 : Linear(bias=True) followed by BN.
    for i, (ci, co) in enumerate([(1024, 512), (512, 256)]):
        kw, kb = ks[6 + 2 * i], ks[7 + 2 * i]
        w = wmat(kw, ci, co)
        bias = jax.random.normal(kb, (co,), jnp.float32) * 0.05
        s, beta, mean = _bn_fold(jax.random.fold_in(kb, 7), co)
        params.append((w * s[None, :]).astype(jnp.bfloat16))
        params.append(((bias - mean) * s + beta)[None, :])
    # fc3 : Linear(bias=True), no BN; fold the flattened 64x64 identity in.
    w = wmat(ks[10], 256, 64 * 64)
    bias = jax.random.normal(ks[11], (64 * 64,), jnp.float32) * 0.05
    iden = jnp.eye(64, dtype=jnp.float32).reshape(64 * 64)
    params.append(w.astype(jnp.bfloat16))
    params.append((bias + iden)[None, :])
    return tuple(params)


def ref_forward(x_bcn, params):
    """Plain-JAX reference, identical math (bf16 weights, f32 accumulation)."""
    (w1, b1, w2, b2, w3, b3, w4, b4, w5, b5, w6, b6) = params
    x = jnp.transpose(x_bcn, (0, 2, 1)).reshape(B * N, C_IN)

    def mm(a, w):
        return jnp.dot(a.astype(jnp.bfloat16), w,
                       preferred_element_type=jnp.float32)

    h = jnp.maximum(mm(x, w1) + b1, 0.0)
    h = jnp.maximum(mm(h, w2) + b2, 0.0)
    h = jnp.maximum(mm(h, w3) + b3, 0.0)
    g = jnp.max(h.reshape(B, N, 1024), axis=1)                # (B, 1024)
    f = jnp.maximum(mm(g, w4) + b4, 0.0)
    f = jnp.maximum(mm(f, w5) + b5, 0.0)
    o = mm(f, w6) + b6
    return o.reshape(B, 64, 64)


if __name__ == "__main__":
    key = jax.random.PRNGKey(0)
    kx, kp = jax.random.split(key)

    # PyTorch input layout: (B, 64, N) NCW.
    x_torch_layout = jax.random.normal(kx, (B, C_IN, N), jnp.float32)
    params = make_params(kp)

    out = t2_net_pallas(x_torch_layout, params)
    out = jax.block_until_ready(out)

    ref = ref_forward(x_torch_layout, params)
    # bf16 weights / f32 accumulation: only summation-order differences remain.
    np.testing.assert_allclose(np.asarray(out), np.asarray(ref),
                               rtol=2e-3, atol=2e-3)
    assert out.shape == (B, 64, 64)
    print("KERNEL_OK")
</pallas_src>

<mosaic_0001>
module attributes {stable_mosaic.version = 11 : i64} {
  func.func @t2_net_kernel(%arg0: memref<32x64xf32, #tpu.memory_space<vmem>>, %arg1: memref<64x64xbf16, #tpu.memory_space<vmem>>, %arg2: memref<1x64xf32, #tpu.memory_space<vmem>>, %arg3: memref<64x128xbf16, #tpu.memory_space<vmem>>, %arg4: memref<1x128xf32, #tpu.memory_space<vmem>>, %arg5: memref<128x1024xbf16, #tpu.memory_space<vmem>>, %arg6: memref<1x1024xf32, #tpu.memory_space<vmem>>, %arg7: memref<1024x512xbf16, #tpu.memory_space<vmem>>, %arg8: memref<1x512xf32, #tpu.memory_space<vmem>>, %arg9: memref<512x256xbf16, #tpu.memory_space<vmem>>, %arg10: memref<1x256xf32, #tpu.memory_space<vmem>>, %arg11: memref<256x4096xbf16, #tpu.memory_space<vmem>>, %arg12: memref<1x4096xf32, #tpu.memory_space<vmem>>, %arg13: memref<2x4096xf32, #tpu.memory_space<vmem>>) attributes {dimension_semantics = [], scalar_prefetch = 0 : i64, scratch_operands = 0 : i64, tpu.core_type = #tpu.core_type<tc>} {
    %c0 = arith.constant 0 : index
    %c0_0 = arith.constant 0 : index
    %0 = vector.load %arg0[%c0, %c0_0] : memref<32x64xf32, #tpu.memory_space<vmem>>, vector<32x64xf32>
    %1 = arith.truncf %0 : vector<32x64xf32> to vector<32x64xbf16>
    %c0_1 = arith.constant 0 : index
    %c0_2 = arith.constant 0 : index
    %2 = vector.load %arg1[%c0_1, %c0_2] : memref<64x64xbf16, #tpu.memory_space<vmem>>, vector<64x64xbf16>
    %cst = arith.constant dense<0.000000e+00> : vector<32x64xf32>
    %3 = tpu.matmul %1, %2, %cst {dimension_numbers = #tpu.dot_dimension_numbers<[1], [0], [0], [1], [0, 0, 1, 1], [], []>} : vector<32x64xbf16>, vector<64x64xbf16>, vector<32x64xf32> -> vector<32x64xf32>
    %c0_3 = arith.constant 0 : index
    %c0_4 = arith.constant 0 : index
    %4 = vector.load %arg2[%c0_3, %c0_4] : memref<1x64xf32, #tpu.memory_space<vmem>>, vector<1x64xf32>
    %5 = vector.broadcast %4 : vector<1x64xf32> to vector<32x64xf32>
    %6 = arith.addf %3, %5 : vector<32x64xf32>
    %cst_5 = arith.constant 0.000000e+00 : f32
    %7 = vector.broadcast %cst_5 : f32 to vector<32x64xf32>
    %8 = arith.maximumf %6, %7 : vector<32x64xf32>
    %9 = arith.truncf %8 : vector<32x64xf32> to vector<32x64xbf16>
    %c0_6 = arith.constant 0 : index
    %c0_7 = arith.constant 0 : index
    %10 = vector.load %arg3[%c0_6, %c0_7] : memref<64x128xbf16, #tpu.memory_space<vmem>>, vector<64x128xbf16>
    %cst_8 = arith.constant dense<0.000000e+00> : vector<32x128xf32>
    %11 = tpu.matmul %9, %10, %cst_8 {dimension_numbers = #tpu.dot_dimension_numbers<[1], [0], [0], [1], [0, 0, 1, 1], [], []>} : vector<32x64xbf16>, vector<64x128xbf16>, vector<32x128xf32> -> vector<32x128xf32>
    %c0_9 = arith.constant 0 : index
    %c0_10 = arith.constant 0 : index
    %12 = vector.load %arg4[%c0_9, %c0_10] : memref<1x128xf32, #tpu.memory_space<vmem>>, vector<1x128xf32>
    %13 = vector.broadcast %12 : vector<1x128xf32> to vector<32x128xf32>
    %14 = arith.addf %11, %13 : vector<32x128xf32>
    %cst_11 = arith.constant 0.000000e+00 : f32
    %15 = vector.broadcast %cst_11 : f32 to vector<32x128xf32>
    %16 = arith.maximumf %14, %15 : vector<32x128xf32>
    %17 = arith.truncf %16 : vector<32x128xf32> to vector<32x128xbf16>
    %c0_12 = arith.constant 0 : index
    %c0_13 = arith.constant 0 : index
    %18 = vector.load %arg5[%c0_12, %c0_13] : memref<128x1024xbf16, #tpu.memory_space<vmem>>, vector<128x1024xbf16>
    %cst_14 = arith.constant dense<0.000000e+00> : vector<32x1024xf32>
    %19 = tpu.matmul %17, %18, %cst_14 {dimension_numbers = #tpu.dot_dimension_numbers<[1], [0], [0], [1], [0, 0, 1, 1], [], []>} : vector<32x128xbf16>, vector<128x1024xbf16>, vector<32x1024xf32> -> vector<32x1024xf32>
    %c0_15 = arith.constant 0 : index
    %c0_16 = arith.constant 0 : index
    %20 = vector.load %arg6[%c0_15, %c0_16] : memref<1x1024xf32, #tpu.memory_space<vmem>>, vector<1x1024xf32>
    %21 = vector.broadcast %20 : vector<1x1024xf32> to vector<32x1024xf32>
    %22 = arith.addf %19, %21 : vector<32x1024xf32>
    %cst_17 = arith.constant 0.000000e+00 : f32
    %23 = vector.broadcast %cst_17 : f32 to vector<32x1024xf32>
    %24 = arith.maximumf %22, %23 : vector<32x1024xf32>
    %25 = vector.shape_cast %24 : vector<32x1024xf32> to vector<2x16x1024xf32>
    %cst_18 = arith.constant dense<0xFF800000> : vector<2x1024xf32>
    %26 = vector.multi_reduction <maximumf>, %25, %cst_18 [1] : vector<2x16x1024xf32> to vector<2x1024xf32>
    %27 = arith.truncf %26 : vector<2x1024xf32> to vector<2x1024xbf16>
    %c0_19 = arith.constant 0 : index
    %c0_20 = arith.constant 0 : index
    %28 = vector.load %arg7[%c0_19, %c0_20] : memref<1024x512xbf16, #tpu.memory_space<vmem>>, vector<1024x512xbf16>
    %cst_21 = arith.constant dense<0.000000e+00> : vector<2x512xf32>
    %29 = tpu.matmul %27, %28, %cst_21 {dimension_numbers = #tpu.dot_dimension_numbers<[1], [0], [0], [1], [0, 0, 1, 1], [], []>} : vector<2x1024xbf16>, vector<1024x512xbf16>, vector<2x512xf32> -> vector<2x512xf32>
    %c0_22 = arith.constant 0 : index
    %c0_23 = arith.constant 0 : index
    %30 = vector.load %arg8[%c0_22, %c0_23] : memref<1x512xf32, #tpu.memory_space<vmem>>, vector<1x512xf32>
    %31 = vector.broadcast %30 : vector<1x512xf32> to vector<2x512xf32>
    %32 = arith.addf %29, %31 : vector<2x512xf32>
    %cst_24 = arith.constant 0.000000e+00 : f32
    %33 = vector.broadcast %cst_24 : f32 to vector<2x512xf32>
    %34 = arith.maximumf %32, %33 : vector<2x512xf32>
    %35 = arith.truncf %34 : vector<2x512xf32> to vector<2x512xbf16>
    %c0_25 = arith.constant 0 : index
    %c0_26 = arith.constant 0 : index
    %36 = vector.load %arg9[%c0_25, %c0_26] : memref<512x256xbf16, #tpu.memory_space<vmem>>, vector<512x256xbf16>
    %cst_27 = arith.constant dense<0.000000e+00> : vector<2x256xf32>
    %37 = tpu.matmul %35, %36, %cst_27 {dimension_numbers = #tpu.dot_dimension_numbers<[1], [0], [0], [1], [0, 0, 1, 1], [], []>} : vector<2x512xbf16>, vector<512x256xbf16>, vector<2x256xf32> -> vector<2x256xf32>
    %c0_28 = arith.constant 0 : index
    %c0_29 = arith.constant 0 : index
    %38 = vector.load %arg10[%c0_28, %c0_29] : memref<1x256xf32, #tpu.memory_space<vmem>>, vector<1x256xf32>
    %39 = vector.broadcast %38 : vector<1x256xf32> to vector<2x256xf32>
    %40 = arith.addf %37, %39 : vector<2x256xf32>
    %cst_30 = arith.constant 0.000000e+00 : f32
    %41 = vector.broadcast %cst_30 : f32 to vector<2x256xf32>
    %42 = arith.maximumf %40, %41 : vector<2x256xf32>
    %43 = arith.truncf %42 : vector<2x256xf32> to vector<2x256xbf16>
    %c0_31 = arith.constant 0 : index
    %c0_32 = arith.constant 0 : index
    %44 = vector.load %arg11[%c0_31, %c0_32] : memref<256x4096xbf16, #tpu.memory_space<vmem>>, vector<256x4096xbf16>
    %cst_33 = arith.constant dense<0.000000e+00> : vector<2x4096xf32>
    %45 = tpu.matmul %43, %44, %cst_33 {dimension_numbers = #tpu.dot_dimension_numbers<[1], [0], [0], [1], [0, 0, 1, 1], [], []>} : vector<2x256xbf16>, vector<256x4096xbf16>, vector<2x4096xf32> -> vector<2x4096xf32>
    %c0_34 = arith.constant 0 : index
    %c0_35 = arith.constant 0 : index
    %46 = vector.load %arg12[%c0_34, %c0_35] : memref<1x4096xf32, #tpu.memory_space<vmem>>, vector<1x4096xf32>
    %47 = vector.broadcast %46 : vector<1x4096xf32> to vector<2x4096xf32>
    %48 = arith.addf %45, %47 : vector<2x4096xf32>
    %c0_36 = arith.constant 0 : index
    %c0_37 = arith.constant 0 : index
    %49 = vector.load %arg13[%c0_36, %c0_37] : memref<2x4096xf32, #tpu.memory_space<vmem>>, vector<2x4096xf32>
    tpu.vector_store %arg13[%c0_36, %c0_37], %48 {strides = array<i32>} : memref<2x4096xf32, #tpu.memory_space<vmem>>, vector<2x4096xf32>,
    return
  }
}

</mosaic_0001>

<llo_original>
// kernel: tpu_custom_call.1
$region0: #{tpu_custom_call.1}
  #allocation0 [shape = 'u32[]', space=smem, size = 0x4, offset = 0x4, fixed_abs, tag = 'smem constant byte address 0x4 - core index']
  #allocation1 [shape = 'u32[144,128]{1,0:T(1,128)}', space=vmem, size = 0x12000, scoped, tag = 'internal scratch']
  %s0 = inlined_call_operand.hbm [shape: f32[32,64], index: 0, kind: input, shape index: {}]
  %s1 = inlined_call_operand.hbm [shape: bf16[64,64], index: 1, kind: input, shape index: {}]
  %s2 = inlined_call_operand.hbm [shape: f32[1,64], index: 2, kind: input, shape index: {}]
  %s3 = inlined_call_operand.hbm [shape: bf16[64,128], index: 3, kind: input, shape index: {}]
  %s4 = inlined_call_operand.hbm [shape: f32[1,128], index: 4, kind: input, shape index: {}]
  %s5 = inlined_call_operand.hbm [shape: bf16[128,1024], index: 5, kind: input, shape index: {}]
  %s6 = inlined_call_operand.hbm [shape: f32[1,1024], index: 6, kind: input, shape index: {}]
  %s7 = inlined_call_operand.hbm [shape: bf16[1024,512], index: 7, kind: input, shape index: {}]
  %s8 = inlined_call_operand.hbm [shape: f32[1,512], index: 8, kind: input, shape index: {}]
  %s9 = inlined_call_operand.hbm [shape: bf16[512,256], index: 9, kind: input, shape index: {}]
  %s10 = inlined_call_operand.hbm [shape: f32[1,256], index: 10, kind: input, shape index: {}]
  %s11 = inlined_call_operand.hbm [shape: bf16[256,4096], index: 11, kind: input, shape index: {}]
  %s12 = inlined_call_operand.hbm [shape: f32[1,4096], index: 12, kind: input, shape index: {}]
  %s13 = inlined_call_operand.hbm [shape: f32[2,4096], index: 13, kind: output, shape index: {}]
  %s14 = sld [smem:[#allocation0]]
  $region114: #{tpu_custom_call.1} parent=0
    _
  %s16 = ssub.s32 1, %s14
  %s17 = scalar_select 0, %s16, %s14
  $region1: #{tpu_custom_call.1} parent=0
    #allocation2 [shape = 'u8[16384]{0}', space=vmem, size = 0x4000, scoped, tag = 'input window, operand 0, single buffered']
    #allocation3 [shape = 's32[1]{0}', space=sflag, size = 0x4, scoped, tag = 'scoped memory for tpu_custom_call.1']
    #allocation4 [shape = 's32[1]{0}', space=sflag, size = 0x4, scoped, tag = 'scoped memory for tpu_custom_call.1']
    #allocation5 [shape = 'u8[16384]{0}', space=vmem, size = 0x4000, scoped, tag = 'input window, operand 1, single buffered']
    #allocation6 [shape = 's32[1]{0}', space=sflag, size = 0x4, scoped, tag = 'scoped memory for tpu_custom_call.1']
    #allocation7 [shape = 'u8[512]{0}', space=vmem, size = 0x400, scoped, tag = 'input window, operand 2, single buffered']
    #allocation8 [shape = 'u8[16384]{0}', space=vmem, size = 0x4000, scoped, tag = 'input window, operand 3, single buffered']
    #allocation9 [shape = 's32[1]{0}', space=sflag, size = 0x4, scoped, tag = 'scoped memory for tpu_custom_call.1']
    #allocation10 [shape = 'u8[512]{0}', space=vmem, size = 0x400, scoped, tag = 'input window, operand 4, single buffered']
    #allocation11 [shape = 'u8[262144]{0}', space=vmem, size = 0x40000, scoped, tag = 'input window, operand 5, single buffered']
    #allocation12 [shape = 's32[1]{0}', space=sflag, size = 0x4, scoped, tag = 'scoped memory for tpu_custom_call.1']
    #allocation13 [shape = 'u8[4096]{0}', space=vmem, size = 0x1000, scoped, tag = 'input window, operand 6, single buffered']
    #allocation14 [shape = 'u8[1048576]{0}', space=vmem, size = 0x100000, scoped, tag = 'input window, operand 7, single buffered']
    #allocation15 [shape = 's32[1]{0}', space=sflag, size = 0x4, scoped, tag = 'scoped memory for tpu_custom_call.1']
    #allocation16 [shape = 'u8[2048]{0}', space=vmem, size = 0x800, scoped, tag = 'input window, operand 8, single buffered']
    #allocation17 [shape = 'u8[262144]{0}', space=vmem, size = 0x40000, scoped, tag = 'input window, operand 9, single buffered']
    #allocation18 [shape = 's32[1]{0}', space=sflag, size = 0x4, scoped, tag = 'scoped memory for tpu_custom_call.1']
    #allocation19 [shape = 'u8[1024]{0}', space=vmem, size = 0x400, scoped, tag = 'input window, operand 10, single buffered']
    #allocation20 [shape = 'u8[2097152]{0}', space=vmem, size = 0x200000, scoped, tag = 'input window, operand 11, single buffered']
    #allocation21 [shape = 's32[1]{0}', space=sflag, size = 0x4, scoped, tag = 'scoped memory for tpu_custom_call.1']
    #allocation22 [shape = 'u8[16384]{0}', space=vmem, size = 0x4000, scoped, tag = 'input window, operand 12, single buffered']
    #allocation23 [shape = 'u8[32768]{0}', space=vmem, size = 0x8000, scoped, tag = 'output window, operand 0, single buffered']
    %18 = vsyncpa [#allocation3], 0
    %19 = vsyncpa [#allocation6], 0
    %20 = vsyncpa [#allocation9], 0
    %21 = vsyncpa [#allocation12], 0
    %22 = vsyncpa [#allocation15], 0
    %23 = vsyncpa [#allocation18], 0
    %24 = vsyncpa [#allocation21], 0
    %25 = vsyncpa [#allocation4], 0
    // Predicated region
    $region2: #{tpu_custom_call.1} parent=1 // pred_check
      _
    $region3: #{tpu_custom_call.1} parent=1 // pred_check_branch
      %27 = sbr.rel (0) target = $region5
    $region4: #{tpu_custom_call.1} parent=1 // pred_region
      %s29 = ssub.s32 512, 512
      %30 = vsyncadd [#allocation3], %s29
      %s31 = sshll.u32 [#allocation2], 4
      %s32 = int_to_ptr.vmem [resolvable:$true] %s31
      %37 = dma.hbm_to_vmem [thread:$0]  %s0, 512, %s32, [#allocation3], 128, 128, 8
    $region5: #{tpu_custom_call.1} parent=1 // pred_fallthru
      _
    // Predicated region
    $region6: #{tpu_custom_call.1} parent=1 // pred_check
      _
    $region7: #{tpu_custom_call.1} parent=1 // pred_check_branch
      %39 = sbr.rel (0) target = $region9
    $region8: #{tpu_custom_call.1} parent=1 // pred_region
      %s41 = ssub.s32 512, 512
      %42 = vsyncadd [#allocation6], %s41
      %s43 = sshll.u32 [#allocation5], 4
      %s44 = int_to_ptr.vmem [resolvable:$true] %s43
      %49 = dma.hbm_to_vmem [thread:$0]  %s1, 512, %s44, [#allocation6], 64, 64, 4
    $region9: #{tpu_custom_call.1} parent=1 // pred_fallthru
      _
    // Predicated region
    $region10: #{tpu_custom_call.1} parent=1 // pred_check
      _
    $region11: #{tpu_custom_call.1} parent=1 // pred_check_branch
      %51 = sbr.rel (0) target = $region13
    $region12: #{tpu_custom_call.1} parent=1 // pred_region
      %s53 = ssub.s32 16, 16
      %54 = vsyncadd [#allocation6], %s53
      %s56 = sshll.u32 [#allocation7], 4
      %s57 = int_to_ptr.vmem [resolvable:$true] %s56
      %59 = dma.hbm_to_vmem [thread:$0]  %s2, 16, %s57, [#allocation6]
    $region13: #{tpu_custom_call.1} parent=1 // pred_fallthru
      _
    // Predicated region
    $region14: #{tpu_custom_call.1} parent=1 // pred_check
      _
    $region15: #{tpu_custom_call.1} parent=1 // pred_check_branch
      %61 = sbr.rel (0) target = $region17
    $region16: #{tpu_custom_call.1} parent=1 // pred_region
      %s63 = ssub.s32 512, 512
      %64 = vsyncadd [#allocation9], %s63
      %s65 = sshll.u32 [#allocation8], 4
      %s66 = int_to_ptr.vmem [resolvable:$true] %s65
      %71 = dma.hbm_to_vmem [thread:$0]  %s3, 512, %s66, [#allocation9], 64, 64, 4
    $region17: #{tpu_custom_call.1} parent=1 // pred_fallthru
      _
    // Predicated region
    $region18: #{tpu_custom_call.1} parent=1 // pred_check
      _
    $region19: #{tpu_custom_call.1} parent=1 // pred_check_branch
      %73 = sbr.rel (0) target = $region21
    $region20: #{tpu_custom_call.1} parent=1 // pred_region
      %s75 = ssub.s32 16, 16
      %76 = vsyncadd [#allocation9], %s75
      %s78 = sshll.u32 [#allocation10], 4
      %s79 = int_to_ptr.vmem [resolvable:$true] %s78
      %81 = dma.hbm_to_vmem [thread:$0]  %s4, 16, %s79, [#allocation9]
    $region21: #{tpu_custom_call.1} parent=1 // pred_fallthru
      _
    // Predicated region
    $region22: #{tpu_custom_call.1} parent=1 // pred_check
      _
    $region23: #{tpu_custom_call.1} parent=1 // pred_check_branch
      %83 = sbr.rel (0) target = $region25
    $region24: #{tpu_custom_call.1} parent=1 // pred_region
      %s85 = ssub.s32 8192, 8192
      %86 = vsyncadd [#allocation12], %s85
      %s87 = sshll.u32 [#allocation11], 4
      %s88 = int_to_ptr.vmem [resolvable:$true] %s87
      %93 = dma.hbm_to_vmem [thread:$0]  %s5, 8192, %s88, [#allocation12], 512, 512, 32
    $region25: #{tpu_custom_call.1} parent=1 // pred_fallthru
      _
    // Predicated region
    $region26: #{tpu_custom_call.1} parent=1 // pred_check
      _
    $region27: #{tpu_custom_call.1} parent=1 // pred_check_branch
      %95 = sbr.rel (0) target = $region29
    $region28: #{tpu_custom_call.1} parent=1 // pred_region
      %s97 = ssub.s32 128, 128
      %98 = vsyncadd [#allocation12], %s97
      %s100 = sshll.u32 [#allocation13], 4
      %s101 = int_to_ptr.vmem [resolvable:$true] %s100
      %103 = dma.hbm_to_vmem [thread:$0]  %s6, 128, %s101, [#allocation12]
    $region29: #{tpu_custom_call.1} parent=1 // pred_fallthru
      _
    // Predicated region
    $region30: #{tpu_custom_call.1} parent=1 // pred_check
      _
    $region31: #{tpu_custom_call.1} parent=1 // pred_check_branch
      %105 = sbr.rel (0) target = $region33
    $region32: #{tpu_custom_call.1} parent=1 // pred_region
      %s107 = ssub.s32 32768, 32768
      %108 = vsyncadd [#allocation15], %s107
      %s109 = sshll.u32 [#allocation14], 4
      %s110 = int_to_ptr.vmem [resolvable:$true] %s109
      %115 = dma.hbm_to_vmem [thread:$0]  %s7, 32768, %s110, [#allocation15], 256, 256, 16
    $region33: #{tpu_custom_call.1} parent=1 // pred_fallthru
      _
    // Predicated region
    $region34: #{tpu_custom_call.1} parent=1 // pred_check
      _
    $region35: #{tpu_custom_call.1} parent=1 // pred_check_branch
      %117 = sbr.rel (0) target = $region37
    $region36: #{tpu_custom_call.1} parent=1 // pred_region
      %s119 = ssub.s32 64, 64
      %120 = vsyncadd [#allocation15], %s119
      %s122 = sshll.u32 [#allocation16], 4
      %s123 = int_to_ptr.vmem [resolvable:$true] %s122
      %125 = dma.hbm_to_vmem [thread:$0]  %s8, 64, %s123, [#allocation15]
    $region37: #{tpu_custom_call.1} parent=1 // pred_fallthru
      _
    // Predicated region
    $region38: #{tpu_custom_call.1} parent=1 // pred_check
      _
    $region39: #{tpu_custom_call.1} parent=1 // pred_check_branch
      %127 = sbr.rel (0) target = $region41
    $region40: #{tpu_custom_call.1} parent=1 // pred_region
      %s129 = ssub.s32 8192, 8192
      %130 = vsyncadd [#allocation18], %s129
      %s131 = sshll.u32 [#allocation17], 4
      %s132 = int_to_ptr.vmem [resolvable:$true] %s131
      %137 = dma.hbm_to_vmem [thread:$0]  %s9, 8192, %s132, [#allocation18], 128, 128, 8
    $region41: #{tpu_custom_call.1} parent=1 // pred_fallthru
      _
    // Predicated region
    $region42: #{tpu_custom_call.1} parent=1 // pred_check
      _
    $region43: #{tpu_custom_call.1} parent=1 // pred_check_branch
      %139 = sbr.rel (0) target = $region45
    $region44: #{tpu_custom_call.1} parent=1 // pred_region
      %s141 = ssub.s32 32, 32
      %142 = vsyncadd [#allocation18], %s141
      %s144 = sshll.u32 [#allocation19], 4
      %s145 = int_to_ptr.vmem [resolvable:$true] %s144
      %147 = dma.hbm_to_vmem [thread:$0]  %s10, 32, %s145, [#allocation18]
    $region45: #{tpu_custom_call.1} parent=1 // pred_fallthru
      _
    // Predicated region
    $region46: #{tpu_custom_call.1} parent=1 // pred_check
      _
    $region47: #{tpu_custom_call.1} parent=1 // pred_check_branch
      %149 = sbr.rel (0) target = $region49
    $region48: #{tpu_custom_call.1} parent=1 // pred_region
      %s151 = ssub.s32 65536, 65536
      %152 = vsyncadd [#allocation21], %s151
      %s153 = sshll.u32 [#allocation20], 4
      %s154 = int_to_ptr.vmem [resolvable:$true] %s153
      %159 = dma.hbm_to_vmem [thread:$0]  %s11, 65536, %s154, [#allocation21], 2048, 2048, 128
    $region49: #{tpu_custom_call.1} parent=1 // pred_fallthru
      _
    // Predicated region
    $region50: #{tpu_custom_call.1} parent=1 // pred_check
      _
    $region51: #{tpu_custom_call.1} parent=1 // pred_check_branch
      %161 = sbr.rel (0) target = $region53
    $region52: #{tpu_custom_call.1} parent=1 // pred_region
      %s163 = ssub.s32 512, 512
      %164 = vsyncadd [#allocation21], %s163
      %s166 = sshll.u32 [#allocation22], 4
      %s167 = int_to_ptr.vmem [resolvable:$true] %s166
      %169 = dma.hbm_to_vmem [thread:$0]  %s12, 512, %s167, [#allocation21]
    $region53: #{tpu_custom_call.1} parent=1 // pred_fallthru
      _
    // Predicated region
    $region54: #{tpu_custom_call.1} parent=1 // pred_check
      _
    $region55: #{tpu_custom_call.1} parent=1 // pred_check_branch
      %171 = sbr.rel (0) target = $region57
    $region56: #{tpu_custom_call.1} parent=1 // pred_region
      %172 = dma.done [#allocation3], 512
    $region57: #{tpu_custom_call.1} parent=1 // pred_fallthru
      _
    // Predicated region
    $region58: #{tpu_custom_call.1} parent=1 // pred_check
      _
    $region59: #{tpu_custom_call.1} parent=1 // pred_check_branch
      %174 = sbr.rel (0) target = $region61
    $region60: #{tpu_custom_call.1} parent=1 // pred_region
      %175 = dma.done [#allocation6], 512
    $region61: #{tpu_custom_call.1} parent=1 // pred_fallthru
      _
    // Predicated region
    $region62: #{tpu_custom_call.1} parent=1 // pred_check
      _
    $region63: #{tpu_custom_call.1} parent=1 // pred_check_branch
      %177 = sbr.rel (0) target = $region65
    $region64: #{tpu_custom_call.1} parent=1 // pred_region
      %178 = dma.done [#allocation6], 16
    $region65: #{tpu_custom_call.1} parent=1 // pred_fallthru
      _
    // Predicated region
    $region66: #{tpu_custom_call.1} parent=1 // pred_check
      _
    $region67: #{tpu_custom_call.1} parent=1 // pred_check_branch
      %180 = sbr.rel (0) target = $region69
    $region68: #{tpu_custom_call.1} parent=1 // pred_region
      %181 = dma.done [#allocation9], 512
    $region69: #{tpu_custom_call.1} parent=1 // pred_fallthru
      _
    // Predicated region
    $region70: #{tpu_custom_call.1} parent=1 // pred_check
      _
    $region71: #{tpu_custom_call.1} parent=1 // pred_check_branch
      %183 = sbr.rel (0) target = $region73
    $region72: #{tpu_custom_call.1} parent=1 // pred_region
      %184 = dma.done [#allocation9], 16
    $region73: #{tpu_custom_call.1} parent=1 // pred_fallthru
      _
    // Predicated region
    $region74: #{tpu_custom_call.1} parent=1 // pred_check
      _
    $region75: #{tpu_custom_call.1} parent=1 // pred_check_branch
      %186 = sbr.rel (0) target = $region77
    $region76: #{tpu_custom_call.1} parent=1 // pred_region
      %187 = dma.done [#allocation12], 8192
    $region77: #{tpu_custom_call.1} parent=1 // pred_fallthru
      _
    // Predicated region
    $region78: #{tpu_custom_call.1} parent=1 // pred_check
      _
    $region79: #{tpu_custom_call.1} parent=1 // pred_check_branch
      %189 = sbr.rel (0) target = $region81
    $region80: #{tpu_custom_call.1} parent=1 // pred_region
      %190 = dma.done [#allocation12], 128
    $region81: #{tpu_custom_call.1} parent=1 // pred_fallthru
      _
    // Predicated region
    $region82: #{tpu_custom_call.1} parent=1 // pred_check
      _
    $region83: #{tpu_custom_call.1} parent=1 // pred_check_branch
      %192 = sbr.rel (0) target = $region85
    $region84: #{tpu_custom_call.1} parent=1 // pred_region
      %193 = dma.done [#allocation15], 32768
    $region85: #{tpu_custom_call.1} parent=1 // pred_fallthru
      _
    // Predicated region
    $region86: #{tpu_custom_call.1} parent=1 // pred_check
      _
    $region87: #{tpu_custom_call.1} parent=1 // pred_check_branch
      %195 = sbr.rel (0) target = $region89
    $region88: #{tpu_custom_call.1} parent=1 // pred_region
      %196 = dma.done [#allocation15], 64
    $region89: #{tpu_custom_call.1} parent=1 // pred_fallthru
      _
    // Predicated region
    $region90: #{tpu_custom_call.1} parent=1 // pred_check
      _
    $region91: #{tpu_custom_call.1} parent=1 // pred_check_branch
      %198 = sbr.rel (0) target = $region93
    $region92: #{tpu_custom_call.1} parent=1 // pred_region
      %199 = dma.done [#allocation18], 8192
    $region93: #{tpu_custom_call.1} parent=1 // pred_fallthru
      _
    // Predicated region
    $region94: #{tpu_custom_call.1} parent=1 // pred_check
      _
    $region95: #{tpu_custom_call.1} parent=1 // pred_check_branch
      %201 = sbr.rel (0) target = $region97
    $region96: #{tpu_custom_call.1} parent=1 // pred_region
      %202 = dma.done [#allocation18], 32
    $region97: #{tpu_custom_call.1} parent=1 // pred_fallthru
      _
    // Predicated region
    $region98: #{tpu_custom_call.1} parent=1 // pred_check
      _
    $region99: #{tpu_custom_call.1} parent=1 // pred_check_branch
      %204 = sbr.rel (0) target = $region101
    $region100: #{tpu_custom_call.1} parent=1 // pred_region
      %205 = dma.done [#allocation21], 65536
    $region101: #{tpu_custom_call.1} parent=1 // pred_fallthru
      _
    // Predicated region
    $region102: #{tpu_custom_call.1} parent=1 // pred_check
      _
    $region103: #{tpu_custom_call.1} parent=1 // pred_check_branch
      %207 = sbr.rel (0) target = $region105
    $region104: #{tpu_custom_call.1} parent=1 // pred_region
      %208 = dma.done [#allocation21], 512
    $region105: #{tpu_custom_call.1} parent=1 // pred_fallthru
      _
    %v210 = vld [vmem:[#allocation2] sm:$0xff]
    %v211 = vld [vmem:[#allocation2 + $0x8] sm:$0xff]
    %v212 = vld [vmem:[#allocation2 + $0x10] sm:$0xff]
    %v213 = vld [vmem:[#allocation2 + $0x18] sm:$0xff]
    %v214 = vpack.c.bf16 %v211, %v210
    %v215 = vpack.c.bf16 %v213, %v212
    %v216 = vld [vmem:[#allocation5] sm:$0xf]
    %v217 = vld [vmem:[#allocation5 + $0x4] sm:$0xf]
    %v218 = vld [vmem:[#allocation5 + $0x8] sm:$0xf]
    %v219 = vld [vmem:[#allocation5 + $0xc] sm:$0xf]
    %v220 = vld [vmem:[#allocation5 + $0x10] sm:$0xf]
    %v221 = vld [vmem:[#allocation5 + $0x14] sm:$0xf]
    %v222 = vld [vmem:[#allocation5 + $0x18] sm:$0xf]
    %v223 = vld [vmem:[#allocation5 + $0x1c] sm:$0xf]
    %v224 = vld [vmem:[#allocation7] sm:$0x1]
    %v226 = vlaneseq
    %v227 = vshrl.u32 %v226, 7
    %v228 = vsub.s32 0, %v227
    %v229 = vrot.slane %v224, %v228
    %v239 = vunpack.c.l.b16 %v216
    %v240 = vunpack.c.l.b16 %v217
    %v241 = vunpack.c.l.b16 %v218
    %v242 = vunpack.c.l.b16 %v219
    %v243 = vunpack.c.l.b16 %v220
    %v244 = vunpack.c.l.b16 %v221
    %v245 = vunpack.c.l.b16 %v222
    %v246 = vunpack.c.l.b16 %v223
    %v247 = vpack.c.b16 %v240, %v239
    %v248 = vpack.c.b16 %v242, %v241
    %v249 = vpack.c.b16 %v244, %v243
    %v250 = vpack.c.b16 %v246, %v245
    %vm255 = vcmask 523264
    %v257 = vsel %vm255, %v214, 0
    %v260 = vsel %vm255, %v215, 0
    %262 = vmatprep.subr.bf16.mxu0 0
    %263 = vmatpush1.bf16.msra.mxu0 %v247
    %264 = vmatprep.subr.bf16.mxu0 0
    %265 = vmatpush1.bf16.msra.mxu0 %v248
    %266 = vmatprep.subr.bf16.mxu0 0
    %267 = vmatpush1.bf16.msra.mxu0 %v249
    %268 = vmatprep.subr.bf16.mxu0 0
    %269 = vmatpush1.bf16.msra.mxu0 %v250
    %270 = vmatprep.subr.bf16.mxu0 0
    %271 = vmatpush1.bf16.msra.mxu0 0
    %272 = vmatprep.subr.bf16.mxu0 0
    %273 = vmatpush1.bf16.msra.mxu0 0
    %274 = vmatprep.subr.bf16.mxu0 0
    %275 = vmatpush1.bf16.msra.mxu0 0
    %276 = vmatprep.subr.bf16.mxu0 0
    %277 = vmatpush1.bf16.msra.mxu0 0
    %278 = vmatprep.subr.bf16.mxu0 0
    %279 = vmatpush1.bf16.msra.mxu0 0
    %280 = vmatprep.subr.bf16.mxu0 0
    %281 = vmatpush1.bf16.msra.mxu0 0
    %282 = vmatprep.subr.bf16.mxu0 0
    %283 = vmatpush1.bf16.msra.mxu0 0
    %284 = vmatprep.subr.bf16.mxu0 0
    %285 = vmatpush1.bf16.msra.mxu0 0
    %286 = vmatprep.subr.bf16.mxu0 0
    %287 = vmatpush1.bf16.msra.mxu0 0
    %288 = vmatprep.subr.bf16.mxu0 0
    %289 = vmatpush1.bf16.msra.mxu0 0
    %290 = vmatprep.subr.bf16.mxu0 0
    %291 = vmatpush1.bf16.msra.mxu0 0
    %292 = vmatprep.subr.bf16.mxu0 0
    %293 = vmatpush1.bf16.msra.mxu0 0
    %294 = vmatprep.mubr.bf16.mxu0 0
    %295 = vmatmul.mubr.bf16.gmra.mrb[0].mxu0 %v257
    %v296 = vpop.f32.mrb[0].mxu0
    %v297 = vadd.f32 %v229, %v296
    %v298 = vpop.f32.mrb[0].mxu0
    %v299 = vpop.f32.mrb[0].mxu0
    %v300 = vadd.f32 %v229, %v299
    %v301 = vpop.f32.mrb[0].mxu0
    %302 = vmatprep.mubr.bf16.mxu0 0
    %303 = vmatmul.mubr.bf16.gmra.mrb[0].mxu0 %v260
    %v304 = vpop.f32.mrb[0].mxu0
    %v305 = vadd.f32 %v229, %v304
    %v306 = vpop.f32.mrb[0].mxu0
    %v307 = vpop.f32.mrb[0].mxu0
    %v308 = vadd.f32 %v229, %v307
    %v309 = vpop.f32.mrb[0].mxu0
    %310 = vdwg.mxu0
    %v311 = vmax.f32 %v297, 0.0
    %v312 = vmax.f32 %v300, 0.0
    %v313 = vmax.f32 %v305, 0.0
    %v314 = vmax.f32 %v308, 0.0
    %v315 = vpack.c.bf16 %v312, %v311
    %v316 = vpack.c.bf16 %v314, %v313
    %v317 = vld [vmem:[#allocation8] sm:$0xf]
    %v318 = vld [vmem:[#allocation8 + $0x4] sm:$0xf]
    %v319 = vld [vmem:[#allocation8 + $0x8] sm:$0xf]
    %v320 = vld [vmem:[#allocation8 + $0xc] sm:$0xf]
    %v321 = vld [vmem:[#allocation8 + $0x10] sm:$0xf]
    %v322 = vld [vmem:[#allocation8 + $0x14] sm:$0xf]
    %v323 = vld [vmem:[#allocation8 + $0x18] sm:$0xf]
    %v324 = vld [vmem:[#allocation8 + $0x1c] sm:$0xf]
    %v325 = vld [vmem:[#allocation10] sm:$0x1]
    %v327 = vlaneseq
    %v328 = vshrl.u32 %v327, 7
    %v329 = vsub.s32 0, %v328
    %v330 = vrot.slane %v325, %v329
    %v340 = vunpack.c.l.b16 %v317
    %v341 = vunpack.c.l.b16 %v318
    %v342 = vunpack.c.l.b16 %v319
    %v343 = vunpack.c.l.b16 %v320
    %v344 = vunpack.c.l.b16 %v321
    %v345 = vunpack.c.l.b16 %v322
    %v346 = vunpack.c.l.b16 %v323
    %v347 = vunpack.c.l.b16 %v324
    %v348 = vpack.c.b16 %v341, %v340
    %v349 = vpack.c.b16 %v343, %v342
    %v350 = vpack.c.b16 %v345, %v344
    %v351 = vpack.c.b16 %v347, %v346
    %v357 = vsel %vm255, %v315, 0
    %v360 = vsel %vm255, %v316, 0
    %362 = vmatprep.subr.bf16.mxu0 0
    %363 = vmatpush1.bf16.msra.mxu0 %v348
    %364 = vmatprep.subr.bf16.mxu0 0
    %365 = vmatpush1.bf16.msra.mxu0 %v349
    %366 = vmatprep.subr.bf16.mxu0 0
    %367 = vmatpush1.bf16.msra.mxu0 %v350
    %368 = vmatprep.subr.bf16.mxu0 0
    %369 = vmatpush1.bf16.msra.mxu0 %v351
    %370 = vmatprep.subr.bf16.mxu0 0
    %371 = vmatpush1.bf16.msra.mxu0 0
    %372 = vmatprep.subr.bf16.mxu0 0
    %373 = vmatpush1.bf16.msra.mxu0 0
    %374 = vmatprep.subr.bf16.mxu0 0
    %375 = vmatpush1.bf16.msra.mxu0 0
    %376 = vmatprep.subr.bf16.mxu0 0
    %377 = vmatpush1.bf16.msra.mxu0 0
    %378 = vmatprep.subr.bf16.mxu0 0
    %379 = vmatpush1.bf16.msra.mxu0 0
    %380 = vmatprep.subr.bf16.mxu0 0
    %381 = vmatpush1.bf16.msra.mxu0 0
    %382 = vmatprep.subr.bf16.mxu0 0
    %383 = vmatpush1.bf16.msra.mxu0 0
    %384 = vmatprep.subr.bf16.mxu0 0
    %385 = vmatpush1.bf16.msra.mxu0 0
    %386 = vmatprep.subr.bf16.mxu0 0
    %387 = vmatpush1.bf16.msra.mxu0 0
    %388 = vmatprep.subr.bf16.mxu0 0
    %389 = vmatpush1.bf16.msra.mxu0 0
    %390 = vmatprep.subr.bf16.mxu0 0
    %391 = vmatpush1.bf16.msra.mxu0 0
    %392 = vmatprep.subr.bf16.mxu0 0
    %393 = vmatpush1.bf16.msra.mxu0 0
    %394 = vmatprep.mubr.bf16.mxu0 0
    %395 = vmatmul.mubr.bf16.gmra.mrb[0].mxu0 %v357
    %v396 = vpop.f32.mrb[0].mxu0
    %v397 = vadd.f32 %v330, %v396
    %v398 = vpop.f32.mrb[0].mxu0
    %v399 = vpop.f32.mrb[0].mxu0
    %v400 = vadd.f32 %v330, %v399
    %v401 = vpop.f32.mrb[0].mxu0
    %402 = vmatprep.mubr.bf16.mxu0 0
    %403 = vmatmul.mubr.bf16.gmra.mrb[0].mxu0 %v360
    %v404 = vpop.f32.mrb[0].mxu0
    %v405 = vadd.f32 %v330, %v404
    %v406 = vpop.f32.mrb[0].mxu0
    %v407 = vpop.f32.mrb[0].mxu0
    %v408 = vadd.f32 %v330, %v407
    %v409 = vpop.f32.mrb[0].mxu0
    %410 = vdwg.mxu0
    %v411 = vmax.f32 %v397, 0.0
    %v412 = vmax.f32 %v400, 0.0
    %v413 = vmax.f32 %v405, 0.0
    %v414 = vmax.f32 %v408, 0.0
    %v415 = vpack.c.bf16 %v412, %v411
    %v416 = vpack.c.bf16 %v414, %v413
    %v417 = vld [vmem:[#allocation11] sm:$0xff]
    %v418 = vld [vmem:[#allocation11 + $0x8] sm:$0xff]
    %v419 = vld [vmem:[#allocation11 + $0x10] sm:$0xff]
    %v420 = vld [vmem:[#allocation11 + $0x18] sm:$0xff]
    %v421 = vld [vmem:[#allocation11 + $0x20] sm:$0xff]
    %v422 = vld [vmem:[#allocation11 + $0x28] sm:$0xff]
    %v423 = vld [vmem:[#allocation11 + $0x30] sm:$0xff]
    %v424 = vld [vmem:[#allocation11 + $0x38] sm:$0xff]
    %v425 = vld [vmem:[#allocation11 + $0x40] sm:$0xff]
    %v426 = vld [vmem:[#allocation11 + $0x48] sm:$0xff]
    %v427 = vld [vmem:[#allocation11 + $0x50] sm:$0xff]
    %v428 = vld [vmem:[#allocation11 + $0x58] sm:$0xff]
    %v429 = vld [vmem:[#allocation11 + $0x60] sm:$0xff]
    %v430 = vld [vmem:[#allocation11 + $0x68] sm:$0xff]
    %v431 = vld [vmem:[#allocation11 + $0x70] sm:$0xff]
    %v432 = vld [vmem:[#allocation11 + $0x78] sm:$0xff]
    %v433 = vld [vmem:[#allocation11 + $0x80] sm:$0xff]
    %v434 = vld [vmem:[#allocation11 + $0x88] sm:$0xff]
    %v435 = vld [vmem:[#allocation11 + $0x90] sm:$0xff]
    %v436 = vld [vmem:[#allocation11 + $0x98] sm:$0xff]
    %v437 = vld [vmem:[#allocation11 + $0xa0] sm:$0xff]
    %v438 = vld [vmem:[#allocation11 + $0xa8] sm:$0xff]
    %v439 = vld [vmem:[#allocation11 + $0xb0] sm:$0xff]
    %v440 = vld [vmem:[#allocation11 + $0xb8] sm:$0xff]
    %v441 = vld [vmem:[#allocation11 + $0xc0] sm:$0xff]
    %v442 = vld [vmem:[#allocation11 + $0xc8] sm:$0xff]
    %v443 = vld [vmem:[#allocation11 + $0xd0] sm:$0xff]
    %v444 = vld [vmem:[#allocation11 + $0xd8] sm:$0xff]
    %v445 = vld [vmem:[#allocation11 + $0xe0] sm:$0xff]
    %v446 = vld [vmem:[#allocation11 + $0xe8] sm:$0xff]
    %v447 = vld [vmem:[#allocation11 + $0xf0] sm:$0xff]
    %v448 = vld [vmem:[#allocation11 + $0xf8] sm:$0xff]
    %v449 = vld [vmem:[#allocation11 + $0x100] sm:$0xff]
    %v450 = vld [vmem:[#allocation11 + $0x108] sm:$0xff]
    %v451 = vld [vmem:[#allocation11 + $0x110] sm:$0xff]
    %v452 = vld [vmem:[#allocation11 + $0x118] sm:$0xff]
    %v453 = vld [vmem:[#allocation11 + $0x120] sm:$0xff]
    %v454 = vld [vmem:[#allocation11 + $0x128] sm:$0xff]
    %v455 = vld [vmem:[#allocation11 + $0x130] sm:$0xff]
    %v456 = vld [vmem:[#allocation11 + $0x138] sm:$0xff]
    %v457 = vld [vmem:[#allocation11 + $0x140] sm:$0xff]
    %v458 = vld [vmem:[#allocation11 + $0x148] sm:$0xff]
    %v459 = vld [vmem:[#allocation11 + $0x150] sm:$0xff]
    %v460 = vld [vmem:[#allocation11 + $0x158] sm:$0xff]
    %v461 = vld [vmem:[#allocation11 + $0x160] sm:$0xff]
    %v462 = vld [vmem:[#allocation11 + $0x168] sm:$0xff]
    %v463 = vld [vmem:[#allocation11 + $0x170] sm:$0xff]
    %v464 = vld [vmem:[#allocation11 + $0x178] sm:$0xff]
    %v465 = vld [vmem:[#allocation11 + $0x180] sm:$0xff]
    %v466 = vld [vmem:[#allocation11 + $0x188] sm:$0xff]
    %v467 = vld [vmem:[#allocation11 + $0x190] sm:$0xff]
    %v468 = vld [vmem:[#allocation11 + $0x198] sm:$0xff]
    %v469 = vld [vmem:[#allocation11 + $0x1a0] sm:$0xff]
    %v470 = vld [vmem:[#allocation11 + $0x1a8] sm:$0xff]
    %v471 = vld [vmem:[#allocation11 + $0x1b0] sm:$0xff]
    %v472 = vld [vmem:[#allocation11 + $0x1b8] sm:$0xff]
    %v473 = vld [vmem:[#allocation11 + $0x1c0] sm:$0xff]
    %v474 = vld [vmem:[#allocation11 + $0x1c8] sm:$0xff]
    %v475 = vld [vmem:[#allocation11 + $0x1d0] sm:$0xff]
    %v476 = vld [vmem:[#allocation11 + $0x1d8] sm:$0xff]
    %v477 = vld [vmem:[#allocation11 + $0x1e0] sm:$0xff]
    %v478 = vld [vmem:[#allocation11 + $0x1e8] sm:$0xff]
    %v479 = vld [vmem:[#allocation11 + $0x1f0] sm:$0xff]
    %v480 = vld [vmem:[#allocation11 + $0x1f8] sm:$0xff]
    %v481 = vld [vmem:[#allocation13] sm:$0xff]
    %v483 = vlaneseq
    %v484 = vshrl.u32 %v483, 7
    %v485 = vsub.s32 0, %v484
    %v486 = vrot.slane %v481, %v485
    %v487 = vlaneseq
    %v488 = vshrl.u32 %v487, 7
    %v489 = vsub.s32 1, %v488
    %v490 = vrot.slane %v481, %v489
    %v491 = vlaneseq
    %v492 = vshrl.u32 %v491, 7
    %v493 = vsub.s32 2, %v492
    %v494 = vrot.slane %v481, %v493
    %v495 = vlaneseq
    %v496 = vshrl.u32 %v495, 7
    %v497 = vsub.s32 3, %v496
    %v498 = vrot.slane %v481, %v497
    %v499 = vlaneseq
    %v500 = vshrl.u32 %v499, 7
    %v501 = vsub.s32 4, %v500
    %v502 = vrot.slane %v481, %v501
    %v503 = vlaneseq
    %v504 = vshrl.u32 %v503, 7
    %v505 = vsub.s32 5, %v504
    %v506 = vrot.slane %v481, %v505
    %v507 = vlaneseq
    %v508 = vshrl.u32 %v507, 7
    %v509 = vsub.s32 6, %v508
    %v510 = vrot.slane %v481, %v509
    %v511 = vlaneseq
    %v512 = vshrl.u32 %v511, 7
    %v513 = vsub.s32 7, %v512
    %v514 = vrot.slane %v481, %v513
    %v587 = vunpack.c.l.b16 %v417
    %v588 = vunpack.c.h.b16 %v417
    %v589 = vunpack.c.l.b16 %v418
    %v590 = vunpack.c.h.b16 %v418
    %v591 = vunpack.c.l.b16 %v419
    %v592 = vunpack.c.h.b16 %v419
    %v593 = vunpack.c.l.b16 %v420
    %v594 = vunpack.c.h.b16 %v420
    %v595 = vunpack.c.l.b16 %v421
    %v596 = vunpack.c.h.b16 %v421
    %v597 = vunpack.c.l.b16 %v422
    %v598 = vunpack.c.h.b16 %v422
    %v599 = vunpack.c.l.b16 %v423
    %v600 = vunpack.c.h.b16 %v423
    %v601 = vunpack.c.l.b16 %v424
    %v602 = vunpack.c.h.b16 %v424
    %v603 = vunpack.c.l.b16 %v425
    %v604 = vunpack.c.h.b16 %v425
    %v605 = vunpack.c.l.b16 %v426
    %v606 = vunpack.c.h.b16 %v426
    %v607 = vunpack.c.l.b16 %v427
    %v608 = vunpack.c.h.b16 %v427
    %v609 = vunpack.c.l.b16 %v428
    %v610 = vunpack.c.h.b16 %v428
    %v611 = vunpack.c.l.b16 %v429
    %v612 = vunpack.c.h.b16 %v429
    %v613 = vunpack.c.l.b16 %v430
    %v614 = vunpack.c.h.b16 %v430
    %v615 = vunpack.c.l.b16 %v431
    %v616 = vunpack.c.h.b16 %v431
    %v617 = vunpack.c.l.b16 %v432
    %v618 = vunpack.c.h.b16 %v432
    %v619 = vunpack.c.l.b16 %v433
    %v620 = vunpack.c.h.b16 %v433
    %v621 = vunpack.c.l.b16 %v434
    %v622 = vunpack.c.h.b16 %v434
    %v623 = vunpack.c.l.b16 %v435
    %v624 = vunpack.c.h.b16 %v435
    %v625 = vunpack.c.l.b16 %v436
    %v626 = vunpack.c.h.b16 %v436
    %v627 = vunpack.c.l.b16 %v437
    %v628 = vunpack.c.h.b16 %v437
    %v629 = vunpack.c.l.b16 %v438
    %v630 = vunpack.c.h.b16 %v438
    %v631 = vunpack.c.l.b16 %v439
    %v632 = vunpack.c.h.b16 %v439
    %v633 = vunpack.c.l.b16 %v440
    %v634 = vunpack.c.h.b16 %v440
    %v635 = vunpack.c.l.b16 %v441
    %v636 = vunpack.c.h.b16 %v441
    %v637 = vunpack.c.l.b16 %v442
    %v638 = vunpack.c.h.b16 %v442
    %v639 = vunpack.c.l.b16 %v443
    %v640 = vunpack.c.h.b16 %v443
    %v641 = vunpack.c.l.b16 %v444
    %v642 = vunpack.c.h.b16 %v444
    %v643 = vunpack.c.l.b16 %v445
    %v644 = vunpack.c.h.b16 %v445
    %v645 = vunpack.c.l.b16 %v446
    %v646 = vunpack.c.h.b16 %v446
    %v647 = vunpack.c.l.b16 %v447
    %v648 = vunpack.c.h.b16 %v447
    %v649 = vunpack.c.l.b16 %v448
    %v650 = vunpack.c.h.b16 %v448
    %v651 = vunpack.c.l.b16 %v449
    %v652 = vunpack.c.h.b16 %v449
    %v653 = vunpack.c.l.b16 %v450
    %v654 = vunpack.c.h.b16 %v450
    %v655 = vunpack.c.l.b16 %v451
    %v656 = vunpack.c.h.b16 %v451
    %v657 = vunpack.c.l.b16 %v452
    %v658 = vunpack.c.h.b16 %v452
    %v659 = vunpack.c.l.b16 %v453
    %v660 = vunpack.c.h.b16 %v453
    %v661 = vunpack.c.l.b16 %v454
    %v662 = vunpack.c.h.b16 %v454
    %v663 = vunpack.c.l.b16 %v455
    %v664 = vunpack.c.h.b16 %v455
    %v665 = vunpack.c.l.b16 %v456
    %v666 = vunpack.c.h.b16 %v456
    %v667 = vunpack.c.l.b16 %v457
    %v668 = vunpack.c.h.b16 %v457
    %v669 = vunpack.c.l.b16 %v458
    %v670 = vunpack.c.h.b16 %v458
    %v671 = vunpack.c.l.b16 %v459
    %v672 = vunpack.c.h.b16 %v459
    %v673 = vunpack.c.l.b16 %v460
    %v674 = vunpack.c.h.b16 %v460
    %v675 = vunpack.c.l.b16 %v461
    %v676 = vunpack.c.h.b16 %v461
    %v677 = vunpack.c.l.b16 %v462
    %v678 = vunpack.c.h.b16 %v462
    %v679 = vunpack.c.l.b16 %v463
    %v680 = vunpack.c.h.b16 %v463
    %v681 = vunpack.c.l.b16 %v464
    %v682 = vunpack.c.h.b16 %v464
    %v683 = vunpack.c.l.b16 %v465
    %v684 = vunpack.c.h.b16 %v465
    %v685 = vunpack.c.l.b16 %v466
    %v686 = vunpack.c.h.b16 %v466
    %v687 = vunpack.c.l.b16 %v467
    %v688 = vunpack.c.h.b16 %v467
    %v689 = vunpack.c.l.b16 %v468
    %v690 = vunpack.c.h.b16 %v468
    %v691 = vunpack.c.l.b16 %v469
    %v692 = vunpack.c.h.b16 %v469
    %v693 = vunpack.c.l.b16 %v470
    %v694 = vunpack.c.h.b16 %v470
    %v695 = vunpack.c.l.b16 %v471
    %v696 = vunpack.c.h.b16 %v471
    %v697 = vunpack.c.l.b16 %v472
    %v698 = vunpack.c.h.b16 %v472
    %v699 = vunpack.c.l.b16 %v473
    %v700 = vunpack.c.h.b16 %v473
    %v701 = vunpack.c.l.b16 %v474
    %v702 = vunpack.c.h.b16 %v474
    %v703 = vunpack.c.l.b16 %v475
    %v704 = vunpack.c.h.b16 %v475
    %v705 = vunpack.c.l.b16 %v476
    %v706 = vunpack.c.h.b16 %v476
    %v707 = vunpack.c.l.b16 %v477
    %v708 = vunpack.c.h.b16 %v477
    %v709 = vunpack.c.l.b16 %v478
    %v710 = vunpack.c.h.b16 %v478
    %v711 = vunpack.c.l.b16 %v479
    %v712 = vunpack.c.h.b16 %v479
    %v713 = vunpack.c.l.b16 %v480
    %v714 = vunpack.c.h.b16 %v480
    %v715 = vpack.c.b16 %v595, %v587
    %v716 = vpack.c.b16 %v596, %v588
    %v717 = vpack.c.b16 %v597, %v589
    %v718 = vpack.c.b16 %v598, %v590
    %v719 = vpack.c.b16 %v599, %v591
    %v720 = vpack.c.b16 %v600, %v592
    %v721 = vpack.c.b16 %v601, %v593
    %v722 = vpack.c.b16 %v602, %v594
    %v723 = vpack.c.b16 %v611, %v603
    %v724 = vpack.c.b16 %v612, %v604
    %v725 = vpack.c.b16 %v613, %v605
    %v726 = vpack.c.b16 %v614, %v606
    %v727 = vpack.c.b16 %v615, %v607
    %v728 = vpack.c.b16 %v616, %v608
    %v729 = vpack.c.b16 %v617, %v609
    %v730 = vpack.c.b16 %v618, %v610
    %v731 = vpack.c.b16 %v627, %v619
    %v732 = vpack.c.b16 %v628, %v620
    %v733 = vpack.c.b16 %v629, %v621
    %v734 = vpack.c.b16 %v630, %v622
    %v735 = vpack.c.b16 %v631, %v623
    %v736 = vpack.c.b16 %v632, %v624
    %v737 = vpack.c.b16 %v633, %v625
    %v738 = vpack.c.b16 %v634, %v626
    %v739 = vpack.c.b16 %v643, %v635
    %v740 = vpack.c.b16 %v644, %v636
    %v741 = vpack.c.b16 %v645, %v637
    %v742 = vpack.c.b16 %v646, %v638
    %v743 = vpack.c.b16 %v647, %v639
    %v744 = vpack.c.b16 %v648, %v640
    %v745 = vpack.c.b16 %v649, %v641
    %v746 = vpack.c.b16 %v650, %v642
    %v747 = vpack.c.b16 %v659, %v651
    %v748 = vpack.c.b16 %v660, %v652
    %v749 = vpack.c.b16 %v661, %v653
    %v750 = vpack.c.b16 %v662, %v654
    %v751 = vpack.c.b16 %v663, %v655
    %v752 = vpack.c.b16 %v664, %v656
    %v753 = vpack.c.b16 %v665, %v657
    %v754 = vpack.c.b16 %v666, %v658
    %v755 = vpack.c.b16 %v675, %v667
    %v756 = vpack.c.b16 %v676, %v668
    %v757 = vpack.c.b16 %v677, %v669
    %v758 = vpack.c.b16 %v678, %v670
    %v759 = vpack.c.b16 %v679, %v671
    %v760 = vpack.c.b16 %v680, %v672
    %v761 = vpack.c.b16 %v681, %v673
    %v762 = vpack.c.b16 %v682, %v674
    %v763 = vpack.c.b16 %v691, %v683
    %v764 = vpack.c.b16 %v692, %v684
    %v765 = vpack.c.b16 %v693, %v685
    %v766 = vpack.c.b16 %v694, %v686
    %v767 = vpack.c.b16 %v695, %v687
    %v768 = vpack.c.b16 %v696, %v688
    %v769 = vpack.c.b16 %v697, %v689
    %v770 = vpack.c.b16 %v698, %v690
    %v771 = vpack.c.b16 %v707, %v699
    %v772 = vpack.c.b16 %v708, %v700
    %v773 = vpack.c.b16 %v709, %v701
    %v774 = vpack.c.b16 %v710, %v702
    %v775 = vpack.c.b16 %v711, %v703
    %v776 = vpack.c.b16 %v712, %v704
    %v777 = vpack.c.b16 %v713, %v705
    %v778 = vpack.c.b16 %v714, %v706
    %843 = vmatprep.subr.bf16.mxu0 %v716
    %844 = vmatpush1.bf16.msra.mxu0 %v715
    %845 = vmatprep.subr.bf16.mxu0 %v724
    %846 = vmatpush1.bf16.msra.mxu0 %v723
    %847 = vmatprep.subr.bf16.mxu0 %v732
    %848 = vmatpush1.bf16.msra.mxu0 %v731
    %849 = vmatprep.subr.bf16.mxu0 %v740
    %850 = vmatpush1.bf16.msra.mxu0 %v739
    %851 = vmatprep.subr.bf16.mxu0 %v748
    %852 = vmatpush1.bf16.msra.mxu0 %v747
    %853 = vmatprep.subr.bf16.mxu0 %v756
    %854 = vmatpush1.bf16.msra.mxu0 %v755
    %855 = vmatprep.subr.bf16.mxu0 %v764
    %856 = vmatpush1.bf16.msra.mxu0 %v763
    %857 = vmatprep.subr.bf16.mxu0 %v772
    %858 = vmatpush1.bf16.msra.mxu0 %v771
    %859 = vmatprep.subr.bf16.mxu0 0
    %860 = vmatpush1.bf16.msra.mxu0 0
    %861 = vmatprep.subr.bf16.mxu0 0
    %862 = vmatpush1.bf16.msra.mxu0 0
    %863 = vmatprep.subr.bf16.mxu0 0
    %864 = vmatpush1.bf16.msra.mxu0 0
    %865 = vmatprep.subr.bf16.mxu0 0
    %866 = vmatpush1.bf16.msra.mxu0 0
    %867 = vmatprep.subr.bf16.mxu0 0
    %868 = vmatpush1.bf16.msra.mxu0 0
    %869 = vmatprep.subr.bf16.mxu0 0
    %870 = vmatpush1.bf16.msra.mxu0 0
    %871 = vmatprep.subr.bf16.mxu0 0
    %872 = vmatpush1.bf16.msra.mxu0 0
    %873 = vmatprep.subr.bf16.mxu0 0
    %874 = vmatpush1.bf16.msra.mxu0 0
    %875 = vmatprep.mubr.bf16.mxu0 0
    %876 = vmatmul.mubr.bf16.gmra.mrb[0].mxu0 %v415
    %v877 = vpop.f32.mrb[0].mxu0
    %v878 = vadd.f32 %v486, %v877
    %v879 = vpop.f32.mrb[0].mxu0
    %v880 = vadd.f32 %v490, %v879
    %v881 = vpop.f32.mrb[0].mxu0
    %v882 = vadd.f32 %v486, %v881
    %v883 = vpop.f32.mrb[0].mxu0
    %v884 = vadd.f32 %v490, %v883
    %885 = vmatprep.mubr.bf16.mxu0 0
    %886 = vmatmul.mubr.bf16.gmra.mrb[0].mxu0 %v416
    %v887 = vpop.f32.mrb[0].mxu0
    %v888 = vadd.f32 %v486, %v887
    %v889 = vpop.f32.mrb[0].mxu0
    %v890 = vadd.f32 %v490, %v889
    %v891 = vpop.f32.mrb[0].mxu0
    %v892 = vadd.f32 %v486, %v891
    %v893 = vpop.f32.mrb[0].mxu0
    %v894 = vadd.f32 %v490, %v893
    %895 = vdwg.mxu0
    %896 = vmatprep.subr.bf16.mxu0 %v718
    %897 = vmatpush1.bf16.msra.mxu0 %v717
    %898 = vmatprep.subr.bf16.mxu0 %v726
    %899 = vmatpush1.bf16.msra.mxu0 %v725
    %900 = vmatprep.subr.bf16.mxu0 %v734
    %901 = vmatpush1.bf16.msra.mxu0 %v733
    %902 = vmatprep.subr.bf16.mxu0 %v742
    %903 = vmatpush1.bf16.msra.mxu0 %v741
    %904 = vmatprep.subr.bf16.mxu0 %v750
    %905 = vmatpush1.bf16.msra.mxu0 %v749
    %906 = vmatprep.subr.bf16.mxu0 %v758
    %907 = vmatpush1.bf16.msra.mxu0 %v757
    %908 = vmatprep.subr.bf16.mxu0 %v766
    %909 = vmatpush1.bf16.msra.mxu0 %v765
    %910 = vmatprep.subr.bf16.mxu0 %v774
    %911 = vmatpush1.bf16.msra.mxu0 %v773
    %912 = vmatprep.subr.bf16.mxu0 0
    %913 = vmatpush1.bf16.msra.mxu0 0
    %914 = vmatprep.subr.bf16.mxu0 0
    %915 = vmatpush1.bf16.msra.mxu0 0
    %916 = vmatprep.subr.bf16.mxu0 0
    %917 = vmatpush1.bf16.msra.mxu0 0
    %918 = vmatprep.subr.bf16.mxu0 0
    %919 = vmatpush1.bf16.msra.mxu0 0
    %920 = vmatprep.subr.bf16.mxu0 0
    %921 = vmatpush1.bf16.msra.mxu0 0
    %922 = vmatprep.subr.bf16.mxu0 0
    %923 = vmatpush1.bf16.msra.mxu0 0
    %924 = vmatprep.subr.bf16.mxu0 0
    %925 = vmatpush1.bf16.msra.mxu0 0
    %926 = vmatprep.subr.bf16.mxu0 0
    %927 = vmatpush1.bf16.msra.mxu0 0
    %928 = vmatprep.mubr.bf16.mxu0 0
    %929 = vmatmul.mubr.bf16.gmra.mrb[0].mxu0 %v415
    %v930 = vpop.f32.mrb[0].mxu0
    %v931 = vadd.f32 %v494, %v930
    %v932 = vpop.f32.mrb[0].mxu0
    %v933 = vadd.f32 %v498, %v932
    %v934 = vpop.f32.mrb[0].mxu0
    %v935 = vadd.f32 %v494, %v934
    %v936 = vpop.f32.mrb[0].mxu0
    %v937 = vadd.f32 %v498, %v936
    %938 = vmatprep.mubr.bf16.mxu0 0
    %939 = vmatmul.mubr.bf16.gmra.mrb[0].mxu0 %v416
    %v940 = vpop.f32.mrb[0].mxu0
    %v941 = vadd.f32 %v494, %v940
    %v942 = vpop.f32.mrb[0].mxu0
    %v943 = vadd.f32 %v498, %v942
    %v944 = vpop.f32.mrb[0].mxu0
    %v945 = vadd.f32 %v494, %v944
    %v946 = vpop.f32.mrb[0].mxu0
    %v947 = vadd.f32 %v498, %v946
    %948 = vdwg.mxu0
    %949 = vmatprep.subr.bf16.mxu0 %v720
    %950 = vmatpush1.bf16.msra.mxu0 %v719
    %951 = vmatprep.subr.bf16.mxu0 %v728
    %952 = vmatpush1.bf16.msra.mxu0 %v727
    %953 = vmatprep.subr.bf16.mxu0 %v736
    %954 = vmatpush1.bf16.msra.mxu0 %v735
    %955 = vmatprep.subr.bf16.mxu0 %v744
    %956 = vmatpush1.bf16.msra.mxu0 %v743
    %957 = vmatprep.subr.bf16.mxu0 %v752
    %958 = vmatpush1.bf16.msra.mxu0 %v751
    %959 = vmatprep.subr.bf16.mxu0 %v760
    %960 = vmatpush1.bf16.msra.mxu0 %v759
    %961 = vmatprep.subr.bf16.mxu0 %v768
    %962 = vmatpush1.bf16.msra.mxu0 %v767
    %963 = vmatprep.subr.bf16.mxu0 %v776
    %964 = vmatpush1.bf16.msra.mxu0 %v775
    %965 = vmatprep.subr.bf16.mxu0 0
    %966 = vmatpush1.bf16.msra.mxu0 0
    %967 = vmatprep.subr.bf16.mxu0 0
    %968 = vmatpush1.bf16.msra.mxu0 0
    %969 = vmatprep.subr.bf16.mxu0 0
    %970 = vmatpush1.bf16.msra.mxu0 0
    %971 = vmatprep.subr.bf16.mxu0 0
    %972 = vmatpush1.bf16.msra.mxu0 0
    %973 = vmatprep.subr.bf16.mxu0 0
    %974 = vmatpush1.bf16.msra.mxu0 0
    %975 = vmatprep.subr.bf16.mxu0 0
    %976 = vmatpush1.bf16.msra.mxu0 0
    %977 = vmatprep.subr.bf16.mxu0 0
    %978 = vmatpush1.bf16.msra.mxu0 0
    %979 = vmatprep.subr.bf16.mxu0 0
    %980 = vmatpush1.bf16.msra.mxu0 0
    %981 = vmatprep.mubr.bf16.mxu0 0
    %982 = vmatmul.mubr.bf16.gmra.mrb[0].mxu0 %v415
    %v983 = vpop.f32.mrb[0].mxu0
    %v984 = vadd.f32 %v502, %v983
    %v985 = vpop.f32.mrb[0].mxu0
    %v986 = vadd.f32 %v506, %v985
    %v987 = vpop.f32.mrb[0].mxu0
    %v988 = vadd.f32 %v502, %v987
    %v989 = vpop.f32.mrb[0].mxu0
    %v990 = vadd.f32 %v506, %v989
    %991 = vmatprep.mubr.bf16.mxu0 0
    %992 = vmatmul.mubr.bf16.gmra.mrb[0].mxu0 %v416
    %v993 = vpop.f32.mrb[0].mxu0
    %v994 = vadd.f32 %v502, %v993
    %v995 = vpop.f32.mrb[0].mxu0
    %v996 = vadd.f32 %v506, %v995
    %v997 = vpop.f32.mrb[0].mxu0
    %v998 = vadd.f32 %v502, %v997
    %v999 = vpop.f32.mrb[0].mxu0
    %v1000 = vadd.f32 %v506, %v999
    %1001 = vdwg.mxu0
    %1002 = vmatprep.subr.bf16.mxu0 %v722
    %1003 = vmatpush1.bf16.msra.mxu0 %v721
    %1004 = vmatprep.subr.bf16.mxu0 %v730
    %1005 = vmatpush1.bf16.msra.mxu0 %v729
    %1006 = vmatprep.subr.bf16.mxu0 %v738
    %1007 = vmatpush1.bf16.msra.mxu0 %v737
    %1008 = vmatprep.subr.bf16.mxu0 %v746
    %1009 = vmatpush1.bf16.msra.mxu0 %v745
    %1010 = vmatprep.subr.bf16.mxu0 %v754
    %1011 = vmatpush1.bf16.msra.mxu0 %v753
    %1012 = vmatprep.subr.bf16.mxu0 %v762
    %1013 = vmatpush1.bf16.msra.mxu0 %v761
    %1014 = vmatprep.subr.bf16.mxu0 %v770
    %1015 = vmatpush1.bf16.msra.mxu0 %v769
    %1016 = vmatprep.subr.bf16.mxu0 %v778
    %1017 = vmatpush1.bf16.msra.mxu0 %v777
    %1018 = vmatprep.subr.bf16.mxu0 0
    %1019 = vmatpush1.bf16.msra.mxu0 0
    %1020 = vmatprep.subr.bf16.mxu0 0
    %1021 = vmatpush1.bf16.msra.mxu0 0
    %1022 = vmatprep.subr.bf16.mxu0 0
    %1023 = vmatpush1.bf16.msra.mxu0 0
    %1024 = vmatprep.subr.bf16.mxu0 0
    %1025 = vmatpush1.bf16.msra.mxu0 0
    %1026 = vmatprep.subr.bf16.mxu0 0
    %1027 = vmatpush1.bf16.msra.mxu0 0
    %1028 = vmatprep.subr.bf16.mxu0 0
    %1029 = vmatpush1.bf16.msra.mxu0 0
    %1030 = vmatprep.subr.bf16.mxu0 0
    %1031 = vmatpush1.bf16.msra.mxu0 0
    %1032 = vmatprep.subr.bf16.mxu0 0
    %1033 = vmatpush1.bf16.msra.mxu0 0
    %1034 = vmatprep.mubr.bf16.mxu0 0
    %1035 = vmatmul.mubr.bf16.gmra.mrb[0].mxu0 %v415
    %v1036 = vpop.f32.mrb[0].mxu0
    %v1037 = vadd.f32 %v510, %v1036
    %v1038 = vpop.f32.mrb[0].mxu0
    %v1039 = vadd.f32 %v514, %v1038
    %v1040 = vpop.f32.mrb[0].mxu0
    %v1041 = vadd.f32 %v510, %v1040
    %v1042 = vpop.f32.mrb[0].mxu0
    %v1043 = vadd.f32 %v514, %v1042
    %1044 = vmatprep.mubr.bf16.mxu0 0
    %1045 = vmatmul.mubr.bf16.gmra.mrb[0].mxu0 %v416
    %v1046 = vpop.f32.mrb[0].mxu0
    %v1047 = vadd.f32 %v510, %v1046
    %v1048 = vpop.f32.mrb[0].mxu0
    %v1049 = vadd.f32 %v514, %v1048
    %v1050 = vpop.f32.mrb[0].mxu0
    %v1051 = vadd.f32 %v510, %v1050
    %v1052 = vpop.f32.mrb[0].mxu0
    %v1053 = vadd.f32 %v514, %v1052
    %1054 = vdwg.mxu0
    %v1055 = vmax.f32 %v878, 0.0
    %v1056 = vmax.f32 %v880, 0.0
    %v1057 = vmax.f32 %v931, 0.0
    %v1058 = vmax.f32 %v933, 0.0
    %v1059 = vmax.f32 %v984, 0.0
    %v1060 = vmax.f32 %v986, 0.0
    %v1061 = vmax.f32 %v1037, 0.0
    %v1062 = vmax.f32 %v1039, 0.0
    %v1063 = vmax.f32 %v882, 0.0
    %v1064 = vmax.f32 %v884, 0.0
    %v1065 = vmax.f32 %v935, 0.0
    %v1066 = vmax.f32 %v937, 0.0
    %v1067 = vmax.f32 %v988, 0.0
    %v1068 = vmax.f32 %v990, 0.0
    %v1069 = vmax.f32 %v1041, 0.0
    %v1070 = vmax.f32 %v1043, 0.0
    %v1071 = vmax.f32 %v888, 0.0
    %v1072 = vmax.f32 %v890, 0.0
    %v1073 = vmax.f32 %v941, 0.0
    %v1074 = vmax.f32 %v943, 0.0
    %v1075 = vmax.f32 %v994, 0.0
    %v1076 = vmax.f32 %v996, 0.0
    %v1077 = vmax.f32 %v1047, 0.0
    %v1078 = vmax.f32 %v1049, 0.0
    %v1079 = vmax.f32 %v892, 0.0
    %v1080 = vmax.f32 %v894, 0.0
    %v1081 = vmax.f32 %v945, 0.0
    %v1082 = vmax.f32 %v947, 0.0
    %v1083 = vmax.f32 %v998, 0.0
    %v1084 = vmax.f32 %v1000, 0.0
    %v1085 = vmax.f32 %v1051, 0.0
    %v1086 = vmax.f32 %v1053, 0.0
    %v1087 = vmax.f32 %v1055, %v1063
    %v1088 = vrot.slane %v1087, 4
    %v1089 = vmax.f32 %v1087, %v1088
    %v1090 = vrot.slane %v1089, 2
    %v1091 = vmax.f32 %v1089, %v1090
    %v1092 = vrot.slane %v1091, 1
    %v1093 = vmax.f32 %v1091, %v1092
    %v1094 = vmax.f32 %v1056, %v1064
    %v1095 = vrot.slane %v1094, 4
    %v1096 = vmax.f32 %v1094, %v1095
    %v1097 = vrot.slane %v1096, 2
    %v1098 = vmax.f32 %v1096, %v1097
    %v1099 = vrot.slane %v1098, 1
    %v1100 = vmax.f32 %v1098, %v1099
    %v1101 = vmax.f32 %v1057, %v1065
    %v1102 = vrot.slane %v1101, 4
    %v1103 = vmax.f32 %v1101, %v1102
    %v1104 = vrot.slane %v1103, 2
    %v1105 = vmax.f32 %v1103, %v1104
    %v1106 = vrot.slane %v1105, 1
    %v1107 = vmax.f32 %v1105, %v1106
    %v1108 = vmax.f32 %v1058, %v1066
    %v1109 = vrot.slane %v1108, 4
    %v1110 = vmax.f32 %v1108, %v1109
    %v1111 = vrot.slane %v1110, 2
    %v1112 = vmax.f32 %v1110, %v1111
    %v1113 = vrot.slane %v1112, 1
    %v1114 = vmax.f32 %v1112, %v1113
    %v1115 = vmax.f32 %v1059, %v1067
    %v1116 = vrot.slane %v1115, 4
    %v1117 = vmax.f32 %v1115, %v1116
    %v1118 = vrot.slane %v1117, 2
    %v1119 = vmax.f32 %v1117, %v1118
    %v1120 = vrot.slane %v1119, 1
    %v1121 = vmax.f32 %v1119, %v1120
    %v1122 = vmax.f32 %v1060, %v1068
    %v1123 = vrot.slane %v1122, 4
    %v1124 = vmax.f32 %v1122, %v1123
    %v1125 = vrot.slane %v1124, 2
    %v1126 = vmax.f32 %v1124, %v1125
    %v1127 = vrot.slane %v1126, 1
    %v1128 = vmax.f32 %v1126, %v1127
    %v1129 = vmax.f32 %v1061, %v1069
    %v1130 = vrot.slane %v1129, 4
    %v1131 = vmax.f32 %v1129, %v1130
    %v1132 = vrot.slane %v1131, 2
    %v1133 = vmax.f32 %v1131, %v1132
    %v1134 = vrot.slane %v1133, 1
    %v1135 = vmax.f32 %v1133, %v1134
    %v1136 = vmax.f32 %v1062, %v1070
    %v1137 = vrot.slane %v1136, 4
    %v1138 = vmax.f32 %v1136, %v1137
    %v1139 = vrot.slane %v1138, 2
    %v1140 = vmax.f32 %v1138, %v1139
    %v1141 = vrot.slane %v1140, 1
    %v1142 = vmax.f32 %v1140, %v1141
    %v1143 = vmax.f32 %v1071, %v1079
    %v1144 = vrot.slane %v1143, 4
    %v1145 = vmax.f32 %v1143, %v1144
    %v1146 = vrot.slane %v1145, 2
    %v1147 = vmax.f32 %v1145, %v1146
    %v1148 = vrot.slane %v1147, 1
    %v1149 = vmax.f32 %v1147, %v1148
    %v1150 = vmax.f32 %v1072, %v1080
    %v1151 = vrot.slane %v1150, 4
    %v1152 = vmax.f32 %v1150, %v1151
    %v1153 = vrot.slane %v1152, 2
    %v1154 = vmax.f32 %v1152, %v1153
    %v1155 = vrot.slane %v1154, 1
    %v1156 = vmax.f32 %v1154, %v1155
    %v1157 = vmax.f32 %v1073, %v1081
    %v1158 = vrot.slane %v1157, 4
    %v1159 = vmax.f32 %v1157, %v1158
    %v1160 = vrot.slane %v1159, 2
    %v1161 = vmax.f32 %v1159, %v1160
    %v1162 = vrot.slane %v1161, 1
    %v1163 = vmax.f32 %v1161, %v1162
    %v1164 = vmax.f32 %v1074, %v1082
    %v1165 = vrot.slane %v1164, 4
    %v1166 = vmax.f32 %v1164, %v1165
    %v1167 = vrot.slane %v1166, 2
    %v1168 = vmax.f32 %v1166, %v1167
    %v1169 = vrot.slane %v1168, 1
    %v1170 = vmax.f32 %v1168, %v1169
    %v1171 = vmax.f32 %v1075, %v1083
    %v1172 = vrot.slane %v1171, 4
    %v1173 = vmax.f32 %v1171, %v1172
    %v1174 = vrot.slane %v1173, 2
    %v1175 = vmax.f32 %v1173, %v1174
    %v1176 = vrot.slane %v1175, 1
    %v1177 = vmax.f32 %v1175, %v1176
    %v1178 = vmax.f32 %v1076, %v1084
    %v1179 = vrot.slane %v1178, 4
    %v1180 = vmax.f32 %v1178, %v1179
    %v1181 = vrot.slane %v1180, 2
    %v1182 = vmax.f32 %v1180, %v1181
    %v1183 = vrot.slane %v1182, 1
    %v1184 = vmax.f32 %v1182, %v1183
    %v1185 = vmax.f32 %v1077, %v1085
    %v1186 = vrot.slane %v1185, 4
    %v1187 = vmax.f32 %v1185, %v1186
    %v1188 = vrot.slane %v1187, 2
    %v1189 = vmax.f32 %v1187, %v1188
    %v1190 = vrot.slane %v1189, 1
    %v1191 = vmax.f32 %v1189, %v1190
    %v1192 = vmax.f32 %v1078, %v1086
    %v1193 = vrot.slane %v1192, 4
    %v1194 = vmax.f32 %v1192, %v1193
    %v1195 = vrot.slane %v1194, 2
    %v1196 = vmax.f32 %v1194, %v1195
    %v1197 = vrot.slane %v1196, 1
    %v1198 = vmax.f32 %v1196, %v1197
    %v1199 = vpack.c.bf16 %v1093, %v1093
    %v1200 = vpack.c.bf16 %v1100, %v1100
    %v1201 = vpack.c.bf16 %v1107, %v1107
    %v1202 = vpack.c.bf16 %v1114, %v1114
    %v1203 = vpack.c.bf16 %v1121, %v1121
    %v1204 = vpack.c.bf16 %v1128, %v1128
    %v1205 = vpack.c.bf16 %v1135, %v1135
    %v1206 = vpack.c.bf16 %v1142, %v1142
    %v1207 = vpack.c.bf16 %v1149, %v1149
    %v1208 = vpack.c.bf16 %v1156, %v1156
    %v1209 = vpack.c.bf16 %v1163, %v1163
    %v1210 = vpack.c.bf16 %v1170, %v1170
    %v1211 = vpack.c.bf16 %v1177, %v1177
    %v1212 = vpack.c.bf16 %v1184, %v1184
    %v1213 = vpack.c.bf16 %v1191, %v1191
    %v1214 = vpack.c.bf16 %v1198, %v1198
    %v1215 = vld [vmem:[#allocation14] sm:$0xff]
    %v1216 = vld [vmem:[#allocation14 + $0x8] sm:$0xff]
    %v1217 = vld [vmem:[#allocation14 + $0x10] sm:$0xff]
    %v1218 = vld [vmem:[#allocation14 + $0x18] sm:$0xff]
    %v1219 = vld [vmem:[#allocation14 + $0x20] sm:$0xff]
    %v1220 = vld [vmem:[#allocation14 + $0x28] sm:$0xff]
    %v1221 = vld [vmem:[#allocation14 + $0x30] sm:$0xff]
    %v1222 = vld [vmem:[#allocation14 + $0x38] sm:$0xff]
    %v1223 = vld [vmem:[#allocation14 + $0x40] sm:$0xff]
    %v1224 = vld [vmem:[#allocation14 + $0x48] sm:$0xff]
    %v1225 = vld [vmem:[#allocation14 + $0x50] sm:$0xff]
    %v1226 = vld [vmem:[#allocation14 + $0x58] sm:$0xff]
    %v1227 = vld [vmem:[#allocation14 + $0x60] sm:$0xff]
    %v1228 = vld [vmem:[#allocation14 + $0x68] sm:$0xff]
    %v1229 = vld [vmem:[#allocation14 + $0x70] sm:$0xff]
    %v1230 = vld [vmem:[#allocation14 + $0x78] sm:$0xff]
    %v1231 = vld [vmem:[#allocation14 + $0x80] sm:$0xff]
    %v1232 = vld [vmem:[#allocation14 + $0x88] sm:$0xff]
    %v1233 = vld [vmem:[#allocation14 + $0x90] sm:$0xff]
    %v1234 = vld [vmem:[#allocation14 + $0x98] sm:$0xff]
    %v1235 = vld [vmem:[#allocation14 + $0xa0] sm:$0xff]
    %v1236 = vld [vmem:[#allocation14 + $0xa8] sm:$0xff]
    %v1237 = vld [vmem:[#allocation14 + $0xb0] sm:$0xff]
    %v1238 = vld [vmem:[#allocation14 + $0xb8] sm:$0xff]
    %v1239 = vld [vmem:[#allocation14 + $0xc0] sm:$0xff]
    %v1240 = vld [vmem:[#allocation14 + $0xc8] sm:$0xff]
    %v1241 = vld [vmem:[#allocation14 + $0xd0] sm:$0xff]
    %v1242 = vld [vmem:[#allocation14 + $0xd8] sm:$0xff]
    %v1243 = vld [vmem:[#allocation14 + $0xe0] sm:$0xff]
    %v1244 = vld [vmem:[#allocation14 + $0xe8] sm:$0xff]
    %v1245 = vld [vmem:[#allocation14 + $0xf0] sm:$0xff]
    %v1246 = vld [vmem:[#allocation14 + $0xf8] sm:$0xff]
    %v1247 = vld [vmem:[#allocation14 + $0x100] sm:$0xff]
    %v1248 = vld [vmem:[#allocation14 + $0x108] sm:$0xff]
    %v1249 = vld [vmem:[#allocation14 + $0x110] sm:$0xff]
    %v1250 = vld [vmem:[#allocation14 + $0x118] sm:$0xff]
    %v1251 = vld [vmem:[#allocation14 + $0x120] sm:$0xff]
    %v1252 = vld [vmem:[#allocation14 + $0x128] sm:$0xff]
    %v1253 = vld [vmem:[#allocation14 + $0x130] sm:$0xff]
    %v1254 = vld [vmem:[#allocation14 + $0x138] sm:$0xff]
    %v1255 = vld [vmem:[#allocation14 + $0x140] sm:$0xff]
    %v1256 = vld [vmem:[#allocation14 + $0x148] sm:$0xff]
    %v1257 = vld [vmem:[#allocation14 + $0x150] sm:$0xff]
    %v1258 = vld [vmem:[#allocation14 + $0x158] sm:$0xff]
    %v1259 = vld [vmem:[#allocation14 + $0x160] sm:$0xff]
    %v1260 = vld [vmem:[#allocation14 + $0x168] sm:$0xff]
    %v1261 = vld [vmem:[#allocation14 + $0x170] sm:$0xff]
    %v1262 = vld [vmem:[#allocation14 + $0x178] sm:$0xff]
    %v1263 = vld [vmem:[#allocation14 + $0x180] sm:$0xff]
    %v1264 = vld [vmem:[#allocation14 + $0x188] sm:$0xff]
    %v1265 = vld [vmem:[#allocation14 + $0x190] sm:$0xff]
    %v1266 = vld [vmem:[#allocation14 + $0x198] sm:$0xff]
    %v1267 = vld [vmem:[#allocation14 + $0x1a0] sm:$0xff]
    %v1268 = vld [vmem:[#allocation14 + $0x1a8] sm:$0xff]
    %v1269 = vld [vmem:[#allocation14 + $0x1b0] sm:$0xff]
    %v1270 = vld [vmem:[#allocation14 + $0x1b8] sm:$0xff]
    %v1271 = vld [vmem:[#allocation14 + $0x1c0] sm:$0xff]
    %v1272 = vld [vmem:[#allocation14 + $0x1c8] sm:$0xff]
    %v1273 = vld [vmem:[#allocation14 + $0x1d0] sm:$0xff]
    %v1274 = vld [vmem:[#allocation14 + $0x1d8] sm:$0xff]
    %v1275 = vld [vmem:[#allocation14 + $0x1e0] sm:$0xff]
    %v1276 = vld [vmem:[#allocation14 + $0x1e8] sm:$0xff]
    %v1277 = vld [vmem:[#allocation14 + $0x1f0] sm:$0xff]
    %v1278 = vld [vmem:[#allocation14 + $0x1f8] sm:$0xff]
    %v1279 = vld [vmem:[#allocation14 + $0x200] sm:$0xff]
    %v1280 = vld [vmem:[#allocation14 + $0x208] sm:$0xff]
    %v1281 = vld [vmem:[#allocation14 + $0x210] sm:$0xff]
    %v1282 = vld [vmem:[#allocation14 + $0x218] sm:$0xff]
    %v1283 = vld [vmem:[#allocation14 + $0x220] sm:$0xff]
    %v1284 = vld [vmem:[#allocation14 + $0x228] sm:$0xff]
    %v1285 = vld [vmem:[#allocation14 + $0x230] sm:$0xff]
    %v1286 = vld [vmem:[#allocation14 + $0x238] sm:$0xff]
    %v1287 = vld [vmem:[#allocation14 + $0x240] sm:$0xff]
    %v1288 = vld [vmem:[#allocation14 + $0x248] sm:$0xff]
    %v1289 = vld [vmem:[#allocation14 + $0x250] sm:$0xff]
    %v1290 = vld [vmem:[#allocation14 + $0x258] sm:$0xff]
    %v1291 = vld [vmem:[#allocation14 + $0x260] sm:$0xff]
    %v1292 = vld [vmem:[#allocation14 + $0x268] sm:$0xff]
    %v1293 = vld [vmem:[#allocation14 + $0x270] sm:$0xff]
    %v1294 = vld [vmem:[#allocation14 + $0x278] sm:$0xff]
    %v1295 = vld [vmem:[#allocation14 + $0x280] sm:$0xff]
    %v1296 = vld [vmem:[#allocation14 + $0x288] sm:$0xff]
    %v1297 = vld [vmem:[#allocation14 + $0x290] sm:$0xff]
    %v1298 = vld [vmem:[#allocation14 + $0x298] sm:$0xff]
    %v1299 = vld [vmem:[#allocation14 + $0x2a0] sm:$0xff]
    %v1300 = vld [vmem:[#allocation14 + $0x2a8] sm:$0xff]
    %v1301 = vld [vmem:[#allocation14 + $0x2b0] sm:$0xff]
    %v1302 = vld [vmem:[#allocation14 + $0x2b8] sm:$0xff]
    %v1303 = vld [vmem:[#allocation14 + $0x2c0] sm:$0xff]
    %v1304 = vld [vmem:[#allocation14 + $0x2c8] sm:$0xff]
    %v1305 = vld [vmem:[#allocation14 + $0x2d0] sm:$0xff]
    %v1306 = vld [vmem:[#allocation14 + $0x2d8] sm:$0xff]
    %v1307 = vld [vmem:[#allocation14 + $0x2e0] sm:$0xff]
    %v1308 = vld [vmem:[#allocation14 + $0x2e8] sm:$0xff]
    %v1309 = vld [vmem:[#allocation14 + $0x2f0] sm:$0xff]
    %v1310 = vld [vmem:[#allocation14 + $0x2f8] sm:$0xff]
    %v1311 = vld [vmem:[#allocation14 + $0x300] sm:$0xff]
    %v1312 = vld [vmem:[#allocation14 + $0x308] sm:$0xff]
    %v1313 = vld [vmem:[#allocation14 + $0x310] sm:$0xff]
    %v1314 = vld [vmem:[#allocation14 + $0x318] sm:$0xff]
    %v1315 = vld [vmem:[#allocation14 + $0x320] sm:$0xff]
    %v1316 = vld [vmem:[#allocation14 + $0x328] sm:$0xff]
    %v1317 = vld [vmem:[#allocation14 + $0x330] sm:$0xff]
    %v1318 = vld [vmem:[#allocation14 + $0x338] sm:$0xff]
    %v1319 = vld [vmem:[#allocation14 + $0x340] sm:$0xff]
    %v1320 = vld [vmem:[#allocation14 + $0x348] sm:$0xff]
    %v1321 = vld [vmem:[#allocation14 + $0x350] sm:$0xff]
    %v1322 = vld [vmem:[#allocation14 + $0x358] sm:$0xff]
    %v1323 = vld [vmem:[#allocation14 + $0x360] sm:$0xff]
    %v1324 = vld [vmem:[#allocation14 + $0x368] sm:$0xff]
    %v1325 = vld [vmem:[#allocation14 + $0x370] sm:$0xff]
    %v1326 = vld [vmem:[#allocation14 + $0x378] sm:$0xff]
    %v1327 = vld [vmem:[#allocation14 + $0x380] sm:$0xff]
    %v1328 = vld [vmem:[#allocation14 + $0x388] sm:$0xff]
    %v1329 = vld [vmem:[#allocation14 + $0x390] sm:$0xff]
    %v1330 = vld [vmem:[#allocation14 + $0x398] sm:$0xff]
    %v1331 = vld [vmem:[#allocation14 + $0x3a0] sm:$0xff]
    %v1332 = vld [vmem:[#allocation14 + $0x3a8] sm:$0xff]
    %v1333 = vld [vmem:[#allocation14 + $0x3b0] sm:$0xff]
    %v1334 = vld [vmem:[#allocation14 + $0x3b8] sm:$0xff]
    %v1335 = vld [vmem:[#allocation14 + $0x3c0] sm:$0xff]
    %v1336 = vld [vmem:[#allocation14 + $0x3c8] sm:$0xff]
    %v1337 = vld [vmem:[#allocation14 + $0x3d0] sm:$0xff]
    %v1338 = vld [vmem:[#allocation14 + $0x3d8] sm:$0xff]
    %v1339 = vld [vmem:[#allocation14 + $0x3e0] sm:$0xff]
    %v1340 = vld [vmem:[#allocation14 + $0x3e8] sm:$0xff]
    %v1341 = vld [vmem:[#allocation14 + $0x3f0] sm:$0xff]
    %v1342 = vld [vmem:[#allocation14 + $0x3f8] sm:$0xff]
    %v1343 = vld [vmem:[#allocation14 + $0x400] sm:$0xff]
    %v1344 = vld [vmem:[#allocation14 + $0x408] sm:$0xff]
    %v1345 = vld [vmem:[#allocation14 + $0x410] sm:$0xff]
    %v1346 = vld [vmem:[#allocation14 + $0x418] sm:$0xff]
    %v1347 = vld [vmem:[#allocation14 + $0x420] sm:$0xff]
    %v1348 = vld [vmem:[#allocation14 + $0x428] sm:$0xff]
    %v1349 = vld [vmem:[#allocation14 + $0x430] sm:$0xff]
    %v1350 = vld [vmem:[#allocation14 + $0x438] sm:$0xff]
    %v1351 = vld [vmem:[#allocation14 + $0x440] sm:$0xff]
    %v1352 = vld [vmem:[#allocation14 + $0x448] sm:$0xff]
    %v1353 = vld [vmem:[#allocation14 + $0x450] sm:$0xff]
    %v1354 = vld [vmem:[#allocation14 + $0x458] sm:$0xff]
    %v1355 = vld [vmem:[#allocation14 + $0x460] sm:$0xff]
    %v1356 = vld [vmem:[#allocation14 + $0x468] sm:$0xff]
    %v1357 = vld [vmem:[#allocation14 + $0x470] sm:$0xff]
    %v1358 = vld [vmem:[#allocation14 + $0x478] sm:$0xff]
    %v1359 = vld [vmem:[#allocation14 + $0x480] sm:$0xff]
    %v1360 = vld [vmem:[#allocation14 + $0x488] sm:$0xff]
    %v1361 = vld [vmem:[#allocation14 + $0x490] sm:$0xff]
    %v1362 = vld [vmem:[#allocation14 + $0x498] sm:$0xff]
    %v1363 = vld [vmem:[#allocation14 + $0x4a0] sm:$0xff]
    %v1364 = vld [vmem:[#allocation14 + $0x4a8] sm:$0xff]
    %v1365 = vld [vmem:[#allocation14 + $0x4b0] sm:$0xff]
    %v1366 = vld [vmem:[#allocation14 + $0x4b8] sm:$0xff]
    %v1367 = vld [vmem:[#allocation14 + $0x4c0] sm:$0xff]
    %v1368 = vld [vmem:[#allocation14 + $0x4c8] sm:$0xff]
    %v1369 = vld [vmem:[#allocation14 + $0x4d0] sm:$0xff]
    %v1370 = vld [vmem:[#allocation14 + $0x4d8] sm:$0xff]
    %v1371 = vld [vmem:[#allocation14 + $0x4e0] sm:$0xff]
    %v1372 = vld [vmem:[#allocation14 + $0x4e8] sm:$0xff]
    %v1373 = vld [vmem:[#allocation14 + $0x4f0] sm:$0xff]
    %v1374 = vld [vmem:[#allocation14 + $0x4f8] sm:$0xff]
    %v1375 = vld [vmem:[#allocation14 + $0x500] sm:$0xff]
    %v1376 = vld [vmem:[#allocation14 + $0x508] sm:$0xff]
    %v1377 = vld [vmem:[#allocation14 + $0x510] sm:$0xff]
    %v1378 = vld [vmem:[#allocation14 + $0x518] sm:$0xff]
    %v1379 = vld [vmem:[#allocation14 + $0x520] sm:$0xff]
    %v1380 = vld [vmem:[#allocation14 + $0x528] sm:$0xff]
    %v1381 = vld [vmem:[#allocation14 + $0x530] sm:$0xff]
    %v1382 = vld [vmem:[#allocation14 + $0x538] sm:$0xff]
    %v1383 = vld [vmem:[#allocation14 + $0x540] sm:$0xff]
    %v1384 = vld [vmem:[#allocation14 + $0x548] sm:$0xff]
    %v1385 = vld [vmem:[#allocation14 + $0x550] sm:$0xff]
    %v1386 = vld [vmem:[#allocation14 + $0x558] sm:$0xff]
    %v1387 = vld [vmem:[#allocation14 + $0x560] sm:$0xff]
    %v1388 = vld [vmem:[#allocation14 + $0x568] sm:$0xff]
    %v1389 = vld [vmem:[#allocation14 + $0x570] sm:$0xff]
    %v1390 = vld [vmem:[#allocation14 + $0x578] sm:$0xff]
    %v1391 = vld [vmem:[#allocation14 + $0x580] sm:$0xff]
    %v1392 = vld [vmem:[#allocation14 + $0x588] sm:$0xff]
    %v1393 = vld [vmem:[#allocation14 + $0x590] sm:$0xff]
    %v1394 = vld [vmem:[#allocation14 + $0x598] sm:$0xff]
    %v1395 = vld [vmem:[#allocation14 + $0x5a0] sm:$0xff]
    %v1396 = vld [vmem:[#allocation14 + $0x5a8] sm:$0xff]
    %v1397 = vld [vmem:[#allocation14 + $0x5b0] sm:$0xff]
    %v1398 = vld [vmem:[#allocation14 + $0x5b8] sm:$0xff]
    %v1399 = vld [vmem:[#allocation14 + $0x5c0] sm:$0xff]
    %v1400 = vld [vmem:[#allocation14 + $0x5c8] sm:$0xff]
    %v1401 = vld [vmem:[#allocation14 + $0x5d0] sm:$0xff]
    %v1402 = vld [vmem:[#allocation14 + $0x5d8] sm:$0xff]
    %v1403 = vld [vmem:[#allocation14 + $0x5e0] sm:$0xff]
    %v1404 = vld [vmem:[#allocation14 + $0x5e8] sm:$0xff]
    %v1405 = vld [vmem:[#allocation14 + $0x5f0] sm:$0xff]
    %v1406 = vld [vmem:[#allocation14 + $0x5f8] sm:$0xff]
    %v1407 = vld [vmem:[#allocation14 + $0x600] sm:$0xff]
    %v1408 = vld [vmem:[#allocation14 + $0x608] sm:$0xff]
    %v1409 = vld [vmem:[#allocation14 + $0x610] sm:$0xff]
    %v1410 = vld [vmem:[#allocation14 + $0x618] sm:$0xff]
    %v1411 = vld [vmem:[#allocation14 + $0x620] sm:$0xff]
    %v1412 = vld [vmem:[#allocation14 + $0x628] sm:$0xff]
    %v1413 = vld [vmem:[#allocation14 + $0x630] sm:$0xff]
    %v1414 = vld [vmem:[#allocation14 + $0x638] sm:$0xff]
    %v1415 = vld [vmem:[#allocation14 + $0x640] sm:$0xff]
    %v1416 = vld [vmem:[#allocation14 + $0x648] sm:$0xff]
    %v1417 = vld [vmem:[#allocation14 + $0x650] sm:$0xff]
    %v1418 = vld [vmem:[#allocation14 + $0x658] sm:$0xff]
    %v1419 = vld [vmem:[#allocation14 + $0x660] sm:$0xff]
    %v1420 = vld [vmem:[#allocation14 + $0x668] sm:$0xff]
    %v1421 = vld [vmem:[#allocation14 + $0x670] sm:$0xff]
    %v1422 = vld [vmem:[#allocation14 + $0x678] sm:$0xff]
    %v1423 = vld [vmem:[#allocation14 + $0x680] sm:$0xff]
    %v1424 = vld [vmem:[#allocation14 + $0x688] sm:$0xff]
    %v1425 = vld [vmem:[#allocation14 + $0x690] sm:$0xff]
    %v1426 = vld [vmem:[#allocation14 + $0x698] sm:$0xff]
    %v1427 = vld [vmem:[#allocation14 + $0x6a0] sm:$0xff]
    %v1428 = vld [vmem:[#allocation14 + $0x6a8] sm:$0xff]
    %v1429 = vld [vmem:[#allocation14 + $0x6b0] sm:$0xff]
    %v1430 = vld [vmem:[#allocation14 + $0x6b8] sm:$0xff]
    %v1431 = vld [vmem:[#allocation14 + $0x6c0] sm:$0xff]
    %v1432 = vld [vmem:[#allocation14 + $0x6c8] sm:$0xff]
    %v1433 = vld [vmem:[#allocation14 + $0x6d0] sm:$0xff]
    %v1434 = vld [vmem:[#allocation14 + $0x6d8] sm:$0xff]
    %v1435 = vld [vmem:[#allocation14 + $0x6e0] sm:$0xff]
    %v1436 = vld [vmem:[#allocation14 + $0x6e8] sm:$0xff]
    %v1437 = vld [vmem:[#allocation14 + $0x6f0] sm:$0xff]
    %v1438 = vld [vmem:[#allocation14 + $0x6f8] sm:$0xff]
    %v1439 = vld [vmem:[#allocation14 + $0x700] sm:$0xff]
    %v1440 = vld [vmem:[#allocation14 + $0x708] sm:$0xff]
    %v1441 = vld [vmem:[#allocation14 + $0x710] sm:$0xff]
    %v1442 = vld [vmem:[#allocation14 + $0x718] sm:$0xff]
    %v1443 = vld [vmem:[#allocation14 + $0x720] sm:$0xff]
    %v1444 = vld [vmem:[#allocation14 + $0x728] sm:$0xff]
    %v1445 = vld [vmem:[#allocation14 + $0x730] sm:$0xff]
    %v1446 = vld [vmem:[#allocation14 + $0x738] sm:$0xff]
    %v1447 = vld [vmem:[#allocation14 + $0x740] sm:$0xff]
    %v1448 = vld [vmem:[#allocation14 + $0x748] sm:$0xff]
    %v1449 = vld [vmem:[#allocation14 + $0x750] sm:$0xff]
    %v1450 = vld [vmem:[#allocation14 + $0x758] sm:$0xff]
    %v1451 = vld [vmem:[#allocation14 + $0x760] sm:$0xff]
    %v1452 = vld [vmem:[#allocation14 + $0x768] sm:$0xff]
    %v1453 = vld [vmem:[#allocation14 + $0x770] sm:$0xff]
    %v1454 = vld [vmem:[#allocation14 + $0x778] sm:$0xff]
    %v1455 = vld [vmem:[#allocation14 + $0x780] sm:$0xff]
    %v1456 = vld [vmem:[#allocation14 + $0x788] sm:$0xff]
    %v1457 = vld [vmem:[#allocation14 + $0x790] sm:$0xff]
    %v1458 = vld [vmem:[#allocation14 + $0x798] sm:$0xff]
    %v1459 = vld [vmem:[#allocation14 + $0x7a0] sm:$0xff]
    %v1460 = vld [vmem:[#allocation14 + $0x7a8] sm:$0xff]
    %v1461 = vld [vmem:[#allocation14 + $0x7b0] sm:$0xff]
    %v1462 = vld [vmem:[#allocation14 + $0x7b8] sm:$0xff]
    %v1463 = vld [vmem:[#allocation14 + $0x7c0] sm:$0xff]
    %v1464 = vld [vmem:[#allocation14 + $0x7c8] sm:$0xff]
    %v1465 = vld [vmem:[#allocation14 + $0x7d0] sm:$0xff]
    %v1466 = vld [vmem:[#allocation14 + $0x7d8] sm:$0xff]
    %v1467 = vld [vmem:[#allocation14 + $0x7e0] sm:$0xff]
    %v1468 = vld [vmem:[#allocation14 + $0x7e8] sm:$0xff]
    %v1469 = vld [vmem:[#allocation14 + $0x7f0] sm:$0xff]
    %v1470 = vld [vmem:[#allocation14 + $0x7f8] sm:$0xff]
    %v1471 = vld [vmem:[#allocation16] sm:$0xf]
    %v1473 = vlaneseq
    %v1474 = vshrl.u32 %v1473, 7
    %v1475 = vsub.s32 0, %v1474
    %v1476 = vrot.slane %v1471, %v1475
    %v1477 = vlaneseq
    %v1478 = vshrl.u32 %v1477, 7
    %v1479 = vsub.s32 1, %v1478
    %v1480 = vrot.slane %v1471, %v1479
    %v1481 = vlaneseq
    %v1482 = vshrl.u32 %v1481, 7
    %v1483 = vsub.s32 2, %v1482
    %v1484 = vrot.slane %v1471, %v1483
    %v1485 = vlaneseq
    %v1486 = vshrl.u32 %v1485, 7
    %v1487 = vsub.s32 3, %v1486
    %v1488 = vrot.slane %v1471, %v1487
    %v1509 = vunpack.c.l.b16 %v1199
    %v1510 = vunpack.c.l.b16 %v1200
    %v1511 = vunpack.c.l.b16 %v1201
    %v1512 = vunpack.c.l.b16 %v1202
    %v1513 = vunpack.c.l.b16 %v1203
    %v1514 = vunpack.c.l.b16 %v1204
    %v1515 = vunpack.c.l.b16 %v1205
    %v1516 = vunpack.c.l.b16 %v1206
    %v1517 = vunpack.c.l.b16 %v1207
    %v1518 = vunpack.c.l.b16 %v1208
    %v1519 = vunpack.c.l.b16 %v1209
    %v1520 = vunpack.c.l.b16 %v1210
    %v1521 = vunpack.c.l.b16 %v1211
    %v1522 = vunpack.c.l.b16 %v1212
    %v1523 = vunpack.c.l.b16 %v1213
    %v1524 = vunpack.c.l.b16 %v1214
    %vm1525 = vcmask 1041409
    %v1526 = vsel %vm1525, %v1517, %v1509
    %v1527 = vsel %vm1525, %v1518, %v1510
    %v1528 = vsel %vm1525, %v1519, %v1511
    %v1529 = vsel %vm1525, %v1520, %v1512
    %v1530 = vsel %vm1525, %v1521, %v1513
    %v1531 = vsel %vm1525, %v1522, %v1514
    %v1532 = vsel %vm1525, %v1523, %v1515
    %v1533 = vsel %vm1525, %v1524, %v1516
    %v1534 = vpack.c.b16 %v1526, %v1526
    %v1535 = vpack.c.b16 %v1527, %v1527
    %v1536 = vpack.c.b16 %v1528, %v1528
    %v1537 = vpack.c.b16 %v1529, %v1529
    %v1538 = vpack.c.b16 %v1530, %v1530
    %v1539 = vpack.c.b16 %v1531, %v1531
    %v1540 = vpack.c.b16 %v1532, %v1532
    %v1541 = vpack.c.b16 %v1533, %v1533
    %v1806 = vunpack.c.l.b16 %v1215
    %v1807 = vunpack.c.h.b16 %v1215
    %v1808 = vunpack.c.l.b16 %v1216
    %v1809 = vunpack.c.h.b16 %v1216
    %v1810 = vunpack.c.l.b16 %v1217
    %v1811 = vunpack.c.h.b16 %v1217
    %v1812 = vunpack.c.l.b16 %v1218
    %v1813 = vunpack.c.h.b16 %v1218
    %v1814 = vunpack.c.l.b16 %v1219
    %v1815 = vunpack.c.h.b16 %v1219
    %v1816 = vunpack.c.l.b16 %v1220
    %v1817 = vunpack.c.h.b16 %v1220
    %v1818 = vunpack.c.l.b16 %v1221
    %v1819 = vunpack.c.h.b16 %v1221
    %v1820 = vunpack.c.l.b16 %v1222
    %v1821 = vunpack.c.h.b16 %v1222
    %v1822 = vunpack.c.l.b16 %v1223
    %v1823 = vunpack.c.h.b16 %v1223
    %v1824 = vunpack.c.l.b16 %v1224
    %v1825 = vunpack.c.h.b16 %v1224
    %v1826 = vunpack.c.l.b16 %v1225
    %v1827 = vunpack.c.h.b16 %v1225
    %v1828 = vunpack.c.l.b16 %v1226
    %v1829 = vunpack.c.h.b16 %v1226
    %v1830 = vunpack.c.l.b16 %v1227
    %v1831 = vunpack.c.h.b16 %v1227
    %v1832 = vunpack.c.l.b16 %v1228
    %v1833 = vunpack.c.h.b16 %v1228
    %v1834 = vunpack.c.l.b16 %v1229
    %v1835 = vunpack.c.h.b16 %v1229
    %v1836 = vunpack.c.l.b16 %v1230
    %v1837 = vunpack.c.h.b16 %v1230
    %v1838 = vunpack.c.l.b16 %v1231
    %v1839 = vunpack.c.h.b16 %v1231
    %v1840 = vunpack.c.l.b16 %v1232
    %v1841 = vunpack.c.h.b16 %v1232
    %v1842 = vunpack.c.l.b16 %v1233
    %v1843 = vunpack.c.h.b16 %v1233
    %v1844 = vunpack.c.l.b16 %v1234
    %v1845 = vunpack.c.h.b16 %v1234
    %v1846 = vunpack.c.l.b16 %v1235
    %v1847 = vunpack.c.h.b16 %v1235
    %v1848 = vunpack.c.l.b16 %v1236
    %v1849 = vunpack.c.h.b16 %v1236
    %v1850 = vunpack.c.l.b16 %v1237
    %v1851 = vunpack.c.h.b16 %v1237
    %v1852 = vunpack.c.l.b16 %v1238
    %v1853 = vunpack.c.h.b16 %v1238
    %v1854 = vunpack.c.l.b16 %v1239
    %v1855 = vunpack.c.h.b16 %v1239
    %v1856 = vunpack.c.l.b16 %v1240
    %v1857 = vunpack.c.h.b16 %v1240
    %v1858 = vunpack.c.l.b16 %v1241
    %v1859 = vunpack.c.h.b16 %v1241
    %v1860 = vunpack.c.l.b16 %v1242
    %v1861 = vunpack.c.h.b16 %v1242
    %v1862 = vunpack.c.l.b16 %v1243
    %v1863 = vunpack.c.h.b16 %v1243
    %v1864 = vunpack.c.l.b16 %v1244
    %v1865 = vunpack.c.h.b16 %v1244
    %v1866 = vunpack.c.l.b16 %v1245
    %v1867 = vunpack.c.h.b16 %v1245
    %v1868 = vunpack.c.l.b16 %v1246
    %v1869 = vunpack.c.h.b16 %v1246
    %v1870 = vunpack.c.l.b16 %v1247
    %v1871 = vunpack.c.h.b16 %v1247
    %v1872 = vunpack.c.l.b16 %v1248
    %v1873 = vunpack.c.h.b16 %v1248
    %v1874 = vunpack.c.l.b16 %v1249
    %v1875 = vunpack.c.h.b16 %v1249
    %v1876 = vunpack.c.l.b16 %v1250
    %v1877 = vunpack.c.h.b16 %v1250
    %v1878 = vunpack.c.l.b16 %v1251
    %v1879 = vunpack.c.h.b16 %v1251
    %v1880 = vunpack.c.l.b16 %v1252
    %v1881 = vunpack.c.h.b16 %v1252
    %v1882 = vunpack.c.l.b16 %v1253
    %v1883 = vunpack.c.h.b16 %v1253
    %v1884 = vunpack.c.l.b16 %v1254
    %v1885 = vunpack.c.h.b16 %v1254
    %v1886 = vunpack.c.l.b16 %v1255
    %v1887 = vunpack.c.h.b16 %v1255
    %v1888 = vunpack.c.l.b16 %v1256
    %v1889 = vunpack.c.h.b16 %v1256
    %v1890 = vunpack.c.l.b16 %v1257
    %v1891 = vunpack.c.h.b16 %v1257
    %v1892 = vunpack.c.l.b16 %v1258
    %v1893 = vunpack.c.h.b16 %v1258
    %v1894 = vunpack.c.l.b16 %v1259
    %v1895 = vunpack.c.h.b16 %v1259
    %v1896 = vunpack.c.l.b16 %v1260
    %v1897 = vunpack.c.h.b16 %v1260
    %v1898 = vunpack.c.l.b16 %v1261
    %v1899 = vunpack.c.h.b16 %v1261
    %v1900 = vunpack.c.l.b16 %v1262
    %v1901 = vunpack.c.h.b16 %v1262
    %v1902 = vunpack.c.l.b16 %v1263
    %v1903 = vunpack.c.h.b16 %v1263
    %v1904 = vunpack.c.l.b16 %v1264
    %v1905 = vunpack.c.h.b16 %v1264
    %v1906 = vunpack.c.l.b16 %v1265
    %v1907 = vunpack.c.h.b16 %v1265
    %v1908 = vunpack.c.l.b16 %v1266
    %v1909 = vunpack.c.h.b16 %v1266
    %v1910 = vunpack.c.l.b16 %v1267
    %v1911 = vunpack.c.h.b16 %v1267
    %v1912 = vunpack.c.l.b16 %v1268
    %v1913 = vunpack.c.h.b16 %v1268
    %v1914 = vunpack.c.l.b16 %v1269
    %v1915 = vunpack.c.h.b16 %v1269
    %v1916 = vunpack.c.l.b16 %v1270
    %v1917 = vunpack.c.h.b16 %v1270
    %v1918 = vunpack.c.l.b16 %v1271
    %v1919 = vunpack.c.h.b16 %v1271
    %v1920 = vunpack.c.l.b16 %v1272
    %v1921 = vunpack.c.h.b16 %v1272
    %v1922 = vunpack.c.l.b16 %v1273
    %v1923 = vunpack.c.h.b16 %v1273
    %v1924 = vunpack.c.l.b16 %v1274
    %v1925 = vunpack.c.h.b16 %v1274
    %v1926 = vunpack.c.l.b16 %v1275
    %v1927 = vunpack.c.h.b16 %v1275
    %v1928 = vunpack.c.l.b16 %v1276
    %v1929 = vunpack.c.h.b16 %v1276
    %v1930 = vunpack.c.l.b16 %v1277
    %v1931 = vunpack.c.h.b16 %v1277
    %v1932 = vunpack.c.l.b16 %v1278
    %v1933 = vunpack.c.h.b16 %v1278
    %v1934 = vunpack.c.l.b16 %v1279
    %v1935 = vunpack.c.h.b16 %v1279
    %v1936 = vunpack.c.l.b16 %v1280
    %v1937 = vunpack.c.h.b16 %v1280
    %v1938 = vunpack.c.l.b16 %v1281
    %v1939 = vunpack.c.h.b16 %v1281
    %v1940 = vunpack.c.l.b16 %v1282
    %v1941 = vunpack.c.h.b16 %v1282
    %v1942 = vunpack.c.l.b16 %v1283
    %v1943 = vunpack.c.h.b16 %v1283
    %v1944 = vunpack.c.l.b16 %v1284
    %v1945 = vunpack.c.h.b16 %v1284
    %v1946 = vunpack.c.l.b16 %v1285
    %v1947 = vunpack.c.h.b16 %v1285
    %v1948 = vunpack.c.l.b16 %v1286
    %v1949 = vunpack.c.h.b16 %v1286
    %v1950 = vunpack.c.l.b16 %v1287
    %v1951 = vunpack.c.h.b16 %v1287
    %v1952 = vunpack.c.l.b16 %v1288
    %v1953 = vunpack.c.h.b16 %v1288
    %v1954 = vunpack.c.l.b16 %v1289
    %v1955 = vunpack.c.h.b16 %v1289
    %v1956 = vunpack.c.l.b16 %v1290
    %v1957 = vunpack.c.h.b16 %v1290
    %v1958 = vunpack.c.l.b16 %v1291
    %v1959 = vunpack.c.h.b16 %v1291
    %v1960 = vunpack.c.l.b16 %v1292
    %v1961 = vunpack.c.h.b16 %v1292
    %v1962 = vunpack.c.l.b16 %v1293
    %v1963 = vunpack.c.h.b16 %v1293
    %v1964 = vunpack.c.l.b16 %v1294
    %v1965 = vunpack.c.h.b16 %v1294
    %v1966 = vunpack.c.l.b16 %v1295
    %v1967 = vunpack.c.h.b16 %v1295
    %v1968 = vunpack.c.l.b16 %v1296
    %v1969 = vunpack.c.h.b16 %v1296
    %v1970 = vunpack.c.l.b16 %v1297
    %v1971 = vunpack.c.h.b16 %v1297
    %v1972 = vunpack.c.l.b16 %v1298
    %v1973 = vunpack.c.h.b16 %v1298
    %v1974 = vunpack.c.l.b16 %v1299
    %v1975 = vunpack.c.h.b16 %v1299
    %v1976 = vunpack.c.l.b16 %v1300
    %v1977 = vunpack.c.h.b16 %v1300
    %v1978 = vunpack.c.l.b16 %v1301
    %v1979 = vunpack.c.h.b16 %v1301
    %v1980 = vunpack.c.l.b16 %v1302
    %v1981 = vunpack.c.h.b16 %v1302
    %v1982 = vunpack.c.l.b16 %v1303
    %v1983 = vunpack.c.h.b16 %v1303
    %v1984 = vunpack.c.l.b16 %v1304
    %v1985 = vunpack.c.h.b16 %v1304
    %v1986 = vunpack.c.l.b16 %v1305
    %v1987 = vunpack.c.h.b16 %v1305
    %v1988 = vunpack.c.l.b16 %v1306
    %v1989 = vunpack.c.h.b16 %v1306
    %v1990 = vunpack.c.l.b16 %v1307
    %v1991 = vunpack.c.h.b16 %v1307
    %v1992 = vunpack.c.l.b16 %v1308
    %v1993 = vunpack.c.h.b16 %v1308
    %v1994 = vunpack.c.l.b16 %v1309
    %v1995 = vunpack.c.h.b16 %v1309
    %v1996 = vunpack.c.l.b16 %v1310
    %v1997 = vunpack.c.h.b16 %v1310
    %v1998 = vunpack.c.l.b16 %v1311
    %v1999 = vunpack.c.h.b16 %v1311
    %v2000 = vunpack.c.l.b16 %v1312
    %v2001 = vunpack.c.h.b16 %v1312
    %v2002 = vunpack.c.l.b16 %v1313
    %v2003 = vunpack.c.h.b16 %v1313
    %v2004 = vunpack.c.l.b16 %v1314
    %v2005 = vunpack.c.h.b16 %v1314
    %v2006 = vunpack.c.l.b16 %v1315
    %v2007 = vunpack.c.h.b16 %v1315
    %v2008 = vunpack.c.l.b16 %v1316
    %v2009 = vunpack.c.h.b16 %v1316
    %v2010 = vunpack.c.l.b16 %v1317
    %v2011 = vunpack.c.h.b16 %v1317
    %v2012 = vunpack.c.l.b16 %v1318
    %v2013 = vunpack.c.h.b16 %v1318
    %v2014 = vunpack.c.l.b16 %v1319
    %v2015 = vunpack.c.h.b16 %v1319
    %v2016 = vunpack.c.l.b16 %v1320
    %v2017 = vunpack.c.h.b16 %v1320
    %v2018 = vunpack.c.l.b16 %v1321
    %v2019 = vunpack.c.h.b16 %v1321
    %v2020 = vunpack.c.l.b16 %v1322
    %v2021 = vunpack.c.h.b16 %v1322
    %v2022 = vunpack.c.l.b16 %v1323
    %v2023 = vunpack.c.h.b16 %v1323
    %v2024 = vunpack.c.l.b16 %v1324
    %v2025 = vunpack.c.h.b16 %v1324
    %v2026 = vunpack.c.l.b16 %v1325
    %v2027 = vunpack.c.h.b16 %v1325
    %v2028 = vunpack.c.l.b16 %v1326
    %v2029 = vunpack.c.h.b16 %v1326
    %v2030 = vunpack.c.l.b16 %v1327
    %v2031 = vunpack.c.h.b16 %v1327
    %v2032 = vunpack.c.l.b16 %v1328
    %v2033 = vunpack.c.h.b16 %v1328
    %v2034 = vunpack.c.l.b16 %v1329
    %v2035 = vunpack.c.h.b16 %v1329
    %v2036 = vunpack.c.l.b16 %v1330
    %v2037 = vunpack.c.h.b16 %v1330
    %v2038 = vunpack.c.l.b16 %v1331
    %v2039 = vunpack.c.h.b16 %v1331
    %v2040 = vunpack.c.l.b16 %v1332
    %v2041 = vunpack.c.h.b16 %v1332
    %v2042 = vunpack.c.l.b16 %v1333
    %v2043 = vunpack.c.h.b16 %v1333
    %v2044 = vunpack.c.l.b16 %v1334
    %v2045 = vunpack.c.h.b16 %v1334
    %v2046 = vunpack.c.l.b16 %v1335
    %v2047 = vunpack.c.h.b16 %v1335
    %v2048 = vunpack.c.l.b16 %v1336
    %v2049 = vunpack.c.h.b16 %v1336
    %v2050 = vunpack.c.l.b16 %v1337
    %v2051 = vunpack.c.h.b16 %v1337
    %v2052 = vunpack.c.l.b16 %v1338
    %v2053 = vunpack.c.h.b16 %v1338
    %v2054 = vunpack.c.l.b16 %v1339
    %v2055 = vunpack.c.h.b16 %v1339
    %v2056 = vunpack.c.l.b16 %v1340
    %v2057 = vunpack.c.h.b16 %v1340
    %v2058 = vunpack.c.l.b16 %v1341
    %v2059 = vunpack.c.h.b16 %v1341
    %v2060 = vunpack.c.l.b16 %v1342
    %v2061 = vunpack.c.h.b16 %v1342
    %v2062 = vunpack.c.l.b16 %v1343
    %v2063 = vunpack.c.h.b16 %v1343
    %v2064 = vunpack.c.l.b16 %v1344
    %v2065 = vunpack.c.h.b16 %v1344
    %v2066 = vunpack.c.l.b16 %v1345
    %v2067 = vunpack.c.h.b16 %v1345
    %v2068 = vunpack.c.l.b16 %v1346
    %v2069 = vunpack.c.h.b16 %v1346
    %v2070 = vunpack.c.l.b16 %v1347
    %v2071 = vunpack.c.h.b16 %v1347
    %v2072 = vunpack.c.l.b16 %v1348
    %v2073 = vunpack.c.h.b16 %v1348
    %v2074 = vunpack.c.l.b16 %v1349
    %v2075 = vunpack.c.h.b16 %v1349
    %v2076 = vunpack.c.l.b16 %v1350
    %v2077 = vunpack.c.h.b16 %v1350
    %v2078 = vunpack.c.l.b16 %v1351
    %v2079 = vunpack.c.h.b16 %v1351
    %v2080 = vunpack.c.l.b16 %v1352
    %v2081 = vunpack.c.h.b16 %v1352
    %v2082 = vunpack.c.l.b16 %v1353
    %v2083 = vunpack.c.h.b16 %v1353
    %v2084 = vunpack.c.l.b16 %v1354
    %v2085 = vunpack.c.h.b16 %v1354
    %v2086 = vunpack.c.l.b16 %v1355
    %v2087 = vunpack.c.h.b16 %v1355
    %v2088 = vunpack.c.l.b16 %v1356
    %v2089 = vunpack.c.h.b16 %v1356
    %v2090 = vunpack.c.l.b16 %v1357
    %v2091 = vunpack.c.h.b16 %v1357
    %v2092 = vunpack.c.l.b16 %v1358
    %v2093 = vunpack.c.h.b16 %v1358
    %v2094 = vunpack.c.l.b16 %v1359
    %v2095 = vunpack.c.h.b16 %v1359
    %v2096 = vunpack.c.l.b16 %v1360
    %v2097 = vunpack.c.h.b16 %v1360
    %v2098 = vunpack.c.l.b16 %v1361
    %v2099 = vunpack.c.h.b16 %v1361
    %v2100 = vunpack.c.l.b16 %v1362
    %v2101 = vunpack.c.h.b16 %v1362
    %v2102 = vunpack.c.l.b16 %v1363
    %v2103 = vunpack.c.h.b16 %v1363
    %v2104 = vunpack.c.l.b16 %v1364
    %v2105 = vunpack.c.h.b16 %v1364
    %v2106 = vunpack.c.l.b16 %v1365
    %v2107 = vunpack.c.h.b16 %v1365
    %v2108 = vunpack.c.l.b16 %v1366
    %v2109 = vunpack.c.h.b16 %v1366
    %v2110 = vunpack.c.l.b16 %v1367
    %v2111 = vunpack.c.h.b16 %v1367
    %v2112 = vunpack.c.l.b16 %v1368
    %v2113 = vunpack.c.h.b16 %v1368
    %v2114 = vunpack.c.l.b16 %v1369
    %v2115 = vunpack.c.h.b16 %v1369
    %v2116 = vunpack.c.l.b16 %v1370
    %v2117 = vunpack.c.h.b16 %v1370
    %v2118 = vunpack.c.l.b16 %v1371
    %v2119 = vunpack.c.h.b16 %v1371
    %v2120 = vunpack.c.l.b16 %v1372
    %v2121 = vunpack.c.h.b16 %v1372
    %v2122 = vunpack.c.l.b16 %v1373
    %v2123 = vunpack.c.h.b16 %v1373
    %v2124 = vunpack.c.l.b16 %v1374
    %v2125 = vunpack.c.h.b16 %v1374
    %v2126 = vunpack.c.l.b16 %v1375
    %v2127 = vunpack.c.h.b16 %v1375
    %v2128 = vunpack.c.l.b16 %v1376
    %v2129 = vunpack.c.h.b16 %v1376
    %v2130 = vunpack.c.l.b16 %v1377
    %v2131 = vunpack.c.h.b16 %v1377
    %v2132 = vunpack.c.l.b16 %v1378
    %v2133 = vunpack.c.h.b16 %v1378
    %v2134 = vunpack.c.l.b16 %v1379
    %v2135 = vunpack.c.h.b16 %v1379
    %v2136 = vunpack.c.l.b16 %v1380
    %v2137 = vunpack.c.h.b16 %v1380
    %v2138 = vunpack.c.l.b16 %v1381
    %v2139 = vunpack.c.h.b16 %v1381
    %v2140 = vunpack.c.l.b16 %v1382
    %v2141 = vunpack.c.h.b16 %v1382
    %v2142 = vunpack.c.l.b16 %v1383
    %v2143 = vunpack.c.h.b16 %v1383
    %v2144 = vunpack.c.l.b16 %v1384
    %v2145 = vunpack.c.h.b16 %v1384
    %v2146 = vunpack.c.l.b16 %v1385
    %v2147 = vunpack.c.h.b16 %v1385
    %v2148 = vunpack.c.l.b16 %v1386
    %v2149 = vunpack.c.h.b16 %v1386
    %v2150 = vunpack.c.l.b16 %v1387
    %v2151 = vunpack.c.h.b16 %v1387
    %v2152 = vunpack.c.l.b16 %v1388
    %v2153 = vunpack.c.h.b16 %v1388
    %v2154 = vunpack.c.l.b16 %v1389
    %v2155 = vunpack.c.h.b16 %v1389
    %v2156 = vunpack.c.l.b16 %v1390
    %v2157 = vunpack.c.h.b16 %v1390
    %v2158 = vunpack.c.l.b16 %v1391
    %v2159 = vunpack.c.h.b16 %v1391
    %v2160 = vunpack.c.l.b16 %v1392
    %v2161 = vunpack.c.h.b16 %v1392
    %v2162 = vunpack.c.l.b16 %v1393
    %v2163 = vunpack.c.h.b16 %v1393
    %v2164 = vunpack.c.l.b16 %v1394
    %v2165 = vunpack.c.h.b16 %v1394
    %v2166 = vunpack.c.l.b16 %v1395
    %v2167 = vunpack.c.h.b16 %v1395
    %v2168 = vunpack.c.l.b16 %v1396
    %v2169 = vunpack.c.h.b16 %v1396
    %v2170 = vunpack.c.l.b16 %v1397
    %v2171 = vunpack.c.h.b16 %v1397
    %v2172 = vunpack.c.l.b16 %v1398
    %v2173 = vunpack.c.h.b16 %v1398
    %v2174 = vunpack.c.l.b16 %v1399
    %v2175 = vunpack.c.h.b16 %v1399
    %v2176 = vunpack.c.l.b16 %v1400
    %v2177 = vunpack.c.h.b16 %v1400
    %v2178 = vunpack.c.l.b16 %v1401
    %v2179 = vunpack.c.h.b16 %v1401
    %v2180 = vunpack.c.l.b16 %v1402
    %v2181 = vunpack.c.h.b16 %v1402
    %v2182 = vunpack.c.l.b16 %v1403
    %v2183 = vunpack.c.h.b16 %v1403
    %v2184 = vunpack.c.l.b16 %v1404
    %v2185 = vunpack.c.h.b16 %v1404
    %v2186 = vunpack.c.l.b16 %v1405
    %v2187 = vunpack.c.h.b16 %v1405
    %v2188 = vunpack.c.l.b16 %v1406
    %v2189 = vunpack.c.h.b16 %v1406
    %v2190 = vunpack.c.l.b16 %v1407
    %v2191 = vunpack.c.h.b16 %v1407
    %v2192 = vunpack.c.l.b16 %v1408
    %v2193 = vunpack.c.h.b16 %v1408
    %v2194 = vunpack.c.l.b16 %v1409
    %v2195 = vunpack.c.h.b16 %v1409
    %v2196 = vunpack.c.l.b16 %v1410
    %v2197 = vunpack.c.h.b16 %v1410
    %v2198 = vunpack.c.l.b16 %v1411
    %v2199 = vunpack.c.h.b16 %v1411
    %v2200 = vunpack.c.l.b16 %v1412
    %v2201 = vunpack.c.h.b16 %v1412
    %v2202 = vunpack.c.l.b16 %v1413
    %v2203 = vunpack.c.h.b16 %v1413
    %v2204 = vunpack.c.l.b16 %v1414
    %v2205 = vunpack.c.h.b16 %v1414
    %v2206 = vunpack.c.l.b16 %v1415
    %v2207 = vunpack.c.h.b16 %v1415
    %v2208 = vunpack.c.l.b16 %v1416
    %v2209 = vunpack.c.h.b16 %v1416
    %v2210 = vunpack.c.l.b16 %v1417
    %v2211 = vunpack.c.h.b16 %v1417
    %v2212 = vunpack.c.l.b16 %v1418
    %v2213 = vunpack.c.h.b16 %v1418
    %v2214 = vunpack.c.l.b16 %v1419
    %v2215 = vunpack.c.h.b16 %v1419
    %v2216 = vunpack.c.l.b16 %v1420
    %v2217 = vunpack.c.h.b16 %v1420
    %v2218 = vunpack.c.l.b16 %v1421
    %v2219 = vunpack.c.h.b16 %v1421
    %v2220 = vunpack.c.l.b16 %v1422
    %v2221 = vunpack.c.h.b16 %v1422
    %v2222 = vunpack.c.l.b16 %v1423
    %v2223 = vunpack.c.h.b16 %v1423
    %v2224 = vunpack.c.l.b16 %v1424
    %v2225 = vunpack.c.h.b16 %v1424
    %v2226 = vunpack.c.l.b16 %v1425
    %v2227 = vunpack.c.h.b16 %v1425
    %v2228 = vunpack.c.l.b16 %v1426
    %v2229 = vunpack.c.h.b16 %v1426
    %v2230 = vunpack.c.l.b16 %v1427
    %v2231 = vunpack.c.h.b16 %v1427
    %v2232 = vunpack.c.l.b16 %v1428
    %v2233 = vunpack.c.h.b16 %v1428
    %v2234 = vunpack.c.l.b16 %v1429
    %v2235 = vunpack.c.h.b16 %v1429
    %v2236 = vunpack.c.l.b16 %v1430
    %v2237 = vunpack.c.h.b16 %v1430
    %v2238 = vunpack.c.l.b16 %v1431
    %v2239 = vunpack.c.h.b16 %v1431
    %v2240 = vunpack.c.l.b16 %v1432
    %v2241 = vunpack.c.h.b16 %v1432
    %v2242 = vunpack.c.l.b16 %v1433
    %v2243 = vunpack.c.h.b16 %v1433
    %v2244 = vunpack.c.l.b16 %v1434
    %v2245 = vunpack.c.h.b16 %v1434
    %v2246 = vunpack.c.l.b16 %v1435
    %v2247 = vunpack.c.h.b16 %v1435
    %v2248 = vunpack.c.l.b16 %v1436
    %v2249 = vunpack.c.h.b16 %v1436
    %v2250 = vunpack.c.l.b16 %v1437
    %v2251 = vunpack.c.h.b16 %v1437
    %v2252 = vunpack.c.l.b16 %v1438
    %v2253 = vunpack.c.h.b16 %v1438
    %v2254 = vunpack.c.l.b16 %v1439
    %v2255 = vunpack.c.h.b16 %v1439
    %v2256 = vunpack.c.l.b16 %v1440
    %v2257 = vunpack.c.h.b16 %v1440
    %v2258 = vunpack.c.l.b16 %v1441
    %v2259 = vunpack.c.h.b16 %v1441
    %v2260 = vunpack.c.l.b16 %v1442
    %v2261 = vunpack.c.h.b16 %v1442
    %v2262 = vunpack.c.l.b16 %v1443
    %v2263 = vunpack.c.h.b16 %v1443
    %v2264 = vunpack.c.l.b16 %v1444
    %v2265 = vunpack.c.h.b16 %v1444
    %v2266 = vunpack.c.l.b16 %v1445
    %v2267 = vunpack.c.h.b16 %v1445
    %v2268 = vunpack.c.l.b16 %v1446
    %v2269 = vunpack.c.h.b16 %v1446
    %v2270 = vunpack.c.l.b16 %v1447
    %v2271 = vunpack.c.h.b16 %v1447
    %v2272 = vunpack.c.l.b16 %v1448
    %v2273 = vunpack.c.h.b16 %v1448
    %v2274 = vunpack.c.l.b16 %v1449
    %v2275 = vunpack.c.h.b16 %v1449
    %v2276 = vunpack.c.l.b16 %v1450
    %v2277 = vunpack.c.h.b16 %v1450
    %v2278 = vunpack.c.l.b16 %v1451
    %v2279 = vunpack.c.h.b16 %v1451
    %v2280 = vunpack.c.l.b16 %v1452
    %v2281 = vunpack.c.h.b16 %v1452
    %v2282 = vunpack.c.l.b16 %v1453
    %v2283 = vunpack.c.h.b16 %v1453
    %v2284 = vunpack.c.l.b16 %v1454
    %v2285 = vunpack.c.h.b16 %v1454
    %v2286 = vunpack.c.l.b16 %v1455
    %v2287 = vunpack.c.h.b16 %v1455
    %v2288 = vunpack.c.l.b16 %v1456
    %v2289 = vunpack.c.h.b16 %v1456
    %v2290 = vunpack.c.l.b16 %v1457
    %v2291 = vunpack.c.h.b16 %v1457
    %v2292 = vunpack.c.l.b16 %v1458
    %v2293 = vunpack.c.h.b16 %v1458
    %v2294 = vunpack.c.l.b16 %v1459
    %v2295 = vunpack.c.h.b16 %v1459
    %v2296 = vunpack.c.l.b16 %v1460
    %v2297 = vunpack.c.h.b16 %v1460
    %v2298 = vunpack.c.l.b16 %v1461
    %v2299 = vunpack.c.h.b16 %v1461
    %v2300 = vunpack.c.l.b16 %v1462
    %v2301 = vunpack.c.h.b16 %v1462
    %v2302 = vunpack.c.l.b16 %v1463
    %v2303 = vunpack.c.h.b16 %v1463
    %v2304 = vunpack.c.l.b16 %v1464
    %v2305 = vunpack.c.h.b16 %v1464
    %v2306 = vunpack.c.l.b16 %v1465
    %v2307 = vunpack.c.h.b16 %v1465
    %v2308 = vunpack.c.l.b16 %v1466
    %v2309 = vunpack.c.h.b16 %v1466
    %v2310 = vunpack.c.l.b16 %v1467
    %v2311 = vunpack.c.h.b16 %v1467
    %v2312 = vunpack.c.l.b16 %v1468
    %v2313 = vunpack.c.h.b16 %v1468
    %v2314 = vunpack.c.l.b16 %v1469
    %v2315 = vunpack.c.h.b16 %v1469
    %v2316 = vunpack.c.l.b16 %v1470
    %v2317 = vunpack.c.h.b16 %v1470
    %v2318 = vpack.c.b16 %v1810, %v1806
    %v2319 = vpack.c.b16 %v1811, %v1807
    %v2320 = vpack.c.b16 %v1812, %v1808
    %v2321 = vpack.c.b16 %v1813, %v1809
    %v2322 = vpack.c.b16 %v1818, %v1814
    %v2323 = vpack.c.b16 %v1819, %v1815
    %v2324 = vpack.c.b16 %v1820, %v1816
    %v2325 = vpack.c.b16 %v1821, %v1817
    %v2326 = vpack.c.b16 %v1826, %v1822
    %v2327 = vpack.c.b16 %v1827, %v1823
    %v2328 = vpack.c.b16 %v1828, %v1824
    %v2329 = vpack.c.b16 %v1829, %v1825
    %v2330 = vpack.c.b16 %v1834, %v1830
    %v2331 = vpack.c.b16 %v1835, %v1831
    %v2332 = vpack.c.b16 %v1836, %v1832
    %v2333 = vpack.c.b16 %v1837, %v1833
    %v2334 = vpack.c.b16 %v1842, %v1838
    %v2335 = vpack.c.b16 %v1843, %v1839
    %v2336 = vpack.c.b16 %v1844, %v1840
    %v2337 = vpack.c.b16 %v1845, %v1841
    %v2338 = vpack.c.b16 %v1850, %v1846
    %v2339 = vpack.c.b16 %v1851, %v1847
    %v2340 = vpack.c.b16 %v1852, %v1848
    %v2341 = vpack.c.b16 %v1853, %v1849
    %v2342 = vpack.c.b16 %v1858, %v1854
    %v2343 = vpack.c.b16 %v1859, %v1855
    %v2344 = vpack.c.b16 %v1860, %v1856
    %v2345 = vpack.c.b16 %v1861, %v1857
    %v2346 = vpack.c.b16 %v1866, %v1862
    %v2347 = vpack.c.b16 %v1867, %v1863
    %v2348 = vpack.c.b16 %v1868, %v1864
    %v2349 = vpack.c.b16 %v1869, %v1865
    %v2350 = vpack.c.b16 %v1874, %v1870
    %v2351 = vpack.c.b16 %v1875, %v1871
    %v2352 = vpack.c.b16 %v1876, %v1872
    %v2353 = vpack.c.b16 %v1877, %v1873
    %v2354 = vpack.c.b16 %v1882, %v1878
    %v2355 = vpack.c.b16 %v1883, %v1879
    %v2356 = vpack.c.b16 %v1884, %v1880
    %v2357 = vpack.c.b16 %v1885, %v1881
    %v2358 = vpack.c.b16 %v1890, %v1886
    %v2359 = vpack.c.b16 %v1891, %v1887
    %v2360 = vpack.c.b16 %v1892, %v1888
    %v2361 = vpack.c.b16 %v1893, %v1889
    %v2362 = vpack.c.b16 %v1898, %v1894
    %v2363 = vpack.c.b16 %v1899, %v1895
    %v2364 = vpack.c.b16 %v1900, %v1896
    %v2365 = vpack.c.b16 %v1901, %v1897
    %v2366 = vpack.c.b16 %v1906, %v1902
    %v2367 = vpack.c.b16 %v1907, %v1903
    %v2368 = vpack.c.b16 %v1908, %v1904
    %v2369 = vpack.c.b16 %v1909, %v1905
    %v2370 = vpack.c.b16 %v1914, %v1910
    %v2371 = vpack.c.b16 %v1915, %v1911
    %v2372 = vpack.c.b16 %v1916, %v1912
    %v2373 = vpack.c.b16 %v1917, %v1913
    %v2374 = vpack.c.b16 %v1922, %v1918
    %v2375 = vpack.c.b16 %v1923, %v1919
    %v2376 = vpack.c.b16 %v1924, %v1920
    %v2377 = vpack.c.b16 %v1925, %v1921
    %v2378 = vpack.c.b16 %v1930, %v1926
    %v2379 = vpack.c.b16 %v1931, %v1927
    %v2380 = vpack.c.b16 %v1932, %v1928
    %v2381 = vpack.c.b16 %v1933, %v1929
    %v2382 = vpack.c.b16 %v1938, %v1934
    %v2383 = vpack.c.b16 %v1939, %v1935
    %v2384 = vpack.c.b16 %v1940, %v1936
    %v2385 = vpack.c.b16 %v1941, %v1937
    %v2386 = vpack.c.b16 %v1946, %v1942
    %v2387 = vpack.c.b16 %v1947, %v1943
    %v2388 = vpack.c.b16 %v1948, %v1944
    %v2389 = vpack.c.b16 %v1949, %v1945
    %v2390 = vpack.c.b16 %v1954, %v1950
    %v2391 = vpack.c.b16 %v1955, %v1951
    %v2392 = vpack.c.b16 %v1956, %v1952
    %v2393 = vpack.c.b16 %v1957, %v1953
    %v2394 = vpack.c.b16 %v1962, %v1958
    %v2395 = vpack.c.b16 %v1963, %v1959
    %v2396 = vpack.c.b16 %v1964, %v1960
    %v2397 = vpack.c.b16 %v1965, %v1961
    %v2398 = vpack.c.b16 %v1970, %v1966
    %v2399 = vpack.c.b16 %v1971, %v1967
    %v2400 = vpack.c.b16 %v1972, %v1968
    %v2401 = vpack.c.b16 %v1973, %v1969
    %v2402 = vpack.c.b16 %v1978, %v1974
    %v2403 = vpack.c.b16 %v1979, %v1975
    %v2404 = vpack.c.b16 %v1980, %v1976
    %v2405 = vpack.c.b16 %v1981, %v1977
    %v2406 = vpack.c.b16 %v1986, %v1982
    %v2407 = vpack.c.b16 %v1987, %v1983
    %v2408 = vpack.c.b16 %v1988, %v1984
    %v2409 = vpack.c.b16 %v1989, %v1985
    %v2410 = vpack.c.b16 %v1994, %v1990
    %v2411 = vpack.c.b16 %v1995, %v1991
    %v2412 = vpack.c.b16 %v1996, %v1992
    %v2413 = vpack.c.b16 %v1997, %v1993
    %v2414 = vpack.c.b16 %v2002, %v1998
    %v2415 = vpack.c.b16 %v2003, %v1999
    %v2416 = vpack.c.b16 %v2004, %v2000
    %v2417 = vpack.c.b16 %v2005, %v2001
    %v2418 = vpack.c.b16 %v2010, %v2006
    %v2419 = vpack.c.b16 %v2011, %v2007
    %v2420 = vpack.c.b16 %v2012, %v2008
    %v2421 = vpack.c.b16 %v2013, %v2009
    %v2422 = vpack.c.b16 %v2018, %v2014
    %v2423 = vpack.c.b16 %v2019, %v2015
    %v2424 = vpack.c.b16 %v2020, %v2016
    %v2425 = vpack.c.b16 %v2021, %v2017
    %v2426 = vpack.c.b16 %v2026, %v2022
    %v2427 = vpack.c.b16 %v2027, %v2023
    %v2428 = vpack.c.b16 %v2028, %v2024
    %v2429 = vpack.c.b16 %v2029, %v2025
    %v2430 = vpack.c.b16 %v2034, %v2030
    %v2431 = vpack.c.b16 %v2035, %v2031
    %v2432 = vpack.c.b16 %v2036, %v2032
    %v2433 = vpack.c.b16 %v2037, %v2033
    %v2434 = vpack.c.b16 %v2042, %v2038
    %v2435 = vpack.c.b16 %v2043, %v2039
    %v2436 = vpack.c.b16 %v2044, %v2040
    %v2437 = vpack.c.b16 %v2045, %v2041
    %v2438 = vpack.c.b16 %v2050, %v2046
    %v2439 = vpack.c.b16 %v2051, %v2047
    %v2440 = vpack.c.b16 %v2052, %v2048
    %v2441 = vpack.c.b16 %v2053, %v2049
    %v2442 = vpack.c.b16 %v2058, %v2054
    %v2443 = vpack.c.b16 %v2059, %v2055
    %v2444 = vpack.c.b16 %v2060, %v2056
    %v2445 = vpack.c.b16 %v2061, %v2057
    %v2446 = vpack.c.b16 %v2066, %v2062
    %v2447 = vpack.c.b16 %v2067, %v2063
    %v2448 = vpack.c.b16 %v2068, %v2064
    %v2449 = vpack.c.b16 %v2069, %v2065
    %v2450 = vpack.c.b16 %v2074, %v2070
    %v2451 = vpack.c.b16 %v2075, %v2071
    %v2452 = vpack.c.b16 %v2076, %v2072
    %v2453 = vpack.c.b16 %v2077, %v2073
    %v2454 = vpack.c.b16 %v2082, %v2078
    %v2455 = vpack.c.b16 %v2083, %v2079
    %v2456 = vpack.c.b16 %v2084, %v2080
    %v2457 = vpack.c.b16 %v2085, %v2081
    %v2458 = vpack.c.b16 %v2090, %v2086
    %v2459 = vpack.c.b16 %v2091, %v2087
    %v2460 = vpack.c.b16 %v2092, %v2088
    %v2461 = vpack.c.b16 %v2093, %v2089
    %v2462 = vpack.c.b16 %v2098, %v2094
    %v2463 = vpack.c.b16 %v2099, %v2095
    %v2464 = vpack.c.b16 %v2100, %v2096
    %v2465 = vpack.c.b16 %v2101, %v2097
    %v2466 = vpack.c.b16 %v2106, %v2102
    %v2467 = vpack.c.b16 %v2107, %v2103
    %v2468 = vpack.c.b16 %v2108, %v2104
    %v2469 = vpack.c.b16 %v2109, %v2105
    %v2470 = vpack.c.b16 %v2114, %v2110
    %v2471 = vpack.c.b16 %v2115, %v2111
    %v2472 = vpack.c.b16 %v2116, %v2112
    %v2473 = vpack.c.b16 %v2117, %v2113
    %v2474 = vpack.c.b16 %v2122, %v2118
    %v2475 = vpack.c.b16 %v2123, %v2119
    %v2476 = vpack.c.b16 %v2124, %v2120
    %v2477 = vpack.c.b16 %v2125, %v2121
    %v2478 = vpack.c.b16 %v2130, %v2126
    %v2479 = vpack.c.b16 %v2131, %v2127
    %v2480 = vpack.c.b16 %v2132, %v2128
    %v2481 = vpack.c.b16 %v2133, %v2129
    %v2482 = vpack.c.b16 %v2138, %v2134
    %v2483 = vpack.c.b16 %v2139, %v2135
    %v2484 = vpack.c.b16 %v2140, %v2136
    %v2485 = vpack.c.b16 %v2141, %v2137
    %v2486 = vpack.c.b16 %v2146, %v2142
    %v2487 = vpack.c.b16 %v2147, %v2143
    %v2488 = vpack.c.b16 %v2148, %v2144
    %v2489 = vpack.c.b16 %v2149, %v2145
    %v2490 = vpack.c.b16 %v2154, %v2150
    %v2491 = vpack.c.b16 %v2155, %v2151
    %v2492 = vpack.c.b16 %v2156, %v2152
    %v2493 = vpack.c.b16 %v2157, %v2153
    %v2494 = vpack.c.b16 %v2162, %v2158
    %v2495 = vpack.c.b16 %v2163, %v2159
    %v2496 = vpack.c.b16 %v2164, %v2160
    %v2497 = vpack.c.b16 %v2165, %v2161
    %v2498 = vpack.c.b16 %v2170, %v2166
    %v2499 = vpack.c.b16 %v2171, %v2167
    %v2500 = vpack.c.b16 %v2172, %v2168
    %v2501 = vpack.c.b16 %v2173, %v2169
    %v2502 = vpack.c.b16 %v2178, %v2174
    %v2503 = vpack.c.b16 %v2179, %v2175
    %v2504 = vpack.c.b16 %v2180, %v2176
    %v2505 = vpack.c.b16 %v2181, %v2177
    %v2506 = vpack.c.b16 %v2186, %v2182
    %v2507 = vpack.c.b16 %v2187, %v2183
    %v2508 = vpack.c.b16 %v2188, %v2184
    %v2509 = vpack.c.b16 %v2189, %v2185
    %v2510 = vpack.c.b16 %v2194, %v2190
    %v2511 = vpack.c.b16 %v2195, %v2191
    %v2512 = vpack.c.b16 %v2196, %v2192
    %v2513 = vpack.c.b16 %v2197, %v2193
    %v2514 = vpack.c.b16 %v2202, %v2198
    %v2515 = vpack.c.b16 %v2203, %v2199
    %v2516 = vpack.c.b16 %v2204, %v2200
    %v2517 = vpack.c.b16 %v2205, %v2201
    %v2518 = vpack.c.b16 %v2210, %v2206
    %v2519 = vpack.c.b16 %v2211, %v2207
    %v2520 = vpack.c.b16 %v2212, %v2208
    %v2521 = vpack.c.b16 %v2213, %v2209
    %v2522 = vpack.c.b16 %v2218, %v2214
    %v2523 = vpack.c.b16 %v2219, %v2215
    %v2524 = vpack.c.b16 %v2220, %v2216
    %v2525 = vpack.c.b16 %v2221, %v2217
    %v2526 = vpack.c.b16 %v2226, %v2222
    %v2527 = vpack.c.b16 %v2227, %v2223
    %v2528 = vpack.c.b16 %v2228, %v2224
    %v2529 = vpack.c.b16 %v2229, %v2225
    %v2530 = vpack.c.b16 %v2234, %v2230
    %v2531 = vpack.c.b16 %v2235, %v2231
    %v2532 = vpack.c.b16 %v2236, %v2232
    %v2533 = vpack.c.b16 %v2237, %v2233
    %v2534 = vpack.c.b16 %v2242, %v2238
    %v2535 = vpack.c.b16 %v2243, %v2239
    %v2536 = vpack.c.b16 %v2244, %v2240
    %v2537 = vpack.c.b16 %v2245, %v2241
    %v2538 = vpack.c.b16 %v2250, %v2246
    %v2539 = vpack.c.b16 %v2251, %v2247
    %v2540 = vpack.c.b16 %v2252, %v2248
    %v2541 = vpack.c.b16 %v2253, %v2249
    %v2542 = vpack.c.b16 %v2258, %v2254
    %v2543 = vpack.c.b16 %v2259, %v2255
    %v2544 = vpack.c.b16 %v2260, %v2256
    %v2545 = vpack.c.b16 %v2261, %v2257
    %v2546 = vpack.c.b16 %v2266, %v2262
    %v2547 = vpack.c.b16 %v2267, %v2263
    %v2548 = vpack.c.b16 %v2268, %v2264
    %v2549 = vpack.c.b16 %v2269, %v2265
    %v2550 = vpack.c.b16 %v2274, %v2270
    %v2551 = vpack.c.b16 %v2275, %v2271
    %v2552 = vpack.c.b16 %v2276, %v2272
    %v2553 = vpack.c.b16 %v2277, %v2273
    %v2554 = vpack.c.b16 %v2282, %v2278
    %v2555 = vpack.c.b16 %v2283, %v2279
    %v2556 = vpack.c.b16 %v2284, %v2280
    %v2557 = vpack.c.b16 %v2285, %v2281
    %v2558 = vpack.c.b16 %v2290, %v2286
    %v2559 = vpack.c.b16 %v2291, %v2287
    %v2560 = vpack.c.b16 %v2292, %v2288
    %v2561 = vpack.c.b16 %v2293, %v2289
    %v2562 = vpack.c.b16 %v2298, %v2294
    %v2563 = vpack.c.b16 %v2299, %v2295
    %v2564 = vpack.c.b16 %v2300, %v2296
    %v2565 = vpack.c.b16 %v2301, %v2297
    %v2566 = vpack.c.b16 %v2306, %v2302
    %v2567 = vpack.c.b16 %v2307, %v2303
    %v2568 = vpack.c.b16 %v2308, %v2304
    %v2569 = vpack.c.b16 %v2309, %v2305
    %v2570 = vpack.c.b16 %v2314, %v2310
    %v2571 = vpack.c.b16 %v2315, %v2311
    %v2572 = vpack.c.b16 %v2316, %v2312
    %v2573 = vpack.c.b16 %v2317, %v2313
    %2830 = vmatprep.subr.bf16.mxu0 %v2319
    %2831 = vmatpush1.bf16.msra.mxu0 %v2318
    %2832 = vmatprep.subr.bf16.mxu0 %v2323
    %2833 = vmatpush1.bf16.msra.mxu0 %v2322
    %2834 = vmatprep.subr.bf16.mxu0 %v2327
    %2835 = vmatpush1.bf16.msra.mxu0 %v2326
    %2836 = vmatprep.subr.bf16.mxu0 %v2331
    %2837 = vmatpush1.bf16.msra.mxu0 %v2330
    %2838 = vmatprep.subr.bf16.mxu0 %v2335
    %2839 = vmatpush1.bf16.msra.mxu0 %v2334
    %2840 = vmatprep.subr.bf16.mxu0 %v2339
    %2841 = vmatpush1.bf16.msra.mxu0 %v2338
    %2842 = vmatprep.subr.bf16.mxu0 %v2343
    %2843 = vmatpush1.bf16.msra.mxu0 %v2342
    %2844 = vmatprep.subr.bf16.mxu0 %v2347
    %2845 = vmatpush1.bf16.msra.mxu0 %v2346
    %2846 = vmatprep.subr.bf16.mxu0 %v2351
    %2847 = vmatpush1.bf16.msra.mxu0 %v2350
    %2848 = vmatprep.subr.bf16.mxu0 %v2355
    %2849 = vmatpush1.bf16.msra.mxu0 %v2354
    %2850 = vmatprep.subr.bf16.mxu0 %v2359
    %2851 = vmatpush1.bf16.msra.mxu0 %v2358
    %2852 = vmatprep.subr.bf16.mxu0 %v2363
    %2853 = vmatpush1.bf16.msra.mxu0 %v2362
    %2854 = vmatprep.subr.bf16.mxu0 %v2367
    %2855 = vmatpush1.bf16.msra.mxu0 %v2366
    %2856 = vmatprep.subr.bf16.mxu0 %v2371
    %2857 = vmatpush1.bf16.msra.mxu0 %v2370
    %2858 = vmatprep.subr.bf16.mxu0 %v2375
    %2859 = vmatpush1.bf16.msra.mxu0 %v2374
    %2860 = vmatprep.subr.bf16.mxu0 %v2379
    %2861 = vmatpush1.bf16.msra.mxu0 %v2378
    %2862 = vmatprep.mubr.bf16.mxu0 %v1535
    %2863 = vmatmul.mubr.bf16.gmra.mrb[0].mxu0 %v1534
    %v2864 = vpop.f32.mrb[0].mxu0
    %v2865 = vadd.f32 %v1476, %v2864
    %v2866 = vpop.f32.mrb[0].mxu0
    %v2867 = vadd.f32 %v1480, %v2866
    %v2868 = vpop.f32.mrb[0].mxu0
    %v2869 = vpop.f32.mrb[0].mxu0
    %2870 = vdwg.mxu0
    %2871 = vmatprep.subr.bf16.mxu0 %v2383
    %2872 = vmatpush1.bf16.msra.mxu0 %v2382
    %2873 = vmatprep.subr.bf16.mxu0 %v2387
    %2874 = vmatpush1.bf16.msra.mxu0 %v2386
    %2875 = vmatprep.subr.bf16.mxu0 %v2391
    %2876 = vmatpush1.bf16.msra.mxu0 %v2390
    %2877 = vmatprep.subr.bf16.mxu0 %v2395
    %2878 = vmatpush1.bf16.msra.mxu0 %v2394
    %2879 = vmatprep.subr.bf16.mxu0 %v2399
    %2880 = vmatpush1.bf16.msra.mxu0 %v2398
    %2881 = vmatprep.subr.bf16.mxu0 %v2403
    %2882 = vmatpush1.bf16.msra.mxu0 %v2402
    %2883 = vmatprep.subr.bf16.mxu0 %v2407
    %2884 = vmatpush1.bf16.msra.mxu0 %v2406
    %2885 = vmatprep.subr.bf16.mxu0 %v2411
    %2886 = vmatpush1.bf16.msra.mxu0 %v2410
    %2887 = vmatprep.subr.bf16.mxu0 %v2415
    %2888 = vmatpush1.bf16.msra.mxu0 %v2414
    %2889 = vmatprep.subr.bf16.mxu0 %v2419
    %2890 = vmatpush1.bf16.msra.mxu0 %v2418
    %2891 = vmatprep.subr.bf16.mxu0 %v2423
    %2892 = vmatpush1.bf16.msra.mxu0 %v2422
    %2893 = vmatprep.subr.bf16.mxu0 %v2427
    %2894 = vmatpush1.bf16.msra.mxu0 %v2426
    %2895 = vmatprep.subr.bf16.mxu0 %v2431
    %2896 = vmatpush1.bf16.msra.mxu0 %v2430
    %2897 = vmatprep.subr.bf16.mxu0 %v2435
    %2898 = vmatpush1.bf16.msra.mxu0 %v2434
    %2899 = vmatprep.subr.bf16.mxu0 %v2439
    %2900 = vmatpush1.bf16.msra.mxu0 %v2438
    %2901 = vmatprep.subr.bf16.mxu0 %v2443
    %2902 = vmatpush1.bf16.msra.mxu0 %v2442
    %2903 = vmatprep.mubr.bf16.mxu0 %v1537
    %2904 = vmatmul.mubr.bf16.gmra.mrb[0].mxu0 %v1536
    %v2905 = vpop.f32.mrb[0].mxu0
    %v2906 = vadd.f32 %v2865, %v2905
    %v2907 = vpop.f32.mrb[0].mxu0
    %v2908 = vadd.f32 %v2867, %v2907
    %v2909 = vpop.f32.mrb[0].mxu0
    %v2910 = vpop.f32.mrb[0].mxu0
    %2911 = vdwg.mxu0
    %2912 = vmatprep.subr.bf16.mxu0 %v2447
    %2913 = vmatpush1.bf16.msra.mxu0 %v2446
    %2914 = vmatprep.subr.bf16.mxu0 %v2451
    %2915 = vmatpush1.bf16.msra.mxu0 %v2450
    %2916 = vmatprep.subr.bf16.mxu0 %v2455
    %2917 = vmatpush1.bf16.msra.mxu0 %v2454
    %2918 = vmatprep.subr.bf16.mxu0 %v2459
    %2919 = vmatpush1.bf16.msra.mxu0 %v2458
    %2920 = vmatprep.subr.bf16.mxu0 %v2463
    %2921 = vmatpush1.bf16.msra.mxu0 %v2462
    %2922 = vmatprep.subr.bf16.mxu0 %v2467
    %2923 = vmatpush1.bf16.msra.mxu0 %v2466
    %2924 = vmatprep.subr.bf16.mxu0 %v2471
    %2925 = vmatpush1.bf16.msra.mxu0 %v2470
    %2926 = vmatprep.subr.bf16.mxu0 %v2475
    %2927 = vmatpush1.bf16.msra.mxu0 %v2474
    %2928 = vmatprep.subr.bf16.mxu0 %v2479
    %2929 = vmatpush1.bf16.msra.mxu0 %v2478
    %2930 = vmatprep.subr.bf16.mxu0 %v2483
    %2931 = vmatpush1.bf16.msra.mxu0 %v2482
    %2932 = vmatprep.subr.bf16.mxu0 %v2487
    %2933 = vmatpush1.bf16.msra.mxu0 %v2486
    %2934 = vmatprep.subr.bf16.mxu0 %v2491
    %2935 = vmatpush1.bf16.msra.mxu0 %v2490
    %2936 = vmatprep.subr.bf16.mxu0 %v2495
    %2937 = vmatpush1.bf16.msra.mxu0 %v2494
    %2938 = vmatprep.subr.bf16.mxu0 %v2499
    %2939 = vmatpush1.bf16.msra.mxu0 %v2498
    %2940 = vmatprep.subr.bf16.mxu0 %v2503
    %2941 = vmatpush1.bf16.msra.mxu0 %v2502
    %2942 = vmatprep.subr.bf16.mxu0 %v2507
    %2943 = vmatpush1.bf16.msra.mxu0 %v2506
    %2944 = vmatprep.mubr.bf16.mxu0 %v1539
    %2945 = vmatmul.mubr.bf16.gmra.mrb[0].mxu0 %v1538
    %v2946 = vpop.f32.mrb[0].mxu0
    %v2947 = vadd.f32 %v2906, %v2946
    %v2948 = vpop.f32.mrb[0].mxu0
    %v2949 = vadd.f32 %v2908, %v2948
    %v2950 = vpop.f32.mrb[0].mxu0
    %v2951 = vpop.f32.mrb[0].mxu0
    %2952 = vdwg.mxu0
    %2953 = vmatprep.subr.bf16.mxu0 %v2511
    %2954 = vmatpush1.bf16.msra.mxu0 %v2510
    %2955 = vmatprep.subr.bf16.mxu0 %v2515
    %2956 = vmatpush1.bf16.msra.mxu0 %v2514
    %2957 = vmatprep.subr.bf16.mxu0 %v2519
    %2958 = vmatpush1.bf16.msra.mxu0 %v2518
    %2959 = vmatprep.subr.bf16.mxu0 %v2523
    %2960 = vmatpush1.bf16.msra.mxu0 %v2522
    %2961 = vmatprep.subr.bf16.mxu0 %v2527
    %2962 = vmatpush1.bf16.msra.mxu0 %v2526
    %2963 = vmatprep.subr.bf16.mxu0 %v2531
    %2964 = vmatpush1.bf16.msra.mxu0 %v2530
    %2965 = vmatprep.subr.bf16.mxu0 %v2535
    %2966 = vmatpush1.bf16.msra.mxu0 %v2534
    %2967 = vmatprep.subr.bf16.mxu0 %v2539
    %2968 = vmatpush1.bf16.msra.mxu0 %v2538
    %2969 = vmatprep.subr.bf16.mxu0 %v2543
    %2970 = vmatpush1.bf16.msra.mxu0 %v2542
    %2971 = vmatprep.subr.bf16.mxu0 %v2547
    %2972 = vmatpush1.bf16.msra.mxu0 %v2546
    %2973 = vmatprep.subr.bf16.mxu0 %v2551
    %2974 = vmatpush1.bf16.msra.mxu0 %v2550
    %2975 = vmatprep.subr.bf16.mxu0 %v2555
    %2976 = vmatpush1.bf16.msra.mxu0 %v2554
    %2977 = vmatprep.subr.bf16.mxu0 %v2559
    %2978 = vmatpush1.bf16.msra.mxu0 %v2558
    %2979 = vmatprep.subr.bf16.mxu0 %v2563
    %2980 = vmatpush1.bf16.msra.mxu0 %v2562
    %2981 = vmatprep.subr.bf16.mxu0 %v2567
    %2982 = vmatpush1.bf16.msra.mxu0 %v2566
    %2983 = vmatprep.subr.bf16.mxu0 %v2571
    %2984 = vmatpush1.bf16.msra.mxu0 %v2570
    %2985 = vmatprep.mubr.bf16.mxu0 %v1541
    %2986 = vmatmul.mubr.bf16.gmra.mrb[0].mxu0 %v1540
    %v2987 = vpop.f32.mrb[0].mxu0
    %v2988 = vadd.f32 %v2947, %v2987
    %v2989 = vpop.f32.mrb[0].mxu0
    %v2990 = vadd.f32 %v2949, %v2989
    %v2991 = vpop.f32.mrb[0].mxu0
    %v2992 = vpop.f32.mrb[0].mxu0
    %2993 = vdwg.mxu0
    %2994 = vmatprep.subr.bf16.mxu0 %v2321
    %2995 = vmatpush1.bf16.msra.mxu0 %v2320
    %2996 = vmatprep.subr.bf16.mxu0 %v2325
    %2997 = vmatpush1.bf16.msra.mxu0 %v2324
    %2998 = vmatprep.subr.bf16.mxu0 %v2329
    %2999 = vmatpush1.bf16.msra.mxu0 %v2328
    %3000 = vmatprep.subr.bf16.mxu0 %v2333
    %3001 = vmatpush1.bf16.msra.mxu0 %v2332
    %3002 = vmatprep.subr.bf16.mxu0 %v2337
    %3003 = vmatpush1.bf16.msra.mxu0 %v2336
    %3004 = vmatprep.subr.bf16.mxu0 %v2341
    %3005 = vmatpush1.bf16.msra.mxu0 %v2340
    %3006 = vmatprep.subr.bf16.mxu0 %v2345
    %3007 = vmatpush1.bf16.msra.mxu0 %v2344
    %3008 = vmatprep.subr.bf16.mxu0 %v2349
    %3009 = vmatpush1.bf16.msra.mxu0 %v2348
    %3010 = vmatprep.subr.bf16.mxu0 %v2353
    %3011 = vmatpush1.bf16.msra.mxu0 %v2352
    %3012 = vmatprep.subr.bf16.mxu0 %v2357
    %3013 = vmatpush1.bf16.msra.mxu0 %v2356
    %3014 = vmatprep.subr.bf16.mxu0 %v2361
    %3015 = vmatpush1.bf16.msra.mxu0 %v2360
    %3016 = vmatprep.subr.bf16.mxu0 %v2365
    %3017 = vmatpush1.bf16.msra.mxu0 %v2364
    %3018 = vmatprep.subr.bf16.mxu0 %v2369
    %3019 = vmatpush1.bf16.msra.mxu0 %v2368
    %3020 = vmatprep.subr.bf16.mxu0 %v2373
    %3021 = vmatpush1.bf16.msra.mxu0 %v2372
    %3022 = vmatprep.subr.bf16.mxu0 %v2377
    %3023 = vmatpush1.bf16.msra.mxu0 %v2376
    %3024 = vmatprep.subr.bf16.mxu0 %v2381
    %3025 = vmatpush1.bf16.msra.mxu0 %v2380
    %3026 = vmatprep.mubr.bf16.mxu0 %v1535
    %3027 = vmatmul.mubr.bf16.gmra.mrb[0].mxu0 %v1534
    %v3028 = vpop.f32.mrb[0].mxu0
    %v3029 = vadd.f32 %v1484, %v3028
    %v3030 = vpop.f32.mrb[0].mxu0
    %v3031 = vadd.f32 %v1488, %v3030
    %v3032 = vpop.f32.mrb[0].mxu0
    %v3033 = vpop.f32.mrb[0].mxu0
    %3034 = vdwg.mxu0
    %3035 = vmatprep.subr.bf16.mxu0 %v2385
    %3036 = vmatpush1.bf16.msra.mxu0 %v2384
    %3037 = vmatprep.subr.bf16.mxu0 %v2389
    %3038 = vmatpush1.bf16.msra.mxu0 %v2388
    %3039 = vmatprep.subr.bf16.mxu0 %v2393
    %3040 = vmatpush1.bf16.msra.mxu0 %v2392
    %3041 = vmatprep.subr.bf16.mxu0 %v2397
    %3042 = vmatpush1.bf16.msra.mxu0 %v2396
    %3043 = vmatprep.subr.bf16.mxu0 %v2401
    %3044 = vmatpush1.bf16.msra.mxu0 %v2400
    %3045 = vmatprep.subr.bf16.mxu0 %v2405
    %3046 = vmatpush1.bf16.msra.mxu0 %v2404
    %3047 = vmatprep.subr.bf16.mxu0 %v2409
    %3048 = vmatpush1.bf16.msra.mxu0 %v2408
    %3049 = vmatprep.subr.bf16.mxu0 %v2413
    %3050 = vmatpush1.bf16.msra.mxu0 %v2412
    %3051 = vmatprep.subr.bf16.mxu0 %v2417
    %3052 = vmatpush1.bf16.msra.mxu0 %v2416
    %3053 = vmatprep.subr.bf16.mxu0 %v2421
    %3054 = vmatpush1.bf16.msra.mxu0 %v2420
    %3055 = vmatprep.subr.bf16.mxu0 %v2425
    %3056 = vmatpush1.bf16.msra.mxu0 %v2424
    %3057 = vmatprep.subr.bf16.mxu0 %v2429
    %3058 = vmatpush1.bf16.msra.mxu0 %v2428
    %3059 = vmatprep.subr.bf16.mxu0 %v2433
    %3060 = vmatpush1.bf16.msra.mxu0 %v2432
    %3061 = vmatprep.subr.bf16.mxu0 %v2437
    %3062 = vmatpush1.bf16.msra.mxu0 %v2436
    %3063 = vmatprep.subr.bf16.mxu0 %v2441
    %3064 = vmatpush1.bf16.msra.mxu0 %v2440
    %3065 = vmatprep.subr.bf16.mxu0 %v2445
    %3066 = vmatpush1.bf16.msra.mxu0 %v2444
    %3067 = vmatprep.mubr.bf16.mxu0 %v1537
    %3068 = vmatmul.mubr.bf16.gmra.mrb[0].mxu0 %v1536
    %v3069 = vpop.f32.mrb[0].mxu0
    %v3070 = vadd.f32 %v3029, %v3069
    %v3071 = vpop.f32.mrb[0].mxu0
    %v3072 = vadd.f32 %v3031, %v3071
    %v3073 = vpop.f32.mrb[0].mxu0
    %v3074 = vpop.f32.mrb[0].mxu0
    %3075 = vdwg.mxu0
    %3076 = vmatprep.subr.bf16.mxu0 %v2449
    %3077 = vmatpush1.bf16.msra.mxu0 %v2448
    %3078 = vmatprep.subr.bf16.mxu0 %v2453
    %3079 = vmatpush1.bf16.msra.mxu0 %v2452
    %3080 = vmatprep.subr.bf16.mxu0 %v2457
    %3081 = vmatpush1.bf16.msra.mxu0 %v2456
    %3082 = vmatprep.subr.bf16.mxu0 %v2461
    %3083 = vmatpush1.bf16.msra.mxu0 %v2460
    %3084 = vmatprep.subr.bf16.mxu0 %v2465
    %3085 = vmatpush1.bf16.msra.mxu0 %v2464
    %3086 = vmatprep.subr.bf16.mxu0 %v2469
    %3087 = vmatpush1.bf16.msra.mxu0 %v2468
    %3088 = vmatprep.subr.bf16.mxu0 %v2473
    %3089 = vmatpush1.bf16.msra.mxu0 %v2472
    %3090 = vmatprep.subr.bf16.mxu0 %v2477
    %3091 = vmatpush1.bf16.msra.mxu0 %v2476
    %3092 = vmatprep.subr.bf16.mxu0 %v2481
    %3093 = vmatpush1.bf16.msra.mxu0 %v2480
    %3094 = vmatprep.subr.bf16.mxu0 %v2485
    %3095 = vmatpush1.bf16.msra.mxu0 %v2484
    %3096 = vmatprep.subr.bf16.mxu0 %v2489
    %3097 = vmatpush1.bf16.msra.mxu0 %v2488
    %3098 = vmatprep.subr.bf16.mxu0 %v2493
    %3099 = vmatpush1.bf16.msra.mxu0 %v2492
    %3100 = vmatprep.subr.bf16.mxu0 %v2497
    %3101 = vmatpush1.bf16.msra.mxu0 %v2496
    %3102 = vmatprep.subr.bf16.mxu0 %v2501
    %3103 = vmatpush1.bf16.msra.mxu0 %v2500
    %3104 = vmatprep.subr.bf16.mxu0 %v2505
    %3105 = vmatpush1.bf16.msra.mxu0 %v2504
    %3106 = vmatprep.subr.bf16.mxu0 %v2509
    %3107 = vmatpush1.bf16.msra.mxu0 %v2508
    %3108 = vmatprep.mubr.bf16.mxu0 %v1539
    %3109 = vmatmul.mubr.bf16.gmra.mrb[0].mxu0 %v1538
    %v3110 = vpop.f32.mrb[0].mxu0
    %v3111 = vadd.f32 %v3070, %v3110
    %v3112 = vpop.f32.mrb[0].mxu0
    %v3113 = vadd.f32 %v3072, %v3112
    %v3114 = vpop.f32.mrb[0].mxu0
    %v3115 = vpop.f32.mrb[0].mxu0
    %3116 = vdwg.mxu0
    %3117 = vmatprep.subr.bf16.mxu0 %v2513
    %3118 = vmatpush1.bf16.msra.mxu0 %v2512
    %3119 = vmatprep.subr.bf16.mxu0 %v2517
    %3120 = vmatpush1.bf16.msra.mxu0 %v2516
    %3121 = vmatprep.subr.bf16.mxu0 %v2521
    %3122 = vmatpush1.bf16.msra.mxu0 %v2520
    %3123 = vmatprep.subr.bf16.mxu0 %v2525
    %3124 = vmatpush1.bf16.msra.mxu0 %v2524
    %3125 = vmatprep.subr.bf16.mxu0 %v2529
    %3126 = vmatpush1.bf16.msra.mxu0 %v2528
    %3127 = vmatprep.subr.bf16.mxu0 %v2533
    %3128 = vmatpush1.bf16.msra.mxu0 %v2532
    %3129 = vmatprep.subr.bf16.mxu0 %v2537
    %3130 = vmatpush1.bf16.msra.mxu0 %v2536
    %3131 = vmatprep.subr.bf16.mxu0 %v2541
    %3132 = vmatpush1.bf16.msra.mxu0 %v2540
    %3133 = vmatprep.subr.bf16.mxu0 %v2545
    %3134 = vmatpush1.bf16.msra.mxu0 %v2544
    %3135 = vmatprep.subr.bf16.mxu0 %v2549
    %3136 = vmatpush1.bf16.msra.mxu0 %v2548
    %3137 = vmatprep.subr.bf16.mxu0 %v2553
    %3138 = vmatpush1.bf16.msra.mxu0 %v2552
    %3139 = vmatprep.subr.bf16.mxu0 %v2557
    %3140 = vmatpush1.bf16.msra.mxu0 %v2556
    %3141 = vmatprep.subr.bf16.mxu0 %v2561
    %3142 = vmatpush1.bf16.msra.mxu0 %v2560
    %3143 = vmatprep.subr.bf16.mxu0 %v2565
    %3144 = vmatpush1.bf16.msra.mxu0 %v2564
    %3145 = vmatprep.subr.bf16.mxu0 %v2569
    %3146 = vmatpush1.bf16.msra.mxu0 %v2568
    %3147 = vmatprep.subr.bf16.mxu0 %v2573
    %3148 = vmatpush1.bf16.msra.mxu0 %v2572
    %3149 = vmatprep.mubr.bf16.mxu0 %v1541
    %3150 = vmatmul.mubr.bf16.gmra.mrb[0].mxu0 %v1540
    %v3151 = vpop.f32.mrb[0].mxu0
    %v3152 = vadd.f32 %v3111, %v3151
    %v3153 = vpop.f32.mrb[0].mxu0
    %v3154 = vadd.f32 %v3113, %v3153
    %v3155 = vpop.f32.mrb[0].mxu0
    %v3156 = vpop.f32.mrb[0].mxu0
    %3157 = vdwg.mxu0
    %v3158 = vmax.f32 %v2988, 0.0
    %v3159 = vmax.f32 %v2990, 0.0
    %v3160 = vmax.f32 %v3152, 0.0
    %v3161 = vmax.f32 %v3154, 0.0
    %v3162 = vpack.c.bf16 %v3158, %v3158
    %v3163 = vpack.c.bf16 %v3159, %v3159
    %v3164 = vpack.c.bf16 %v3160, %v3160
    %v3165 = vpack.c.bf16 %v3161, %v3161
    %v3166 = vld [vmem:[#allocation17] sm:$0xff]
    %v3167 = vld [vmem:[#allocation17 + $0x8] sm:$0xff]
    %v3168 = vld [vmem:[#allocation17 + $0x10] sm:$0xff]
    %v3169 = vld [vmem:[#allocation17 + $0x18] sm:$0xff]
    %v3170 = vld [vmem:[#allocation17 + $0x20] sm:$0xff]
    %v3171 = vld [vmem:[#allocation17 + $0x28] sm:$0xff]
    %v3172 = vld [vmem:[#allocation17 + $0x30] sm:$0xff]
    %v3173 = vld [vmem:[#allocation17 + $0x38] sm:$0xff]
    %v3174 = vld [vmem:[#allocation17 + $0x40] sm:$0xff]
    %v3175 = vld [vmem:[#allocation17 + $0x48] sm:$0xff]
    %v3176 = vld [vmem:[#allocation17 + $0x50] sm:$0xff]
    %v3177 = vld [vmem:[#allocation17 + $0x58] sm:$0xff]
    %v3178 = vld [vmem:[#allocation17 + $0x60] sm:$0xff]
    %v3179 = vld [vmem:[#allocation17 + $0x68] sm:$0xff]
    %v3180 = vld [vmem:[#allocation17 + $0x70] sm:$0xff]
    %v3181 = vld [vmem:[#allocation17 + $0x78] sm:$0xff]
    %v3182 = vld [vmem:[#allocation17 + $0x80] sm:$0xff]
    %v3183 = vld [vmem:[#allocation17 + $0x88] sm:$0xff]
    %v3184 = vld [vmem:[#allocation17 + $0x90] sm:$0xff]
    %v3185 = vld [vmem:[#allocation17 + $0x98] sm:$0xff]
    %v3186 = vld [vmem:[#allocation17 + $0xa0] sm:$0xff]
    %v3187 = vld [vmem:[#allocation17 + $0xa8] sm:$0xff]
    %v3188 = vld [vmem:[#allocation17 + $0xb0] sm:$0xff]
    %v3189 = vld [vmem:[#allocation17 + $0xb8] sm:$0xff]
    %v3190 = vld [vmem:[#allocation17 + $0xc0] sm:$0xff]
    %v3191 = vld [vmem:[#allocation17 + $0xc8] sm:$0xff]
    %v3192 = vld [vmem:[#allocation17 + $0xd0] sm:$0xff]
    %v3193 = vld [vmem:[#allocation17 + $0xd8] sm:$0xff]
    %v3194 = vld [vmem:[#allocation17 + $0xe0] sm:$0xff]
    %v3195 = vld [vmem:[#allocation17 + $0xe8] sm:$0xff]
    %v3196 = vld [vmem:[#allocation17 + $0xf0] sm:$0xff]
    %v3197 = vld [vmem:[#allocation17 + $0xf8] sm:$0xff]
    %v3198 = vld [vmem:[#allocation17 + $0x100] sm:$0xff]
    %v3199 = vld [vmem:[#allocation17 + $0x108] sm:$0xff]
    %v3200 = vld [vmem:[#allocation17 + $0x110] sm:$0xff]
    %v3201 = vld [vmem:[#allocation17 + $0x118] sm:$0xff]
    %v3202 = vld [vmem:[#allocation17 + $0x120] sm:$0xff]
    %v3203 = vld [vmem:[#allocation17 + $0x128] sm:$0xff]
    %v3204 = vld [vmem:[#allocation17 + $0x130] sm:$0xff]
    %v3205 = vld [vmem:[#allocation17 + $0x138] sm:$0xff]
    %v3206 = vld [vmem:[#allocation17 + $0x140] sm:$0xff]
    %v3207 = vld [vmem:[#allocation17 + $0x148] sm:$0xff]
    %v3208 = vld [vmem:[#allocation17 + $0x150] sm:$0xff]
    %v3209 = vld [vmem:[#allocation17 + $0x158] sm:$0xff]
    %v3210 = vld [vmem:[#allocation17 + $0x160] sm:$0xff]
    %v3211 = vld [vmem:[#allocation17 + $0x168] sm:$0xff]
    %v3212 = vld [vmem:[#allocation17 + $0x170] sm:$0xff]
    %v3213 = vld [vmem:[#allocation17 + $0x178] sm:$0xff]
    %v3214 = vld [vmem:[#allocation17 + $0x180] sm:$0xff]
    %v3215 = vld [vmem:[#allocation17 + $0x188] sm:$0xff]
    %v3216 = vld [vmem:[#allocation17 + $0x190] sm:$0xff]
    %v3217 = vld [vmem:[#allocation17 + $0x198] sm:$0xff]
    %v3218 = vld [vmem:[#allocation17 + $0x1a0] sm:$0xff]
    %v3219 = vld [vmem:[#allocation17 + $0x1a8] sm:$0xff]
    %v3220 = vld [vmem:[#allocation17 + $0x1b0] sm:$0xff]
    %v3221 = vld [vmem:[#allocation17 + $0x1b8] sm:$0xff]
    %v3222 = vld [vmem:[#allocation17 + $0x1c0] sm:$0xff]
    %v3223 = vld [vmem:[#allocation17 + $0x1c8] sm:$0xff]
    %v3224 = vld [vmem:[#allocation17 + $0x1d0] sm:$0xff]
    %v3225 = vld [vmem:[#allocation17 + $0x1d8] sm:$0xff]
    %v3226 = vld [vmem:[#allocation17 + $0x1e0] sm:$0xff]
    %v3227 = vld [vmem:[#allocation17 + $0x1e8] sm:$0xff]
    %v3228 = vld [vmem:[#allocation17 + $0x1f0] sm:$0xff]
    %v3229 = vld [vmem:[#allocation17 + $0x1f8] sm:$0xff]
    %v3230 = vld [vmem:[#allocation19] sm:$0x3]
    %v3232 = vlaneseq
    %v3233 = vshrl.u32 %v3232, 7
    %v3234 = vsub.s32 0, %v3233
    %v3235 = vrot.slane %v3230, %v3234
    %v3236 = vlaneseq
    %v3237 = vshrl.u32 %v3236, 7
    %v3238 = vsub.s32 1, %v3237
    %v3239 = vrot.slane %v3230, %v3238
    %v3306 = vunpack.c.l.b16 %v3166
    %v3307 = vunpack.c.h.b16 %v3166
    %v3308 = vunpack.c.l.b16 %v3167
    %v3309 = vunpack.c.h.b16 %v3167
    %v3310 = vunpack.c.l.b16 %v3168
    %v3311 = vunpack.c.h.b16 %v3168
    %v3312 = vunpack.c.l.b16 %v3169
    %v3313 = vunpack.c.h.b16 %v3169
    %v3314 = vunpack.c.l.b16 %v3170
    %v3315 = vunpack.c.h.b16 %v3170
    %v3316 = vunpack.c.l.b16 %v3171
    %v3317 = vunpack.c.h.b16 %v3171
    %v3318 = vunpack.c.l.b16 %v3172
    %v3319 = vunpack.c.h.b16 %v3172
    %v3320 = vunpack.c.l.b16 %v3173
    %v3321 = vunpack.c.h.b16 %v3173
    %v3322 = vunpack.c.l.b16 %v3174
    %v3323 = vunpack.c.h.b16 %v3174
    %v3324 = vunpack.c.l.b16 %v3175
    %v3325 = vunpack.c.h.b16 %v3175
    %v3326 = vunpack.c.l.b16 %v3176
    %v3327 = vunpack.c.h.b16 %v3176
    %v3328 = vunpack.c.l.b16 %v3177
    %v3329 = vunpack.c.h.b16 %v3177
    %v3330 = vunpack.c.l.b16 %v3178
    %v3331 = vunpack.c.h.b16 %v3178
    %v3332 = vunpack.c.l.b16 %v3179
    %v3333 = vunpack.c.h.b16 %v3179
    %v3334 = vunpack.c.l.b16 %v3180
    %v3335 = vunpack.c.h.b16 %v3180
    %v3336 = vunpack.c.l.b16 %v3181
    %v3337 = vunpack.c.h.b16 %v3181
    %v3338 = vunpack.c.l.b16 %v3182
    %v3339 = vunpack.c.h.b16 %v3182
    %v3340 = vunpack.c.l.b16 %v3183
    %v3341 = vunpack.c.h.b16 %v3183
    %v3342 = vunpack.c.l.b16 %v3184
    %v3343 = vunpack.c.h.b16 %v3184
    %v3344 = vunpack.c.l.b16 %v3185
    %v3345 = vunpack.c.h.b16 %v3185
    %v3346 = vunpack.c.l.b16 %v3186
    %v3347 = vunpack.c.h.b16 %v3186
    %v3348 = vunpack.c.l.b16 %v3187
    %v3349 = vunpack.c.h.b16 %v3187
    %v3350 = vunpack.c.l.b16 %v3188
    %v3351 = vunpack.c.h.b16 %v3188
    %v3352 = vunpack.c.l.b16 %v3189
    %v3353 = vunpack.c.h.b16 %v3189
    %v3354 = vunpack.c.l.b16 %v3190
    %v3355 = vunpack.c.h.b16 %v3190
    %v3356 = vunpack.c.l.b16 %v3191
    %v3357 = vunpack.c.h.b16 %v3191
    %v3358 = vunpack.c.l.b16 %v3192
    %v3359 = vunpack.c.h.b16 %v3192
    %v3360 = vunpack.c.l.b16 %v3193
    %v3361 = vunpack.c.h.b16 %v3193
    %v3362 = vunpack.c.l.b16 %v3194
    %v3363 = vunpack.c.h.b16 %v3194
    %v3364 = vunpack.c.l.b16 %v3195
    %v3365 = vunpack.c.h.b16 %v3195
    %v3366 = vunpack.c.l.b16 %v3196
    %v3367 = vunpack.c.h.b16 %v3196
    %v3368 = vunpack.c.l.b16 %v3197
    %v3369 = vunpack.c.h.b16 %v3197
    %v3370 = vunpack.c.l.b16 %v3198
    %v3371 = vunpack.c.h.b16 %v3198
    %v3372 = vunpack.c.l.b16 %v3199
    %v3373 = vunpack.c.h.b16 %v3199
    %v3374 = vunpack.c.l.b16 %v3200
    %v3375 = vunpack.c.h.b16 %v3200
    %v3376 = vunpack.c.l.b16 %v3201
    %v3377 = vunpack.c.h.b16 %v3201
    %v3378 = vunpack.c.l.b16 %v3202
    %v3379 = vunpack.c.h.b16 %v3202
    %v3380 = vunpack.c.l.b16 %v3203
    %v3381 = vunpack.c.h.b16 %v3203
    %v3382 = vunpack.c.l.b16 %v3204
    %v3383 = vunpack.c.h.b16 %v3204
    %v3384 = vunpack.c.l.b16 %v3205
    %v3385 = vunpack.c.h.b16 %v3205
    %v3386 = vunpack.c.l.b16 %v3206
    %v3387 = vunpack.c.h.b16 %v3206
    %v3388 = vunpack.c.l.b16 %v3207
    %v3389 = vunpack.c.h.b16 %v3207
    %v3390 = vunpack.c.l.b16 %v3208
    %v3391 = vunpack.c.h.b16 %v3208
    %v3392 = vunpack.c.l.b16 %v3209
    %v3393 = vunpack.c.h.b16 %v3209
    %v3394 = vunpack.c.l.b16 %v3210
    %v3395 = vunpack.c.h.b16 %v3210
    %v3396 = vunpack.c.l.b16 %v3211
    %v3397 = vunpack.c.h.b16 %v3211
    %v3398 = vunpack.c.l.b16 %v3212
    %v3399 = vunpack.c.h.b16 %v3212
    %v3400 = vunpack.c.l.b16 %v3213
    %v3401 = vunpack.c.h.b16 %v3213
    %v3402 = vunpack.c.l.b16 %v3214
    %v3403 = vunpack.c.h.b16 %v3214
    %v3404 = vunpack.c.l.b16 %v3215
    %v3405 = vunpack.c.h.b16 %v3215
    %v3406 = vunpack.c.l.b16 %v3216
    %v3407 = vunpack.c.h.b16 %v3216
    %v3408 = vunpack.c.l.b16 %v3217
    %v3409 = vunpack.c.h.b16 %v3217
    %v3410 = vunpack.c.l.b16 %v3218
    %v3411 = vunpack.c.h.b16 %v3218
    %v3412 = vunpack.c.l.b16 %v3219
    %v3413 = vunpack.c.h.b16 %v3219
    %v3414 = vunpack.c.l.b16 %v3220
    %v3415 = vunpack.c.h.b16 %v3220
    %v3416 = vunpack.c.l.b16 %v3221
    %v3417 = vunpack.c.h.b16 %v3221
    %v3418 = vunpack.c.l.b16 %v3222
    %v3419 = vunpack.c.h.b16 %v3222
    %v3420 = vunpack.c.l.b16 %v3223
    %v3421 = vunpack.c.h.b16 %v3223
    %v3422 = vunpack.c.l.b16 %v3224
    %v3423 = vunpack.c.h.b16 %v3224
    %v3424 = vunpack.c.l.b16 %v3225
    %v3425 = vunpack.c.h.b16 %v3225
    %v3426 = vunpack.c.l.b16 %v3226
    %v3427 = vunpack.c.h.b16 %v3226
    %v3428 = vunpack.c.l.b16 %v3227
    %v3429 = vunpack.c.h.b16 %v3227
    %v3430 = vunpack.c.l.b16 %v3228
    %v3431 = vunpack.c.h.b16 %v3228
    %v3432 = vunpack.c.l.b16 %v3229
    %v3433 = vunpack.c.h.b16 %v3229
    %v3434 = vpack.c.b16 %v3308, %v3306
    %v3435 = vpack.c.b16 %v3309, %v3307
    %v3436 = vpack.c.b16 %v3312, %v3310
    %v3437 = vpack.c.b16 %v3313, %v3311
    %v3438 = vpack.c.b16 %v3316, %v3314
    %v3439 = vpack.c.b16 %v3317, %v3315
    %v3440 = vpack.c.b16 %v3320, %v3318
    %v3441 = vpack.c.b16 %v3321, %v3319
    %v3442 = vpack.c.b16 %v3324, %v3322
    %v3443 = vpack.c.b16 %v3325, %v3323
    %v3444 = vpack.c.b16 %v3328, %v3326
    %v3445 = vpack.c.b16 %v3329, %v3327
    %v3446 = vpack.c.b16 %v3332, %v3330
    %v3447 = vpack.c.b16 %v3333, %v3331
    %v3448 = vpack.c.b16 %v3336, %v3334
    %v3449 = vpack.c.b16 %v3337, %v3335
    %v3450 = vpack.c.b16 %v3340, %v3338
    %v3451 = vpack.c.b16 %v3341, %v3339
    %v3452 = vpack.c.b16 %v3344, %v3342
    %v3453 = vpack.c.b16 %v3345, %v3343
    %v3454 = vpack.c.b16 %v3348, %v3346
    %v3455 = vpack.c.b16 %v3349, %v3347
    %v3456 = vpack.c.b16 %v3352, %v3350
    %v3457 = vpack.c.b16 %v3353, %v3351
    %v3458 = vpack.c.b16 %v3356, %v3354
    %v3459 = vpack.c.b16 %v3357, %v3355
    %v3460 = vpack.c.b16 %v3360, %v3358
    %v3461 = vpack.c.b16 %v3361, %v3359
    %v3462 = vpack.c.b16 %v3364, %v3362
    %v3463 = vpack.c.b16 %v3365, %v3363
    %v3464 = vpack.c.b16 %v3368, %v3366
    %v3465 = vpack.c.b16 %v3369, %v3367
    %v3466 = vpack.c.b16 %v3372, %v3370
    %v3467 = vpack.c.b16 %v3373, %v3371
    %v3468 = vpack.c.b16 %v3376, %v3374
    %v3469 = vpack.c.b16 %v3377, %v3375
    %v3470 = vpack.c.b16 %v3380, %v3378
    %v3471 = vpack.c.b16 %v3381, %v3379
    %v3472 = vpack.c.b16 %v3384, %v3382
    %v3473 = vpack.c.b16 %v3385, %v3383
    %v3474 = vpack.c.b16 %v3388, %v3386
    %v3475 = vpack.c.b16 %v3389, %v3387
    %v3476 = vpack.c.b16 %v3392, %v3390
    %v3477 = vpack.c.b16 %v3393, %v3391
    %v3478 = vpack.c.b16 %v3396, %v3394
    %v3479 = vpack.c.b16 %v3397, %v3395
    %v3480 = vpack.c.b16 %v3400, %v3398
    %v3481 = vpack.c.b16 %v3401, %v3399
    %v3482 = vpack.c.b16 %v3404, %v3402
    %v3483 = vpack.c.b16 %v3405, %v3403
    %v3484 = vpack.c.b16 %v3408, %v3406
    %v3485 = vpack.c.b16 %v3409, %v3407
    %v3486 = vpack.c.b16 %v3412, %v3410
    %v3487 = vpack.c.b16 %v3413, %v3411
    %v3488 = vpack.c.b16 %v3416, %v3414
    %v3489 = vpack.c.b16 %v3417, %v3415
    %v3490 = vpack.c.b16 %v3420, %v3418
    %v3491 = vpack.c.b16 %v3421, %v3419
    %v3492 = vpack.c.b16 %v3424, %v3422
    %v3493 = vpack.c.b16 %v3425, %v3423
    %v3494 = vpack.c.b16 %v3428, %v3426
    %v3495 = vpack.c.b16 %v3429, %v3427
    %v3496 = vpack.c.b16 %v3432, %v3430
    %v3497 = vpack.c.b16 %v3433, %v3431
    %3562 = vmatprep.subr.bf16.mxu0 %v3435
    %3563 = vmatpush1.bf16.msra.mxu0 %v3434
    %3564 = vmatprep.subr.bf16.mxu0 %v3437
    %3565 = vmatpush1.bf16.msra.mxu0 %v3436
    %3566 = vmatprep.subr.bf16.mxu0 %v3439
    %3567 = vmatpush1.bf16.msra.mxu0 %v3438
    %3568 = vmatprep.subr.bf16.mxu0 %v3441
    %3569 = vmatpush1.bf16.msra.mxu0 %v3440
    %3570 = vmatprep.subr.bf16.mxu0 %v3443
    %3571 = vmatpush1.bf16.msra.mxu0 %v3442
    %3572 = vmatprep.subr.bf16.mxu0 %v3445
    %3573 = vmatpush1.bf16.msra.mxu0 %v3444
    %3574 = vmatprep.subr.bf16.mxu0 %v3447
    %3575 = vmatpush1.bf16.msra.mxu0 %v3446
    %3576 = vmatprep.subr.bf16.mxu0 %v3449
    %3577 = vmatpush1.bf16.msra.mxu0 %v3448
    %3578 = vmatprep.subr.bf16.mxu0 %v3451
    %3579 = vmatpush1.bf16.msra.mxu0 %v3450
    %3580 = vmatprep.subr.bf16.mxu0 %v3453
    %3581 = vmatpush1.bf16.msra.mxu0 %v3452
    %3582 = vmatprep.subr.bf16.mxu0 %v3455
    %3583 = vmatpush1.bf16.msra.mxu0 %v3454
    %3584 = vmatprep.subr.bf16.mxu0 %v3457
    %3585 = vmatpush1.bf16.msra.mxu0 %v3456
    %3586 = vmatprep.subr.bf16.mxu0 %v3459
    %3587 = vmatpush1.bf16.msra.mxu0 %v3458
    %3588 = vmatprep.subr.bf16.mxu0 %v3461
    %3589 = vmatpush1.bf16.msra.mxu0 %v3460
    %3590 = vmatprep.subr.bf16.mxu0 %v3463
    %3591 = vmatpush1.bf16.msra.mxu0 %v3462
    %3592 = vmatprep.subr.bf16.mxu0 %v3465
    %3593 = vmatpush1.bf16.msra.mxu0 %v3464
    %3594 = vmatprep.mubr.bf16.mxu0 %v3163
    %3595 = vmatmul.mubr.bf16.gmra.mrb[0].mxu0 %v3162
    %v3596 = vpop.f32.mrb[0].mxu0
    %v3597 = vadd.f32 %v3235, %v3596
    %v3598 = vpop.f32.mrb[0].mxu0
    %v3599 = vadd.f32 %v3239, %v3598
    %v3600 = vpop.f32.mrb[0].mxu0
    %v3601 = vpop.f32.mrb[0].mxu0
    %3602 = vdwg.mxu0
    %3603 = vmatprep.subr.bf16.mxu0 %v3467
    %3604 = vmatpush1.bf16.msra.mxu0 %v3466
    %3605 = vmatprep.subr.bf16.mxu0 %v3469
    %3606 = vmatpush1.bf16.msra.mxu0 %v3468
    %3607 = vmatprep.subr.bf16.mxu0 %v3471
    %3608 = vmatpush1.bf16.msra.mxu0 %v3470
    %3609 = vmatprep.subr.bf16.mxu0 %v3473
    %3610 = vmatpush1.bf16.msra.mxu0 %v3472
    %3611 = vmatprep.subr.bf16.mxu0 %v3475
    %3612 = vmatpush1.bf16.msra.mxu0 %v3474
    %3613 = vmatprep.subr.bf16.mxu0 %v3477
    %3614 = vmatpush1.bf16.msra.mxu0 %v3476
    %3615 = vmatprep.subr.bf16.mxu0 %v3479
    %3616 = vmatpush1.bf16.msra.mxu0 %v3478
    %3617 = vmatprep.subr.bf16.mxu0 %v3481
    %3618 = vmatpush1.bf16.msra.mxu0 %v3480
    %3619 = vmatprep.subr.bf16.mxu0 %v3483
    %3620 = vmatpush1.bf16.msra.mxu0 %v3482
    %3621 = vmatprep.subr.bf16.mxu0 %v3485
    %3622 = vmatpush1.bf16.msra.mxu0 %v3484
    %3623 = vmatprep.subr.bf16.mxu0 %v3487
    %3624 = vmatpush1.bf16.msra.mxu0 %v3486
    %3625 = vmatprep.subr.bf16.mxu0 %v3489
    %3626 = vmatpush1.bf16.msra.mxu0 %v3488
    %3627 = vmatprep.subr.bf16.mxu0 %v3491
    %3628 = vmatpush1.bf16.msra.mxu0 %v3490
    %3629 = vmatprep.subr.bf16.mxu0 %v3493
    %3630 = vmatpush1.bf16.msra.mxu0 %v3492
    %3631 = vmatprep.subr.bf16.mxu0 %v3495
    %3632 = vmatpush1.bf16.msra.mxu0 %v3494
    %3633 = vmatprep.subr.bf16.mxu0 %v3497
    %3634 = vmatpush1.bf16.msra.mxu0 %v3496
    %3635 = vmatprep.mubr.bf16.mxu0 %v3165
    %3636 = vmatmul.mubr.bf16.gmra.mrb[0].mxu0 %v3164
    %v3637 = vpop.f32.mrb[0].mxu0
    %v3638 = vadd.f32 %v3597, %v3637
    %v3639 = vpop.f32.mrb[0].mxu0
    %v3640 = vadd.f32 %v3599, %v3639
    %v3641 = vpop.f32.mrb[0].mxu0
    %v3642 = vpop.f32.mrb[0].mxu0
    %3643 = vdwg.mxu0
    %v3644 = vmax.f32 %v3638, 0.0
    %v3645 = vmax.f32 %v3640, 0.0
    %v3646 = vpack.c.bf16 %v3644, %v3644
    %v3647 = vpack.c.bf16 %v3645, %v3645
    %v3648 = vld [vmem:[#allocation20] sm:$0xff]
    %v3649 = vld [vmem:[#allocation20 + $0x8] sm:$0xff]
    %v3650 = vld [vmem:[#allocation20 + $0x10] sm:$0xff]
    %v3651 = vld [vmem:[#allocation20 + $0x18] sm:$0xff]
    %v3652 = vld [vmem:[#allocation20 + $0x20] sm:$0xff]
    %v3653 = vld [vmem:[#allocation20 + $0x28] sm:$0xff]
    %v3654 = vld [vmem:[#allocation20 + $0x30] sm:$0xff]
    %v3655 = vld [vmem:[#allocation20 + $0x38] sm:$0xff]
    %v3656 = vld [vmem:[#allocation20 + $0x40] sm:$0xff]
    %v3657 = vld [vmem:[#allocation20 + $0x48] sm:$0xff]
    %v3658 = vld [vmem:[#allocation20 + $0x50] sm:$0xff]
    %v3659 = vld [vmem:[#allocation20 + $0x58] sm:$0xff]
    %v3660 = vld [vmem:[#allocation20 + $0x60] sm:$0xff]
    %v3661 = vld [vmem:[#allocation20 + $0x68] sm:$0xff]
    %v3662 = vld [vmem:[#allocation20 + $0x70] sm:$0xff]
    %v3663 = vld [vmem:[#allocation20 + $0x78] sm:$0xff]
    %v3664 = vld [vmem:[#allocation20 + $0x80] sm:$0xff]
    %v3665 = vld [vmem:[#allocation20 + $0x88] sm:$0xff]
    %v3666 = vld [vmem:[#allocation20 + $0x90] sm:$0xff]
    %v3667 = vld [vmem:[#allocation20 + $0x98] sm:$0xff]
    %v3668 = vld [vmem:[#allocation20 + $0xa0] sm:$0xff]
    %v3669 = vld [vmem:[#allocation20 + $0xa8] sm:$0xff]
    %v3670 = vld [vmem:[#allocation20 + $0xb0] sm:$0xff]
    %v3671 = vld [vmem:[#allocation20 + $0xb8] sm:$0xff]
    %v3672 = vld [vmem:[#allocation20 + $0xc0] sm:$0xff]
    %v3673 = vld [vmem:[#allocation20 + $0xc8] sm:$0xff]
    %v3674 = vld [vmem:[#allocation20 + $0xd0] sm:$0xff]
    %v3675 = vld [vmem:[#allocation20 + $0xd8] sm:$0xff]
    %v3676 = vld [vmem:[#allocation20 + $0xe0] sm:$0xff]
    %v3677 = vld [vmem:[#allocation20 + $0xe8] sm:$0xff]
    %v3678 = vld [vmem:[#allocation20 + $0xf0] sm:$0xff]
    %v3679 = vld [vmem:[#allocation20 + $0xf8] sm:$0xff]
    %v3680 = vld [vmem:[#allocation20 + $0x100] sm:$0xff]
    %v3681 = vld [vmem:[#allocation20 + $0x108] sm:$0xff]
    %v3682 = vld [vmem:[#allocation20 + $0x110] sm:$0xff]
    %v3683 = vld [vmem:[#allocation20 + $0x118] sm:$0xff]
    %v3684 = vld [vmem:[#allocation20 + $0x120] sm:$0xff]
    %v3685 = vld [vmem:[#allocation20 + $0x128] sm:$0xff]
    %v3686 = vld [vmem:[#allocation20 + $0x130] sm:$0xff]
    %v3687 = vld [vmem:[#allocation20 + $0x138] sm:$0xff]
    %v3688 = vld [vmem:[#allocation20 + $0x140] sm:$0xff]
    %v3689 = vld [vmem:[#allocation20 + $0x148] sm:$0xff]
    %v3690 = vld [vmem:[#allocation20 + $0x150] sm:$0xff]
    %v3691 = vld [vmem:[#allocation20 + $0x158] sm:$0xff]
    %v3692 = vld [vmem:[#allocation20 + $0x160] sm:$0xff]
    %v3693 = vld [vmem:[#allocation20 + $0x168] sm:$0xff]
    %v3694 = vld [vmem:[#allocation20 + $0x170] sm:$0xff]
    %v3695 = vld [vmem:[#allocation20 + $0x178] sm:$0xff]
    %v3696 = vld [vmem:[#allocation20 + $0x180] sm:$0xff]
    %v3697 = vld [vmem:[#allocation20 + $0x188] sm:$0xff]
    %v3698 = vld [vmem:[#allocation20 + $0x190] sm:$0xff]
    %v3699 = vld [vmem:[#allocation20 + $0x198] sm:$0xff]
    %v3700 = vld [vmem:[#allocation20 + $0x1a0] sm:$0xff]
    %v3701 = vld [vmem:[#allocation20 + $0x1a8] sm:$0xff]
    %v3702 = vld [vmem:[#allocation20 + $0x1b0] sm:$0xff]
    %v3703 = vld [vmem:[#allocation20 + $0x1b8] sm:$0xff]
    %v3704 = vld [vmem:[#allocation20 + $0x1c0] sm:$0xff]
    %v3705 = vld [vmem:[#allocation20 + $0x1c8] sm:$0xff]
    %v3706 = vld [vmem:[#allocation20 + $0x1d0] sm:$0xff]
    %v3707 = vld [vmem:[#allocation20 + $0x1d8] sm:$0xff]
    %v3708 = vld [vmem:[#allocation20 + $0x1e0] sm:$0xff]
    %v3709 = vld [vmem:[#allocation20 + $0x1e8] sm:$0xff]
    %v3710 = vld [vmem:[#allocation20 + $0x1f0] sm:$0xff]
    %v3711 = vld [vmem:[#allocation20 + $0x1f8] sm:$0xff]
    %v3712 = vld [vmem:[#allocation20 + $0x200] sm:$0xff]
    %v3713 = vld [vmem:[#allocation20 + $0x208] sm:$0xff]
    %v3714 = vld [vmem:[#allocation20 + $0x210] sm:$0xff]
    %v3715 = vld [vmem:[#allocation20 + $0x218] sm:$0xff]
    %v3716 = vld [vmem:[#allocation20 + $0x220] sm:$0xff]
    %v3717 = vld [vmem:[#allocation20 + $0x228] sm:$0xff]
    %v3718 = vld [vmem:[#allocation20 + $0x230] sm:$0xff]
    %v3719 = vld [vmem:[#allocation20 + $0x238] sm:$0xff]
    %v3720 = vld [vmem:[#allocation20 + $0x240] sm:$0xff]
    %v3721 = vld [vmem:[#allocation20 + $0x248] sm:$0xff]
    %v3722 = vld [vmem:[#allocation20 + $0x250] sm:$0xff]
    %v3723 = vld [vmem:[#allocation20 + $0x258] sm:$0xff]
    %v3724 = vld [vmem:[#allocation20 + $0x260] sm:$0xff]
    %v3725 = vld [vmem:[#allocation20 + $0x268] sm:$0xff]
    %v3726 = vld [vmem:[#allocation20 + $0x270] sm:$0xff]
    %v3727 = vld [vmem:[#allocation20 + $0x278] sm:$0xff]
    %v3728 = vld [vmem:[#allocation20 + $0x280] sm:$0xff]
    %v3729 = vld [vmem:[#allocation20 + $0x288] sm:$0xff]
    %v3730 = vld [vmem:[#allocation20 + $0x290] sm:$0xff]
    %v3731 = vld [vmem:[#allocation20 + $0x298] sm:$0xff]
    %v3732 = vld [vmem:[#allocation20 + $0x2a0] sm:$0xff]
    %v3733 = vld [vmem:[#allocation20 + $0x2a8] sm:$0xff]
    %v3734 = vld [vmem:[#allocation20 + $0x2b0] sm:$0xff]
    %v3735 = vld [vmem:[#allocation20 + $0x2b8] sm:$0xff]
    %v3736 = vld [vmem:[#allocation20 + $0x2c0] sm:$0xff]
    %v3737 = vld [vmem:[#allocation20 + $0x2c8] sm:$0xff]
    %v3738 = vld [vmem:[#allocation20 + $0x2d0] sm:$0xff]
    %v3739 = vld [vmem:[#allocation20 + $0x2d8] sm:$0xff]
    %v3740 = vld [vmem:[#allocation20 + $0x2e0] sm:$0xff]
    %v3741 = vld [vmem:[#allocation20 + $0x2e8] sm:$0xff]
    %v3742 = vld [vmem:[#allocation20 + $0x2f0] sm:$0xff]
    %v3743 = vld [vmem:[#allocation20 + $0x2f8] sm:$0xff]
    %v3744 = vld [vmem:[#allocation20 + $0x300] sm:$0xff]
    %v3745 = vld [vmem:[#allocation20 + $0x308] sm:$0xff]
    %v3746 = vld [vmem:[#allocation20 + $0x310] sm:$0xff]
    %v3747 = vld [vmem:[#allocation20 + $0x318] sm:$0xff]
    %v3748 = vld [vmem:[#allocation20 + $0x320] sm:$0xff]
    %v3749 = vld [vmem:[#allocation20 + $0x328] sm:$0xff]
    %v3750 = vld [vmem:[#allocation20 + $0x330] sm:$0xff]
    %v3751 = vld [vmem:[#allocation20 + $0x338] sm:$0xff]
    %v3752 = vld [vmem:[#allocation20 + $0x340] sm:$0xff]
    %v3753 = vld [vmem:[#allocation20 + $0x348] sm:$0xff]
    %v3754 = vld [vmem:[#allocation20 + $0x350] sm:$0xff]
    %v3755 = vld [vmem:[#allocation20 + $0x358] sm:$0xff]
    %v3756 = vld [vmem:[#allocation20 + $0x360] sm:$0xff]
    %v3757 = vld [vmem:[#allocation20 + $0x368] sm:$0xff]
    %v3758 = vld [vmem:[#allocation20 + $0x370] sm:$0xff]
    %v3759 = vld [vmem:[#allocation20 + $0x378] sm:$0xff]
    %v3760 = vld [vmem:[#allocation20 + $0x380] sm:$0xff]
    %v3761 = vld [vmem:[#allocation20 + $0x388] sm:$0xff]
    %v3762 = vld [vmem:[#allocation20 + $0x390] sm:$0xff]
    %v3763 = vld [vmem:[#allocation20 + $0x398] sm:$0xff]
    %v3764 = vld [vmem:[#allocation20 + $0x3a0] sm:$0xff]
    %v3765 = vld [vmem:[#allocation20 + $0x3a8] sm:$0xff]
    %v3766 = vld [vmem:[#allocation20 + $0x3b0] sm:$0xff]
    %v3767 = vld [vmem:[#allocation20 + $0x3b8] sm:$0xff]
    %v3768 = vld [vmem:[#allocation20 + $0x3c0] sm:$0xff]
    %v3769 = vld [vmem:[#allocation20 + $0x3c8] sm:$0xff]
    %v3770 = vld [vmem:[#allocation20 + $0x3d0] sm:$0xff]
    %v3771 = vld [vmem:[#allocation20 + $0x3d8] sm:$0xff]
    %v3772 = vld [vmem:[#allocation20 + $0x3e0] sm:$0xff]
    %v3773 = vld [vmem:[#allocation20 + $0x3e8] sm:$0xff]
    %v3774 = vld [vmem:[#allocation20 + $0x3f0] sm:$0xff]
    %v3775 = vld [vmem:[#allocation20 + $0x3f8] sm:$0xff]
    %v3776 = vld [vmem:[#allocation20 + $0x400] sm:$0xff]
    %v3777 = vld [vmem:[#allocation20 + $0x408] sm:$0xff]
    %v3778 = vld [vmem:[#allocation20 + $0x410] sm:$0xff]
    %v3779 = vld [vmem:[#allocation20 + $0x418] sm:$0xff]
    %v3780 = vld [vmem:[#allocation20 + $0x420] sm:$0xff]
    %v3781 = vld [vmem:[#allocation20 + $0x428] sm:$0xff]
    %v3782 = vld [vmem:[#allocation20 + $0x430] sm:$0xff]
    %v3783 = vld [vmem:[#allocation20 + $0x438] sm:$0xff]
    %v3784 = vld [vmem:[#allocation20 + $0x440] sm:$0xff]
    %v3785 = vld [vmem:[#allocation20 + $0x448] sm:$0xff]
    %v3786 = vld [vmem:[#allocation20 + $0x450] sm:$0xff]
    %v3787 = vld [vmem:[#allocation20 + $0x458] sm:$0xff]
    %v3788 = vld [vmem:[#allocation20 + $0x460] sm:$0xff]
    %v3789 = vld [vmem:[#allocation20 + $0x468] sm:$0xff]
    %v3790 = vld [vmem:[#allocation20 + $0x470] sm:$0xff]
    %v3791 = vld [vmem:[#allocation20 + $0x478] sm:$0xff]
    %v3792 = vld [vmem:[#allocation20 + $0x480] sm:$0xff]
    %v3793 = vld [vmem:[#allocation20 + $0x488] sm:$0xff]
    %v3794 = vld [vmem:[#allocation20 + $0x490] sm:$0xff]
    %v3795 = vld [vmem:[#allocation20 + $0x498] sm:$0xff]
    %v3796 = vld [vmem:[#allocation20 + $0x4a0] sm:$0xff]
    %v3797 = vld [vmem:[#allocation20 + $0x4a8] sm:$0xff]
    %v3798 = vld [vmem:[#allocation20 + $0x4b0] sm:$0xff]
    %v3799 = vld [vmem:[#allocation20 + $0x4b8] sm:$0xff]
    %v3800 = vld [vmem:[#allocation20 + $0x4c0] sm:$0xff]
    %v3801 = vld [vmem:[#allocation20 + $0x4c8] sm:$0xff]
    %v3802 = vld [vmem:[#allocation20 + $0x4d0] sm:$0xff]
    %v3803 = vld [vmem:[#allocation20 + $0x4d8] sm:$0xff]
    %v3804 = vld [vmem:[#allocation20 + $0x4e0] sm:$0xff]
    %v3805 = vld [vmem:[#allocation20 + $0x4e8] sm:$0xff]
    %v3806 = vld [vmem:[#allocation20 + $0x4f0] sm:$0xff]
    %v3807 = vld [vmem:[#allocation20 + $0x4f8] sm:$0xff]
    %v3808 = vld [vmem:[#allocation20 + $0x500] sm:$0xff]
    %v3809 = vld [vmem:[#allocation20 + $0x508] sm:$0xff]
    %v3810 = vld [vmem:[#allocation20 + $0x510] sm:$0xff]
    %v3811 = vld [vmem:[#allocation20 + $0x518] sm:$0xff]
    %v3812 = vld [vmem:[#allocation20 + $0x520] sm:$0xff]
    %v3813 = vld [vmem:[#allocation20 + $0x528] sm:$0xff]
    %v3814 = vld [vmem:[#allocation20 + $0x530] sm:$0xff]
    %v3815 = vld [vmem:[#allocation20 + $0x538] sm:$0xff]
    %v3816 = vld [vmem:[#allocation20 + $0x540] sm:$0xff]
    %v3817 = vld [vmem:[#allocation20 + $0x548] sm:$0xff]
    %v3818 = vld [vmem:[#allocation20 + $0x550] sm:$0xff]
    %v3819 = vld [vmem:[#allocation20 + $0x558] sm:$0xff]
    %v3820 = vld [vmem:[#allocation20 + $0x560] sm:$0xff]
    %v3821 = vld [vmem:[#allocation20 + $0x568] sm:$0xff]
    %v3822 = vld [vmem:[#allocation20 + $0x570] sm:$0xff]
    %v3823 = vld [vmem:[#allocation20 + $0x578] sm:$0xff]
    %v3824 = vld [vmem:[#allocation20 + $0x580] sm:$0xff]
    %v3825 = vld [vmem:[#allocation20 + $0x588] sm:$0xff]
    %v3826 = vld [vmem:[#allocation20 + $0x590] sm:$0xff]
    %v3827 = vld [vmem:[#allocation20 + $0x598] sm:$0xff]
    %v3828 = vld [vmem:[#allocation20 + $0x5a0] sm:$0xff]
    %v3829 = vld [vmem:[#allocation20 + $0x5a8] sm:$0xff]
    %v3830 = vld [vmem:[#allocation20 + $0x5b0] sm:$0xff]
    %v3831 = vld [vmem:[#allocation20 + $0x5b8] sm:$0xff]
    %v3832 = vld [vmem:[#allocation20 + $0x5c0] sm:$0xff]
    %v3833 = vld [vmem:[#allocation20 + $0x5c8] sm:$0xff]
    %v3834 = vld [vmem:[#allocation20 + $0x5d0] sm:$0xff]
    %v3835 = vld [vmem:[#allocation20 + $0x5d8] sm:$0xff]
    %v3836 = vld [vmem:[#allocation20 + $0x5e0] sm:$0xff]
    %v3837 = vld [vmem:[#allocation20 + $0x5e8] sm:$0xff]
    %v3838 = vld [vmem:[#allocation20 + $0x5f0] sm:$0xff]
    %v3839 = vld [vmem:[#allocation20 + $0x5f8] sm:$0xff]
    %v3840 = vld [vmem:[#allocation20 + $0x600] sm:$0xff]
    %v3841 = vld [vmem:[#allocation20 + $0x608] sm:$0xff]
    %v3842 = vld [vmem:[#allocation20 + $0x610] sm:$0xff]
    %v3843 = vld [vmem:[#allocation20 + $0x618] sm:$0xff]
    %v3844 = vld [vmem:[#allocation20 + $0x620] sm:$0xff]
    %v3845 = vld [vmem:[#allocation20 + $0x628] sm:$0xff]
    %v3846 = vld [vmem:[#allocation20 + $0x630] sm:$0xff]
    %v3847 = vld [vmem:[#allocation20 + $0x638] sm:$0xff]
    %v3848 = vld [vmem:[#allocation20 + $0x640] sm:$0xff]
    %v3849 = vld [vmem:[#allocation20 + $0x648] sm:$0xff]
    %v3850 = vld [vmem:[#allocation20 + $0x650] sm:$0xff]
    %v3851 = vld [vmem:[#allocation20 + $0x658] sm:$0xff]
    %v3852 = vld [vmem:[#allocation20 + $0x660] sm:$0xff]
    %v3853 = vld [vmem:[#allocation20 + $0x668] sm:$0xff]
    %v3854 = vld [vmem:[#allocation20 + $0x670] sm:$0xff]
    %v3855 = vld [vmem:[#allocation20 + $0x678] sm:$0xff]
    %v3856 = vld [vmem:[#allocation20 + $0x680] sm:$0xff]
    %v3857 = vld [vmem:[#allocation20 + $0x688] sm:$0xff]
    %v3858 = vld [vmem:[#allocation20 + $0x690] sm:$0xff]
    %v3859 = vld [vmem:[#allocation20 + $0x698] sm:$0xff]
    %v3860 = vld [vmem:[#allocation20 + $0x6a0] sm:$0xff]
    %v3861 = vld [vmem:[#allocation20 + $0x6a8] sm:$0xff]
    %v3862 = vld [vmem:[#allocation20 + $0x6b0] sm:$0xff]
    %v3863 = vld [vmem:[#allocation20 + $0x6b8] sm:$0xff]
    %v3864 = vld [vmem:[#allocation20 + $0x6c0] sm:$0xff]
    %v3865 = vld [vmem:[#allocation20 + $0x6c8] sm:$0xff]
    %v3866 = vld [vmem:[#allocation20 + $0x6d0] sm:$0xff]
    %v3867 = vld [vmem:[#allocation20 + $0x6d8] sm:$0xff]
    %v3868 = vld [vmem:[#allocation20 + $0x6e0] sm:$0xff]
    %v3869 = vld [vmem:[#allocation20 + $0x6e8] sm:$0xff]
    %v3870 = vld [vmem:[#allocation20 + $0x6f0] sm:$0xff]
    %v3871 = vld [vmem:[#allocation20 + $0x6f8] sm:$0xff]
    %v3872 = vld [vmem:[#allocation20 + $0x700] sm:$0xff]
    %v3873 = vld [vmem:[#allocation20 + $0x708] sm:$0xff]
    %v3874 = vld [vmem:[#allocation20 + $0x710] sm:$0xff]
    %v3875 = vld [vmem:[#allocation20 + $0x718] sm:$0xff]
    %v3876 = vld [vmem:[#allocation20 + $0x720] sm:$0xff]
    %v3877 = vld [vmem:[#allocation20 + $0x728] sm:$0xff]
    %v3878 = vld [vmem:[#allocation20 + $0x730] sm:$0xff]
    %v3879 = vld [vmem:[#allocation20 + $0x738] sm:$0xff]
    %v3880 = vld [vmem:[#allocation20 + $0x740] sm:$0xff]
    %v3881 = vld [vmem:[#allocation20 + $0x748] sm:$0xff]
    %v3882 = vld [vmem:[#allocation20 + $0x750] sm:$0xff]
    %v3883 = vld [vmem:[#allocation20 + $0x758] sm:$0xff]
    %v3884 = vld [vmem:[#allocation20 + $0x760] sm:$0xff]
    %v3885 = vld [vmem:[#allocation20 + $0x768] sm:$0xff]
    %v3886 = vld [vmem:[#allocation20 + $0x770] sm:$0xff]
    %v3887 = vld [vmem:[#allocation20 + $0x778] sm:$0xff]
    %v3888 = vld [vmem:[#allocation20 + $0x780] sm:$0xff]
    %v3889 = vld [vmem:[#allocation20 + $0x788] sm:$0xff]
    %v3890 = vld [vmem:[#allocation20 + $0x790] sm:$0xff]
    %v3891 = vld [vmem:[#allocation20 + $0x798] sm:$0xff]
    %v3892 = vld [vmem:[#allocation20 + $0x7a0] sm:$0xff]
    %v3893 = vld [vmem:[#allocation20 + $0x7a8] sm:$0xff]
    %v3894 = vld [vmem:[#allocation20 + $0x7b0] sm:$0xff]
    %v3895 = vld [vmem:[#allocation20 + $0x7b8] sm:$0xff]
    %v3896 = vld [vmem:[#allocation20 + $0x7c0] sm:$0xff]
    %v3897 = vld [vmem:[#allocation20 + $0x7c8] sm:$0xff]
    %v3898 = vld [vmem:[#allocation20 + $0x7d0] sm:$0xff]
    %v3899 = vld [vmem:[#allocation20 + $0x7d8] sm:$0xff]
    %v3900 = vld [vmem:[#allocation20 + $0x7e0] sm:$0xff]
    %v3901 = vld [vmem:[#allocation20 + $0x7e8] sm:$0xff]
    %v3902 = vld [vmem:[#allocation20 + $0x7f0] sm:$0xff]
    %v3903 = vld [vmem:[#allocation20 + $0x7f8] sm:$0xff]
    %v3904 = vld [vmem:[#allocation20 + $0x800] sm:$0xff]
    %v3905 = vld [vmem:[#allocation20 + $0x808] sm:$0xff]
    %v3906 = vld [vmem:[#allocation20 + $0x810] sm:$0xff]
    %v3907 = vld [vmem:[#allocation20 + $0x818] sm:$0xff]
    %v3908 = vld [vmem:[#allocation20 + $0x820] sm:$0xff]
    %v3909 = vld [vmem:[#allocation20 + $0x828] sm:$0xff]
    %v3910 = vld [vmem:[#allocation20 + $0x830] sm:$0xff]
    %v3911 = vld [vmem:[#allocation20 + $0x838] sm:$0xff]
    %v3912 = vld [vmem:[#allocation20 + $0x840] sm:$0xff]
    %v3913 = vld [vmem:[#allocation20 + $0x848] sm:$0xff]
    %v3914 = vld [vmem:[#allocation20 + $0x850] sm:$0xff]
    %v3915 = vld [vmem:[#allocation20 + $0x858] sm:$0xff]
    %v3916 = vld [vmem:[#allocation20 + $0x860] sm:$0xff]
    %v3917 = vld [vmem:[#allocation20 + $0x868] sm:$0xff]
    %v3918 = vld [vmem:[#allocation20 + $0x870] sm:$0xff]
    %v3919 = vld [vmem:[#allocation20 + $0x878] sm:$0xff]
    %v3920 = vld [vmem:[#allocation20 + $0x880] sm:$0xff]
    %v3921 = vld [vmem:[#allocation20 + $0x888] sm:$0xff]
    %v3922 = vld [vmem:[#allocation20 + $0x890] sm:$0xff]
    %v3923 = vld [vmem:[#allocation20 + $0x898] sm:$0xff]
    %v3924 = vld [vmem:[#allocation20 + $0x8a0] sm:$0xff]
    %v3925 = vld [vmem:[#allocation20 + $0x8a8] sm:$0xff]
    %v3926 = vld [vmem:[#allocation20 + $0x8b0] sm:$0xff]
    %v3927 = vld [vmem:[#allocation20 + $0x8b8] sm:$0xff]
    %v3928 = vld [vmem:[#allocation20 + $0x8c0] sm:$0xff]
    %v3929 = vld [vmem:[#allocation20 + $0x8c8] sm:$0xff]
    %v3930 = vld [vmem:[#allocation20 + $0x8d0] sm:$0xff]
    %v3931 = vld [vmem:[#allocation20 + $0x8d8] sm:$0xff]
    %v3932 = vld [vmem:[#allocation20 + $0x8e0] sm:$0xff]
    %v3933 = vld [vmem:[#allocation20 + $0x8e8] sm:$0xff]
    %v3934 = vld [vmem:[#allocation20 + $0x8f0] sm:$0xff]
    %v3935 = vld [vmem:[#allocation20 + $0x8f8] sm:$0xff]
    %v3936 = vld [vmem:[#allocation20 + $0x900] sm:$0xff]
    %v3937 = vld [vmem:[#allocation20 + $0x908] sm:$0xff]
    %v3938 = vld [vmem:[#allocation20 + $0x910] sm:$0xff]
    %v3939 = vld [vmem:[#allocation20 + $0x918] sm:$0xff]
    %v3940 = vld [vmem:[#allocation20 + $0x920] sm:$0xff]
    %v3941 = vld [vmem:[#allocation20 + $0x928] sm:$0xff]
    %v3942 = vld [vmem:[#allocation20 + $0x930] sm:$0xff]
    %v3943 = vld [vmem:[#allocation20 + $0x938] sm:$0xff]
    %v3944 = vld [vmem:[#allocation20 + $0x940] sm:$0xff]
    %v3945 = vld [vmem:[#allocation20 + $0x948] sm:$0xff]
    %v3946 = vld [vmem:[#allocation20 + $0x950] sm:$0xff]
    %v3947 = vld [vmem:[#allocation20 + $0x958] sm:$0xff]
    %v3948 = vld [vmem:[#allocation20 + $0x960] sm:$0xff]
    %v3949 = vld [vmem:[#allocation20 + $0x968] sm:$0xff]
    %v3950 = vld [vmem:[#allocation20 + $0x970] sm:$0xff]
    %v3951 = vld [vmem:[#allocation20 + $0x978] sm:$0xff]
    %v3952 = vld [vmem:[#allocation20 + $0x980] sm:$0xff]
    %v3953 = vld [vmem:[#allocation20 + $0x988] sm:$0xff]
    %v3954 = vld [vmem:[#allocation20 + $0x990] sm:$0xff]
    %v3955 = vld [vmem:[#allocation20 + $0x998] sm:$0xff]
    %v3956 = vld [vmem:[#allocation20 + $0x9a0] sm:$0xff]
    %v3957 = vld [vmem:[#allocation20 + $0x9a8] sm:$0xff]
    %v3958 = vld [vmem:[#allocation20 + $0x9b0] sm:$0xff]
    %v3959 = vld [vmem:[#allocation20 + $0x9b8] sm:$0xff]
    %v3960 = vld [vmem:[#allocation20 + $0x9c0] sm:$0xff]
    %v3961 = vld [vmem:[#allocation20 + $0x9c8] sm:$0xff]
    %v3962 = vld [vmem:[#allocation20 + $0x9d0] sm:$0xff]
    %v3963 = vld [vmem:[#allocation20 + $0x9d8] sm:$0xff]
    %v3964 = vld [vmem:[#allocation20 + $0x9e0] sm:$0xff]
    %v3965 = vld [vmem:[#allocation20 + $0x9e8] sm:$0xff]
    %v3966 = vld [vmem:[#allocation20 + $0x9f0] sm:$0xff]
    %v3967 = vld [vmem:[#allocation20 + $0x9f8] sm:$0xff]
    %v3968 = vld [vmem:[#allocation20 + $0xa00] sm:$0xff]
    %v3969 = vld [vmem:[#allocation20 + $0xa08] sm:$0xff]
    %v3970 = vld [vmem:[#allocation20 + $0xa10] sm:$0xff]
    %v3971 = vld [vmem:[#allocation20 + $0xa18] sm:$0xff]
    %v3972 = vld [vmem:[#allocation20 + $0xa20] sm:$0xff]
    %v3973 = vld [vmem:[#allocation20 + $0xa28] sm:$0xff]
    %v3974 = vld [vmem:[#allocation20 + $0xa30] sm:$0xff]
    %v3975 = vld [vmem:[#allocation20 + $0xa38] sm:$0xff]
    %v3976 = vld [vmem:[#allocation20 + $0xa40] sm:$0xff]
    %v3977 = vld [vmem:[#allocation20 + $0xa48] sm:$0xff]
    %v3978 = vld [vmem:[#allocation20 + $0xa50] sm:$0xff]
    %v3979 = vld [vmem:[#allocation20 + $0xa58] sm:$0xff]
    %v3980 = vld [vmem:[#allocation20 + $0xa60] sm:$0xff]
    %v3981 = vld [vmem:[#allocation20 + $0xa68] sm:$0xff]
    %v3982 = vld [vmem:[#allocation20 + $0xa70] sm:$0xff]
    %v3983 = vld [vmem:[#allocation20 + $0xa78] sm:$0xff]
    %v3984 = vld [vmem:[#allocation20 + $0xa80] sm:$0xff]
    %v3985 = vld [vmem:[#allocation20 + $0xa88] sm:$0xff]
    %v3986 = vld [vmem:[#allocation20 + $0xa90] sm:$0xff]
    %v3987 = vld [vmem:[#allocation20 + $0xa98] sm:$0xff]
    %v3988 = vld [vmem:[#allocation20 + $0xaa0] sm:$0xff]
    %v3989 = vld [vmem:[#allocation20 + $0xaa8] sm:$0xff]
    %v3990 = vld [vmem:[#allocation20 + $0xab0] sm:$0xff]
    %v3991 = vld [vmem:[#allocation20 + $0xab8] sm:$0xff]
    %v3992 = vld [vmem:[#allocation20 + $0xac0] sm:$0xff]
    %v3993 = vld [vmem:[#allocation20 + $0xac8] sm:$0xff]
    %v3994 = vld [vmem:[#allocation20 + $0xad0] sm:$0xff]
    %v3995 = vld [vmem:[#allocation20 + $0xad8] sm:$0xff]
    %v3996 = vld [vmem:[#allocation20 + $0xae0] sm:$0xff]
    %v3997 = vld [vmem:[#allocation20 + $0xae8] sm:$0xff]
    %v3998 = vld [vmem:[#allocation20 + $0xaf0] sm:$0xff]
    %v3999 = vld [vmem:[#allocation20 + $0xaf8] sm:$0xff]
    %v4000 = vld [vmem:[#allocation20 + $0xb00] sm:$0xff]
    %v4001 = vld [vmem:[#allocation20 + $0xb08] sm:$0xff]
    %v4002 = vld [vmem:[#allocation20 + $0xb10] sm:$0xff]
    %v4003 = vld [vmem:[#allocation20 + $0xb18] sm:$0xff]
    %v4004 = vld [vmem:[#allocation20 + $0xb20] sm:$0xff]
    %v4005 = vld [vmem:[#allocation20 + $0xb28] sm:$0xff]
    %v4006 = vld [vmem:[#allocation20 + $0xb30] sm:$0xff]
    %v4007 = vld [vmem:[#allocation20 + $0xb38] sm:$0xff]
    %v4008 = vld [vmem:[#allocation20 + $0xb40] sm:$0xff]
    %v4009 = vld [vmem:[#allocation20 + $0xb48] sm:$0xff]
    %v4010 = vld [vmem:[#allocation20 + $0xb50] sm:$0xff]
    %v4011 = vld [vmem:[#allocation20 + $0xb58] sm:$0xff]
    %v4012 = vld [vmem:[#allocation20 + $0xb60] sm:$0xff]
    %v4013 = vld [vmem:[#allocation20 + $0xb68] sm:$0xff]
    %v4014 = vld [vmem:[#allocation20 + $0xb70] sm:$0xff]
    %v4015 = vld [vmem:[#allocation20 + $0xb78] sm:$0xff]
    %v4016 = vld [vmem:[#allocation20 + $0xb80] sm:$0xff]
    %v4017 = vld [vmem:[#allocation20 + $0xb88] sm:$0xff]
    %v4018 = vld [vmem:[#allocation20 + $0xb90] sm:$0xff]
    %v4019 = vld [vmem:[#allocation20 + $0xb98] sm:$0xff]
    %v4020 = vld [vmem:[#allocation20 + $0xba0] sm:$0xff]
    %v4021 = vld [vmem:[#allocation20 + $0xba8] sm:$0xff]
    %v4022 = vld [vmem:[#allocation20 + $0xbb0] sm:$0xff]
    %v4023 = vld [vmem:[#allocation20 + $0xbb8] sm:$0xff]
    %v4024 = vld [vmem:[#allocation20 + $0xbc0] sm:$0xff]
    %v4025 = vld [vmem:[#allocation20 + $0xbc8] sm:$0xff]
    %v4026 = vld [vmem:[#allocation20 + $0xbd0] sm:$0xff]
    %v4027 = vld [vmem:[#allocation20 + $0xbd8] sm:$0xff]
    %v4028 = vld [vmem:[#allocation20 + $0xbe0] sm:$0xff]
    %v4029 = vld [vmem:[#allocation20 + $0xbe8] sm:$0xff]
    %v4030 = vld [vmem:[#allocation20 + $0xbf0] sm:$0xff]
    %v4031 = vld [vmem:[#allocation20 + $0xbf8] sm:$0xff]
    %v4032 = vld [vmem:[#allocation20 + $0xc00] sm:$0xff]
    %v4033 = vld [vmem:[#allocation20 + $0xc08] sm:$0xff]
    %v4034 = vld [vmem:[#allocation20 + $0xc10] sm:$0xff]
    %v4035 = vld [vmem:[#allocation20 + $0xc18] sm:$0xff]
    %v4036 = vld [vmem:[#allocation20 + $0xc20] sm:$0xff]
    %v4037 = vld [vmem:[#allocation20 + $0xc28] sm:$0xff]
    %v4038 = vld [vmem:[#allocation20 + $0xc30] sm:$0xff]
    %v4039 = vld [vmem:[#allocation20 + $0xc38] sm:$0xff]
    %v4040 = vld [vmem:[#allocation20 + $0xc40] sm:$0xff]
    %v4041 = vld [vmem:[#allocation20 + $0xc48] sm:$0xff]
    %v4042 = vld [vmem:[#allocation20 + $0xc50] sm:$0xff]
    %v4043 = vld [vmem:[#allocation20 + $0xc58] sm:$0xff]
    %v4044 = vld [vmem:[#allocation20 + $0xc60] sm:$0xff]
    %v4045 = vld [vmem:[#allocation20 + $0xc68] sm:$0xff]
    %v4046 = vld [vmem:[#allocation20 + $0xc70] sm:$0xff]
    %v4047 = vld [vmem:[#allocation20 + $0xc78] sm:$0xff]
    %v4048 = vld [vmem:[#allocation20 + $0xc80] sm:$0xff]
    %v4049 = vld [vmem:[#allocation20 + $0xc88] sm:$0xff]
    %v4050 = vld [vmem:[#allocation20 + $0xc90] sm:$0xff]
    %v4051 = vld [vmem:[#allocation20 + $0xc98] sm:$0xff]
    %v4052 = vld [vmem:[#allocation20 + $0xca0] sm:$0xff]
    %v4053 = vld [vmem:[#allocation20 + $0xca8] sm:$0xff]
    %v4054 = vld [vmem:[#allocation20 + $0xcb0] sm:$0xff]
    %v4055 = vld [vmem:[#allocation20 + $0xcb8] sm:$0xff]
    %v4056 = vld [vmem:[#allocation20 + $0xcc0] sm:$0xff]
    %v4057 = vld [vmem:[#allocation20 + $0xcc8] sm:$0xff]
    %v4058 = vld [vmem:[#allocation20 + $0xcd0] sm:$0xff]
    %v4059 = vld [vmem:[#allocation20 + $0xcd8] sm:$0xff]
    %v4060 = vld [vmem:[#allocation20 + $0xce0] sm:$0xff]
    %v4061 = vld [vmem:[#allocation20 + $0xce8] sm:$0xff]
    %v4062 = vld [vmem:[#allocation20 + $0xcf0] sm:$0xff]
    %v4063 = vld [vmem:[#allocation20 + $0xcf8] sm:$0xff]
    %v4064 = vld [vmem:[#allocation20 + $0xd00] sm:$0xff]
    %v4065 = vld [vmem:[#allocation20 + $0xd08] sm:$0xff]
    %v4066 = vld [vmem:[#allocation20 + $0xd10] sm:$0xff]
    %v4067 = vld [vmem:[#allocation20 + $0xd18] sm:$0xff]
    %v4068 = vld [vmem:[#allocation20 + $0xd20] sm:$0xff]
    %v4069 = vld [vmem:[#allocation20 + $0xd28] sm:$0xff]
    %v4070 = vld [vmem:[#allocation20 + $0xd30] sm:$0xff]
    %v4071 = vld [vmem:[#allocation20 + $0xd38] sm:$0xff]
    %v4072 = vld [vmem:[#allocation20 + $0xd40] sm:$0xff]
    %v4073 = vld [vmem:[#allocation20 + $0xd48] sm:$0xff]
    %v4074 = vld [vmem:[#allocation20 + $0xd50] sm:$0xff]
    %v4075 = vld [vmem:[#allocation20 + $0xd58] sm:$0xff]
    %v4076 = vld [vmem:[#allocation20 + $0xd60] sm:$0xff]
    %v4077 = vld [vmem:[#allocation20 + $0xd68] sm:$0xff]
    %v4078 = vld [vmem:[#allocation20 + $0xd70] sm:$0xff]
    %v4079 = vld [vmem:[#allocation20 + $0xd78] sm:$0xff]
    %v4080 = vld [vmem:[#allocation20 + $0xd80] sm:$0xff]
    %v4081 = vld [vmem:[#allocation20 + $0xd88] sm:$0xff]
    %v4082 = vld [vmem:[#allocation20 + $0xd90] sm:$0xff]
    %v4083 = vld [vmem:[#allocation20 + $0xd98] sm:$0xff]
    %v4084 = vld [vmem:[#allocation20 + $0xda0] sm:$0xff]
    %v4085 = vld [vmem:[#allocation20 + $0xda8] sm:$0xff]
    %v4086 = vld [vmem:[#allocation20 + $0xdb0] sm:$0xff]
    %v4087 = vld [vmem:[#allocation20 + $0xdb8] sm:$0xff]
    %v4088 = vld [vmem:[#allocation20 + $0xdc0] sm:$0xff]
    %v4089 = vld [vmem:[#allocation20 + $0xdc8] sm:$0xff]
    %v4090 = vld [vmem:[#allocation20 + $0xdd0] sm:$0xff]
    %v4091 = vld [vmem:[#allocation20 + $0xdd8] sm:$0xff]
    %v4092 = vld [vmem:[#allocation20 + $0xde0] sm:$0xff]
    %v4093 = vld [vmem:[#allocation20 + $0xde8] sm:$0xff]
    %v4094 = vld [vmem:[#allocation20 + $0xdf0] sm:$0xff]
    %v4095 = vld [vmem:[#allocation20 + $0xdf8] sm:$0xff]
    %v4096 = vld [vmem:[#allocation20 + $0xe00] sm:$0xff]
    %v4097 = vld [vmem:[#allocation20 + $0xe08] sm:$0xff]
    %v4098 = vld [vmem:[#allocation20 + $0xe10] sm:$0xff]
    %v4099 = vld [vmem:[#allocation20 + $0xe18] sm:$0xff]
    %v4100 = vld [vmem:[#allocation20 + $0xe20] sm:$0xff]
    %v4101 = vld [vmem:[#allocation20 + $0xe28] sm:$0xff]
    %v4102 = vld [vmem:[#allocation20 + $0xe30] sm:$0xff]
    %v4103 = vld [vmem:[#allocation20 + $0xe38] sm:$0xff]
    %v4104 = vld [vmem:[#allocation20 + $0xe40] sm:$0xff]
    %v4105 = vld [vmem:[#allocation20 + $0xe48] sm:$0xff]
    %v4106 = vld [vmem:[#allocation20 + $0xe50] sm:$0xff]
    %v4107 = vld [vmem:[#allocation20 + $0xe58] sm:$0xff]
    %v4108 = vld [vmem:[#allocation20 + $0xe60] sm:$0xff]
    %v4109 = vld [vmem:[#allocation20 + $0xe68] sm:$0xff]
    %v4110 = vld [vmem:[#allocation20 + $0xe70] sm:$0xff]
    %v4111 = vld [vmem:[#allocation20 + $0xe78] sm:$0xff]
    %v4112 = vld [vmem:[#allocation20 + $0xe80] sm:$0xff]
    %v4113 = vld [vmem:[#allocation20 + $0xe88] sm:$0xff]
    %v4114 = vld [vmem:[#allocation20 + $0xe90] sm:$0xff]
    %v4115 = vld [vmem:[#allocation20 + $0xe98] sm:$0xff]
    %v4116 = vld [vmem:[#allocation20 + $0xea0] sm:$0xff]
    %v4117 = vld [vmem:[#allocation20 + $0xea8] sm:$0xff]
    %v4118 = vld [vmem:[#allocation20 + $0xeb0] sm:$0xff]
    %v4119 = vld [vmem:[#allocation20 + $0xeb8] sm:$0xff]
    %v4120 = vld [vmem:[#allocation20 + $0xec0] sm:$0xff]
    %v4121 = vld [vmem:[#allocation20 + $0xec8] sm:$0xff]
    %v4122 = vld [vmem:[#allocation20 + $0xed0] sm:$0xff]
    %v4123 = vld [vmem:[#allocation20 + $0xed8] sm:$0xff]
    %v4124 = vld [vmem:[#allocation20 + $0xee0] sm:$0xff]
    %v4125 = vld [vmem:[#allocation20 + $0xee8] sm:$0xff]
    %v4126 = vld [vmem:[#allocation20 + $0xef0] sm:$0xff]
    %v4127 = vld [vmem:[#allocation20 + $0xef8] sm:$0xff]
    %v4128 = vld [vmem:[#allocation20 + $0xf00] sm:$0xff]
    %v4129 = vld [vmem:[#allocation20 + $0xf08] sm:$0xff]
    %v4130 = vld [vmem:[#allocation20 + $0xf10] sm:$0xff]
    %v4131 = vld [vmem:[#allocation20 + $0xf18] sm:$0xff]
    %v4132 = vld [vmem:[#allocation20 + $0xf20] sm:$0xff]
    %v4133 = vld [vmem:[#allocation20 + $0xf28] sm:$0xff]
    %v4134 = vld [vmem:[#allocation20 + $0xf30] sm:$0xff]
    %v4135 = vld [vmem:[#allocation20 + $0xf38] sm:$0xff]
    %v4136 = vld [vmem:[#allocation20 + $0xf40] sm:$0xff]
    %v4137 = vld [vmem:[#allocation20 + $0xf48] sm:$0xff]
    %v4138 = vld [vmem:[#allocation20 + $0xf50] sm:$0xff]
    %v4139 = vld [vmem:[#allocation20 + $0xf58] sm:$0xff]
    %v4140 = vld [vmem:[#allocation20 + $0xf60] sm:$0xff]
    %v4141 = vld [vmem:[#allocation20 + $0xf68] sm:$0xff]
    %v4142 = vld [vmem:[#allocation20 + $0xf70] sm:$0xff]
    %v4143 = vld [vmem:[#allocation20 + $0xf78] sm:$0xff]
    %v4144 = vld [vmem:[#allocation20 + $0xf80] sm:$0xff]
    %v4145 = vld [vmem:[#allocation20 + $0xf88] sm:$0xff]
    %v4146 = vld [vmem:[#allocation20 + $0xf90] sm:$0xff]
    %v4147 = vld [vmem:[#allocation20 + $0xf98] sm:$0xff]
    %v4148 = vld [vmem:[#allocation20 + $0xfa0] sm:$0xff]
    %v4149 = vld [vmem:[#allocation20 + $0xfa8] sm:$0xff]
    %v4150 = vld [vmem:[#allocation20 + $0xfb0] sm:$0xff]
    %v4151 = vld [vmem:[#allocation20 + $0xfb8] sm:$0xff]
    %v4152 = vld [vmem:[#allocation20 + $0xfc0] sm:$0xff]
    %v4153 = vld [vmem:[#allocation20 + $0xfc8] sm:$0xff]
    %v4154 = vld [vmem:[#allocation20 + $0xfd0] sm:$0xff]
    %v4155 = vld [vmem:[#allocation20 + $0xfd8] sm:$0xff]
    %v4156 = vld [vmem:[#allocation20 + $0xfe0] sm:$0xff]
    %v4157 = vld [vmem:[#allocation20 + $0xfe8] sm:$0xff]
    %v4158 = vld [vmem:[#allocation20 + $0xff0] sm:$0xff]
    %v4159 = vld [vmem:[#allocation20 + $0xff8] sm:$0xff]
    %v4160 = vld [vmem:[#allocation22] sm:$0xff]
    %v4161 = vld [vmem:[#allocation22 + $0x8] sm:$0xff]
    %v4162 = vld [vmem:[#allocation22 + $0x10] sm:$0xff]
    %v4163 = vld [vmem:[#allocation22 + $0x18] sm:$0xff]
    %v4168 = vlaneseq
    %v4169 = vshrl.u32 %v4168, 7
    %v4170 = vsub.s32 0, %v4169
    %v4171 = vrot.slane %v4160, %v4170
    %v4172 = vlaneseq
    %v4173 = vshrl.u32 %v4172, 7
    %v4174 = vsub.s32 1, %v4173
    %v4175 = vrot.slane %v4160, %v4174
    %v4176 = vlaneseq
    %v4177 = vshrl.u32 %v4176, 7
    %v4178 = vsub.s32 2, %v4177
    %v4179 = vrot.slane %v4160, %v4178
    %v4180 = vlaneseq
    %v4181 = vshrl.u32 %v4180, 7
    %v4182 = vsub.s32 3, %v4181
    %v4183 = vrot.slane %v4160, %v4182
    %v4184 = vlaneseq
    %v4185 = vshrl.u32 %v4184, 7
    %v4186 = vsub.s32 4, %v4185
    %v4187 = vrot.slane %v4160, %v4186
    %v4188 = vlaneseq
    %v4189 = vshrl.u32 %v4188, 7
    %v4190 = vsub.s32 5, %v4189
    %v4191 = vrot.slane %v4160, %v4190
    %v4192 = vlaneseq
    %v4193 = vshrl.u32 %v4192, 7
    %v4194 = vsub.s32 6, %v4193
    %v4195 = vrot.slane %v4160, %v4194
    %v4196 = vlaneseq
    %v4197 = vshrl.u32 %v4196, 7
    %v4198 = vsub.s32 7, %v4197
    %v4199 = vrot.slane %v4160, %v4198
    %v4200 = vlaneseq
    %v4201 = vshrl.u32 %v4200, 7
    %v4202 = vsub.s32 0, %v4201
    %v4203 = vrot.slane %v4161, %v4202
    %v4204 = vlaneseq
    %v4205 = vshrl.u32 %v4204, 7
    %v4206 = vsub.s32 1, %v4205
    %v4207 = vrot.slane %v4161, %v4206
    %v4208 = vlaneseq
    %v4209 = vshrl.u32 %v4208, 7
    %v4210 = vsub.s32 2, %v4209
    %v4211 = vrot.slane %v4161, %v4210
    %v4212 = vlaneseq
    %v4213 = vshrl.u32 %v4212, 7
    %v4214 = vsub.s32 3, %v4213
    %v4215 = vrot.slane %v4161, %v4214
    %v4216 = vlaneseq
    %v4217 = vshrl.u32 %v4216, 7
    %v4218 = vsub.s32 4, %v4217
    %v4219 = vrot.slane %v4161, %v4218
    %v4220 = vlaneseq
    %v4221 = vshrl.u32 %v4220, 7
    %v4222 = vsub.s32 5, %v4221
    %v4223 = vrot.slane %v4161, %v4222
    %v4224 = vlaneseq
    %v4225 = vshrl.u32 %v4224, 7
    %v4226 = vsub.s32 6, %v4225
    %v4227 = vrot.slane %v4161, %v4226
    %v4228 = vlaneseq
    %v4229 = vshrl.u32 %v4228, 7
    %v4230 = vsub.s32 7, %v4229
    %v4231 = vrot.slane %v4161, %v4230
    %v4232 = vlaneseq
    %v4233 = vshrl.u32 %v4232, 7
    %v4234 = vsub.s32 0, %v4233
    %v4235 = vrot.slane %v4162, %v4234
    %v4236 = vlaneseq
    %v4237 = vshrl.u32 %v4236, 7
    %v4238 = vsub.s32 1, %v4237
    %v4239 = vrot.slane %v4162, %v4238
    %v4240 = vlaneseq
    %v4241 = vshrl.u32 %v4240, 7
    %v4242 = vsub.s32 2, %v4241
    %v4243 = vrot.slane %v4162, %v4242
    %v4244 = vlaneseq
    %v4245 = vshrl.u32 %v4244, 7
    %v4246 = vsub.s32 3, %v4245
    %v4247 = vrot.slane %v4162, %v4246
    %v4248 = vlaneseq
    %v4249 = vshrl.u32 %v4248, 7
    %v4250 = vsub.s32 4, %v4249
    %v4251 = vrot.slane %v4162, %v4250
    %v4252 = vlaneseq
    %v4253 = vshrl.u32 %v4252, 7
    %v4254 = vsub.s32 5, %v4253
    %v4255 = vrot.slane %v4162, %v4254
    %v4256 = vlaneseq
    %v4257 = vshrl.u32 %v4256, 7
    %v4258 = vsub.s32 6, %v4257
    %v4259 = vrot.slane %v4162, %v4258
    %v4260 = vlaneseq
    %v4261 = vshrl.u32 %v4260, 7
    %v4262 = vsub.s32 7, %v4261
    %v4263 = vrot.slane %v4162, %v4262
    %v4264 = vlaneseq
    %v4265 = vshrl.u32 %v4264, 7
    %v4266 = vsub.s32 0, %v4265
    %v4267 = vrot.slane %v4163, %v4266
    %v4268 = vlaneseq
    %v4269 = vshrl.u32 %v4268, 7
    %v4270 = vsub.s32 1, %v4269
    %v4271 = vrot.slane %v4163, %v4270
    %v4272 = vlaneseq
    %v4273 = vshrl.u32 %v4272, 7
    %v4274 = vsub.s32 2, %v4273
    %v4275 = vrot.slane %v4163, %v4274
    %v4276 = vlaneseq
    %v4277 = vshrl.u32 %v4276, 7
    %v4278 = vsub.s32 3, %v4277
    %v4279 = vrot.slane %v4163, %v4278
    %v4280 = vlaneseq
    %v4281 = vshrl.u32 %v4280, 7
    %v4282 = vsub.s32 4, %v4281
    %v4283 = vrot.slane %v4163, %v4282
    %v4284 = vlaneseq
    %v4285 = vshrl.u32 %v4284, 7
    %v4286 = vsub.s32 5, %v4285
    %v4287 = vrot.slane %v4163, %v4286
    %v4288 = vlaneseq
    %v4289 = vshrl.u32 %v4288, 7
    %v4290 = vsub.s32 6, %v4289
    %v4291 = vrot.slane %v4163, %v4290
    %v4292 = vlaneseq
    %v4293 = vshrl.u32 %v4292, 7
    %v4294 = vsub.s32 7, %v4293
    %v4295 = vrot.slane %v4163, %v4294
    %v4840 = vunpack.c.l.b16 %v3648
    %v4841 = vunpack.c.h.b16 %v3648
    %v4842 = vunpack.c.l.b16 %v3649
    %v4843 = vunpack.c.h.b16 %v3649
    %v4844 = vunpack.c.l.b16 %v3650
    %v4845 = vunpack.c.h.b16 %v3650
    %v4846 = vunpack.c.l.b16 %v3651
    %v4847 = vunpack.c.h.b16 %v3651
    %v4848 = vunpack.c.l.b16 %v3652
    %v4849 = vunpack.c.h.b16 %v3652
    %v4850 = vunpack.c.l.b16 %v3653
    %v4851 = vunpack.c.h.b16 %v3653
    %v4852 = vunpack.c.l.b16 %v3654
    %v4853 = vunpack.c.h.b16 %v3654
    %v4854 = vunpack.c.l.b16 %v3655
    %v4855 = vunpack.c.h.b16 %v3655
    %v4856 = vunpack.c.l.b16 %v3656
    %v4857 = vunpack.c.h.b16 %v3656
    %v4858 = vunpack.c.l.b16 %v3657
    %v4859 = vunpack.c.h.b16 %v3657
    %v4860 = vunpack.c.l.b16 %v3658
    %v4861 = vunpack.c.h.b16 %v3658
    %v4862 = vunpack.c.l.b16 %v3659
    %v4863 = vunpack.c.h.b16 %v3659
    %v4864 = vunpack.c.l.b16 %v3660
    %v4865 = vunpack.c.h.b16 %v3660
    %v4866 = vunpack.c.l.b16 %v3661
    %v4867 = vunpack.c.h.b16 %v3661
    %v4868 = vunpack.c.l.b16 %v3662
    %v4869 = vunpack.c.h.b16 %v3662
    %v4870 = vunpack.c.l.b16 %v3663
    %v4871 = vunpack.c.h.b16 %v3663
    %v4872 = vunpack.c.l.b16 %v3664
    %v4873 = vunpack.c.h.b16 %v3664
    %v4874 = vunpack.c.l.b16 %v3665
    %v4875 = vunpack.c.h.b16 %v3665
    %v4876 = vunpack.c.l.b16 %v3666
    %v4877 = vunpack.c.h.b16 %v3666
    %v4878 = vunpack.c.l.b16 %v3667
    %v4879 = vunpack.c.h.b16 %v3667
    %v4880 = vunpack.c.l.b16 %v3668
    %v4881 = vunpack.c.h.b16 %v3668
    %v4882 = vunpack.c.l.b16 %v3669
    %v4883 = vunpack.c.h.b16 %v3669
    %v4884 = vunpack.c.l.b16 %v3670
    %v4885 = vunpack.c.h.b16 %v3670
    %v4886 = vunpack.c.l.b16 %v3671
    %v4887 = vunpack.c.h.b16 %v3671
    %v4888 = vunpack.c.l.b16 %v3672
    %v4889 = vunpack.c.h.b16 %v3672
    %v4890 = vunpack.c.l.b16 %v3673
    %v4891 = vunpack.c.h.b16 %v3673
    %v4892 = vunpack.c.l.b16 %v3674
    %v4893 = vunpack.c.h.b16 %v3674
    %v4894 = vunpack.c.l.b16 %v3675
    %v4895 = vunpack.c.h.b16 %v3675
    %v4896 = vunpack.c.l.b16 %v3676
    %v4897 = vunpack.c.h.b16 %v3676
    %v4898 = vunpack.c.l.b16 %v3677
    %v4899 = vunpack.c.h.b16 %v3677
    %v4900 = vunpack.c.l.b16 %v3678
    %v4901 = vunpack.c.h.b16 %v3678
    %v4902 = vunpack.c.l.b16 %v3679
    %v4903 = vunpack.c.h.b16 %v3679
    %v4904 = vunpack.c.l.b16 %v3680
    %v4905 = vunpack.c.h.b16 %v3680
    %v4906 = vunpack.c.l.b16 %v3681
    %v4907 = vunpack.c.h.b16 %v3681
    %v4908 = vunpack.c.l.b16 %v3682
    %v4909 = vunpack.c.h.b16 %v3682
    %v4910 = vunpack.c.l.b16 %v3683
    %v4911 = vunpack.c.h.b16 %v3683
    %v4912 = vunpack.c.l.b16 %v3684
    %v4913 = vunpack.c.h.b16 %v3684
    %v4914 = vunpack.c.l.b16 %v3685
    %v4915 = vunpack.c.h.b16 %v3685
    %v4916 = vunpack.c.l.b16 %v3686
    %v4917 = vunpack.c.h.b16 %v3686
    %v4918 = vunpack.c.l.b16 %v3687
    %v4919 = vunpack.c.h.b16 %v3687
    %v4920 = vunpack.c.l.b16 %v3688
    %v4921 = vunpack.c.h.b16 %v3688
    %v4922 = vunpack.c.l.b16 %v3689
    %v4923 = vunpack.c.h.b16 %v3689
    %v4924 = vunpack.c.l.b16 %v3690
    %v4925 = vunpack.c.h.b16 %v3690
    %v4926 = vunpack.c.l.b16 %v3691
    %v4927 = vunpack.c.h.b16 %v3691
    %v4928 = vunpack.c.l.b16 %v3692
    %v4929 = vunpack.c.h.b16 %v3692
    %v4930 = vunpack.c.l.b16 %v3693
    %v4931 = vunpack.c.h.b16 %v3693
    %v4932 = vunpack.c.l.b16 %v3694
    %v4933 = vunpack.c.h.b16 %v3694
    %v4934 = vunpack.c.l.b16 %v3695
    %v4935 = vunpack.c.h.b16 %v3695
    %v4936 = vunpack.c.l.b16 %v3696
    %v4937 = vunpack.c.h.b16 %v3696
    %v4938 = vunpack.c.l.b16 %v3697
    %v4939 = vunpack.c.h.b16 %v3697
    %v4940 = vunpack.c.l.b16 %v3698
    %v4941 = vunpack.c.h.b16 %v3698
    %v4942 = vunpack.c.l.b16 %v3699
    %v4943 = vunpack.c.h.b16 %v3699
    %v4944 = vunpack.c.l.b16 %v3700
    %v4945 = vunpack.c.h.b16 %v3700
    %v4946 = vunpack.c.l.b16 %v3701
    %v4947 = vunpack.c.h.b16 %v3701
    %v4948 = vunpack.c.l.b16 %v3702
    %v4949 = vunpack.c.h.b16 %v3702
    %v4950 = vunpack.c.l.b16 %v3703
    %v4951 = vunpack.c.h.b16 %v3703
    %v4952 = vunpack.c.l.b16 %v3704
    %v4953 = vunpack.c.h.b16 %v3704
    %v4954 = vunpack.c.l.b16 %v3705
    %v4955 = vunpack.c.h.b16 %v3705
    %v4956 = vunpack.c.l.b16 %v3706
    %v4957 = vunpack.c.h.b16 %v3706
    %v4958 = vunpack.c.l.b16 %v3707
    %v4959 = vunpack.c.h.b16 %v3707
    %v4960 = vunpack.c.l.b16 %v3708
    %v4961 = vunpack.c.h.b16 %v3708
    %v4962 = vunpack.c.l.b16 %v3709
    %v4963 = vunpack.c.h.b16 %v3709
    %v4964 = vunpack.c.l.b16 %v3710
    %v4965 = vunpack.c.h.b16 %v3710
    %v4966 = vunpack.c.l.b16 %v3711
    %v4967 = vunpack.c.h.b16 %v3711
    %v4968 = vunpack.c.l.b16 %v3712
    %v4969 = vunpack.c.h.b16 %v3712
    %v4970 = vunpack.c.l.b16 %v3713
    %v4971 = vunpack.c.h.b16 %v3713
    %v4972 = vunpack.c.l.b16 %v3714
    %v4973 = vunpack.c.h.b16 %v3714
    %v4974 = vunpack.c.l.b16 %v3715
    %v4975 = vunpack.c.h.b16 %v3715
    %v4976 = vunpack.c.l.b16 %v3716
    %v4977 = vunpack.c.h.b16 %v3716
    %v4978 = vunpack.c.l.b16 %v3717
    %v4979 = vunpack.c.h.b16 %v3717
    %v4980 = vunpack.c.l.b16 %v3718
    %v4981 = vunpack.c.h.b16 %v3718
    %v4982 = vunpack.c.l.b16 %v3719
    %v4983 = vunpack.c.h.b16 %v3719
    %v4984 = vunpack.c.l.b16 %v3720
    %v4985 = vunpack.c.h.b16 %v3720
    %v4986 = vunpack.c.l.b16 %v3721
    %v4987 = vunpack.c.h.b16 %v3721
    %v4988 = vunpack.c.l.b16 %v3722
    %v4989 = vunpack.c.h.b16 %v3722
    %v4990 = vunpack.c.l.b16 %v3723
    %v4991 = vunpack.c.h.b16 %v3723
    %v4992 = vunpack.c.l.b16 %v3724
    %v4993 = vunpack.c.h.b16 %v3724
    %v4994 = vunpack.c.l.b16 %v3725
    %v4995 = vunpack.c.h.b16 %v3725
    %v4996 = vunpack.c.l.b16 %v3726
    %v4997 = vunpack.c.h.b16 %v3726
    %v4998 = vunpack.c.l.b16 %v3727
    %v4999 = vunpack.c.h.b16 %v3727
    %v5000 = vunpack.c.l.b16 %v3728
    %v5001 = vunpack.c.h.b16 %v3728
    %v5002 = vunpack.c.l.b16 %v3729
    %v5003 = vunpack.c.h.b16 %v3729
    %v5004 = vunpack.c.l.b16 %v3730
    %v5005 = vunpack.c.h.b16 %v3730
    %v5006 = vunpack.c.l.b16 %v3731
    %v5007 = vunpack.c.h.b16 %v3731
    %v5008 = vunpack.c.l.b16 %v3732
    %v5009 = vunpack.c.h.b16 %v3732
    %v5010 = vunpack.c.l.b16 %v3733
    %v5011 = vunpack.c.h.b16 %v3733
    %v5012 = vunpack.c.l.b16 %v3734
    %v5013 = vunpack.c.h.b16 %v3734
    %v5014 = vunpack.c.l.b16 %v3735
    %v5015 = vunpack.c.h.b16 %v3735
    %v5016 = vunpack.c.l.b16 %v3736
    %v5017 = vunpack.c.h.b16 %v3736
    %v5018 = vunpack.c.l.b16 %v3737
    %v5019 = vunpack.c.h.b16 %v3737
    %v5020 = vunpack.c.l.b16 %v3738
    %v5021 = vunpack.c.h.b16 %v3738
    %v5022 = vunpack.c.l.b16 %v3739
    %v5023 = vunpack.c.h.b16 %v3739
    %v5024 = vunpack.c.l.b16 %v3740
    %v5025 = vunpack.c.h.b16 %v3740
    %v5026 = vunpack.c.l.b16 %v3741
    %v5027 = vunpack.c.h.b16 %v3741
    %v5028 = vunpack.c.l.b16 %v3742
    %v5029 = vunpack.c.h.b16 %v3742
    %v5030 = vunpack.c.l.b16 %v3743
    %v5031 = vunpack.c.h.b16 %v3743
    %v5032 = vunpack.c.l.b16 %v3744
    %v5033 = vunpack.c.h.b16 %v3744
    %v5034 = vunpack.c.l.b16 %v3745
    %v5035 = vunpack.c.h.b16 %v3745
    %v5036 = vunpack.c.l.b16 %v3746
    %v5037 = vunpack.c.h.b16 %v3746
    %v5038 = vunpack.c.l.b16 %v3747
    %v5039 = vunpack.c.h.b16 %v3747
    %v5040 = vunpack.c.l.b16 %v3748
    %v5041 = vunpack.c.h.b16 %v3748
    %v5042 = vunpack.c.l.b16 %v3749
    %v5043 = vunpack.c.h.b16 %v3749
    %v5044 = vunpack.c.l.b16 %v3750
    %v5045 = vunpack.c.h.b16 %v3750
    %v5046 = vunpack.c.l.b16 %v3751
    %v5047 = vunpack.c.h.b16 %v3751
    %v5048 = vunpack.c.l.b16 %v3752
    %v5049 = vunpack.c.h.b16 %v3752
    %v5050 = vunpack.c.l.b16 %v3753
    %v5051 = vunpack.c.h.b16 %v3753
    %v5052 = vunpack.c.l.b16 %v3754
    %v5053 = vunpack.c.h.b16 %v3754
    %v5054 = vunpack.c.l.b16 %v3755
    %v5055 = vunpack.c.h.b16 %v3755
    %v5056 = vunpack.c.l.b16 %v3756
    %v5057 = vunpack.c.h.b16 %v3756
    %v5058 = vunpack.c.l.b16 %v3757
    %v5059 = vunpack.c.h.b16 %v3757
    %v5060 = vunpack.c.l.b16 %v3758
    %v5061 = vunpack.c.h.b16 %v3758
    %v5062 = vunpack.c.l.b16 %v3759
    %v5063 = vunpack.c.h.b16 %v3759
    %v5064 = vunpack.c.l.b16 %v3760
    %v5065 = vunpack.c.h.b16 %v3760
    %v5066 = vunpack.c.l.b16 %v3761
    %v5067 = vunpack.c.h.b16 %v3761
    %v5068 = vunpack.c.l.b16 %v3762
    %v5069 = vunpack.c.h.b16 %v3762
    %v5070 = vunpack.c.l.b16 %v3763
    %v5071 = vunpack.c.h.b16 %v3763
    %v5072 = vunpack.c.l.b16 %v3764
    %v5073 = vunpack.c.h.b16 %v3764
    %v5074 = vunpack.c.l.b16 %v3765
    %v5075 = vunpack.c.h.b16 %v3765
    %v5076 = vunpack.c.l.b16 %v3766
    %v5077 = vunpack.c.h.b16 %v3766
    %v5078 = vunpack.c.l.b16 %v3767
    %v5079 = vunpack.c.h.b16 %v3767
    %v5080 = vunpack.c.l.b16 %v3768
    %v5081 = vunpack.c.h.b16 %v3768
    %v5082 = vunpack.c.l.b16 %v3769
    %v5083 = vunpack.c.h.b16 %v3769
    %v5084 = vunpack.c.l.b16 %v3770
    %v5085 = vunpack.c.h.b16 %v3770
    %v5086 = vunpack.c.l.b16 %v3771
    %v5087 = vunpack.c.h.b16 %v3771
    %v5088 = vunpack.c.l.b16 %v3772
    %v5089 = vunpack.c.h.b16 %v3772
    %v5090 = vunpack.c.l.b16 %v3773
    %v5091 = vunpack.c.h.b16 %v3773
    %v5092 = vunpack.c.l.b16 %v3774
    %v5093 = vunpack.c.h.b16 %v3774
    %v5094 = vunpack.c.l.b16 %v3775
    %v5095 = vunpack.c.h.b16 %v3775
    %v5096 = vunpack.c.l.b16 %v3776
    %v5097 = vunpack.c.h.b16 %v3776
    %v5098 = vunpack.c.l.b16 %v3777
    %v5099 = vunpack.c.h.b16 %v3777
    %v5100 = vunpack.c.l.b16 %v3778
    %v5101 = vunpack.c.h.b16 %v3778
    %v5102 = vunpack.c.l.b16 %v3779
    %v5103 = vunpack.c.h.b16 %v3779
    %v5104 = vunpack.c.l.b16 %v3780
    %v5105 = vunpack.c.h.b16 %v3780
    %v5106 = vunpack.c.l.b16 %v3781
    %v5107 = vunpack.c.h.b16 %v3781
    %v5108 = vunpack.c.l.b16 %v3782
    %v5109 = vunpack.c.h.b16 %v3782
    %v5110 = vunpack.c.l.b16 %v3783
    %v5111 = vunpack.c.h.b16 %v3783
    %v5112 = vunpack.c.l.b16 %v3784
    %v5113 = vunpack.c.h.b16 %v3784
    %v5114 = vunpack.c.l.b16 %v3785
    %v5115 = vunpack.c.h.b16 %v3785
    %v5116 = vunpack.c.l.b16 %v3786
    %v5117 = vunpack.c.h.b16 %v3786
    %v5118 = vunpack.c.l.b16 %v3787
    %v5119 = vunpack.c.h.b16 %v3787
    %v5120 = vunpack.c.l.b16 %v3788
    %v5121 = vunpack.c.h.b16 %v3788
    %v5122 = vunpack.c.l.b16 %v3789
    %v5123 = vunpack.c.h.b16 %v3789
    %v5124 = vunpack.c.l.b16 %v3790
    %v5125 = vunpack.c.h.b16 %v3790
    %v5126 = vunpack.c.l.b16 %v3791
    %v5127 = vunpack.c.h.b16 %v3791
    %v5128 = vunpack.c.l.b16 %v3792
    %v5129 = vunpack.c.h.b16 %v3792
    %v5130 = vunpack.c.l.b16 %v3793
    %v5131 = vunpack.c.h.b16 %v3793
    %v5132 = vunpack.c.l.b16 %v3794
    %v5133 = vunpack.c.h.b16 %v3794
    %v5134 = vunpack.c.l.b16 %v3795
    %v5135 = vunpack.c.h.b16 %v3795
    %v5136 = vunpack.c.l.b16 %v3796
    %v5137 = vunpack.c.h.b16 %v3796
    %v5138 = vunpack.c.l.b16 %v3797
    %v5139 = vunpack.c.h.b16 %v3797
    %v5140 = vunpack.c.l.b16 %v3798
    %v5141 = vunpack.c.h.b16 %v3798
    %v5142 = vunpack.c.l.b16 %v3799
    %v5143 = vunpack.c.h.b16 %v3799
    %v5144 = vunpack.c.l.b16 %v3800
    %v5145 = vunpack.c.h.b16 %v3800
    %v5146 = vunpack.c.l.b16 %v3801
    %v5147 = vunpack.c.h.b16 %v3801
    %v5148 = vunpack.c.l.b16 %v3802
    %v5149 = vunpack.c.h.b16 %v3802
    %v5150 = vunpack.c.l.b16 %v3803
    %v5151 = vunpack.c.h.b16 %v3803
    %v5152 = vunpack.c.l.b16 %v3804
    %v5153 = vunpack.c.h.b16 %v3804
    %v5154 = vunpack.c.l.b16 %v3805
    %v5155 = vunpack.c.h.b16 %v3805
    %v5156 = vunpack.c.l.b16 %v3806
    %v5157 = vunpack.c.h.b16 %v3806
    %v5158 = vunpack.c.l.b16 %v3807
    %v5159 = vunpack.c.h.b16 %v3807
    %v5160 = vunpack.c.l.b16 %v3808
    %v5161 = vunpack.c.h.b16 %v3808
    %v5162 = vunpack.c.l.b16 %v3809
    %v5163 = vunpack.c.h.b16 %v3809
    %v5164 = vunpack.c.l.b16 %v3810
    %v5165 = vunpack.c.h.b16 %v3810
    %v5166 = vunpack.c.l.b16 %v3811
    %v5167 = vunpack.c.h.b16 %v3811
    %v5168 = vunpack.c.l.b16 %v3812
    %v5169 = vunpack.c.h.b16 %v3812
    %v5170 = vunpack.c.l.b16 %v3813
    %v5171 = vunpack.c.h.b16 %v3813
    %v5172 = vunpack.c.l.b16 %v3814
    %v5173 = vunpack.c.h.b16 %v3814
    %v5174 = vunpack.c.l.b16 %v3815
    %v5175 = vunpack.c.h.b16 %v3815
    %v5176 = vunpack.c.l.b16 %v3816
    %v5177 = vunpack.c.h.b16 %v3816
    %v5178 = vunpack.c.l.b16 %v3817
    %v5179 = vunpack.c.h.b16 %v3817
    %v5180 = vunpack.c.l.b16 %v3818
    %v5181 = vunpack.c.h.b16 %v3818
    %v5182 = vunpack.c.l.b16 %v3819
    %v5183 = vunpack.c.h.b16 %v3819
    %v5184 = vunpack.c.l.b16 %v3820
    %v5185 = vunpack.c.h.b16 %v3820
    %v5186 = vunpack.c.l.b16 %v3821
    %v5187 = vunpack.c.h.b16 %v3821
    %v5188 = vunpack.c.l.b16 %v3822
    %v5189 = vunpack.c.h.b16 %v3822
    %v5190 = vunpack.c.l.b16 %v3823
    %v5191 = vunpack.c.h.b16 %v3823
    %v5192 = vunpack.c.l.b16 %v3824
    %v5193 = vunpack.c.h.b16 %v3824
    %v5194 = vunpack.c.l.b16 %v3825
    %v5195 = vunpack.c.h.b16 %v3825
    %v5196 = vunpack.c.l.b16 %v3826
    %v5197 = vunpack.c.h.b16 %v3826
    %v5198 = vunpack.c.l.b16 %v3827
    %v5199 = vunpack.c.h.b16 %v3827
    %v5200 = vunpack.c.l.b16 %v3828
    %v5201 = vunpack.c.h.b16 %v3828
    %v5202 = vunpack.c.l.b16 %v3829
    %v5203 = vunpack.c.h.b16 %v3829
    %v5204 = vunpack.c.l.b16 %v3830
    %v5205 = vunpack.c.h.b16 %v3830
    %v5206 = vunpack.c.l.b16 %v3831
    %v5207 = vunpack.c.h.b16 %v3831
    %v5208 = vunpack.c.l.b16 %v3832
    %v5209 = vunpack.c.h.b16 %v3832
    %v5210 = vunpack.c.l.b16 %v3833
    %v5211 = vunpack.c.h.b16 %v3833
    %v5212 = vunpack.c.l.b16 %v3834
    %v5213 = vunpack.c.h.b16 %v3834
    %v5214 = vunpack.c.l.b16 %v3835
    %v5215 = vunpack.c.h.b16 %v3835
    %v5216 = vunpack.c.l.b16 %v3836
    %v5217 = vunpack.c.h.b16 %v3836
    %v5218 = vunpack.c.l.b16 %v3837
    %v5219 = vunpack.c.h.b16 %v3837
    %v5220 = vunpack.c.l.b16 %v3838
    %v5221 = vunpack.c.h.b16 %v3838
    %v5222 = vunpack.c.l.b16 %v3839
    %v5223 = vunpack.c.h.b16 %v3839
    %v5224 = vunpack.c.l.b16 %v3840
    %v5225 = vunpack.c.h.b16 %v3840
    %v5226 = vunpack.c.l.b16 %v3841
    %v5227 = vunpack.c.h.b16 %v3841
    %v5228 = vunpack.c.l.b16 %v3842
    %v5229 = vunpack.c.h.b16 %v3842
    %v5230 = vunpack.c.l.b16 %v3843
    %v5231 = vunpack.c.h.b16 %v3843
    %v5232 = vunpack.c.l.b16 %v3844
    %v5233 = vunpack.c.h.b16 %v3844
    %v5234 = vunpack.c.l.b16 %v3845
    %v5235 = vunpack.c.h.b16 %v3845
    %v5236 = vunpack.c.l.b16 %v3846
    %v5237 = vunpack.c.h.b16 %v3846
    %v5238 = vunpack.c.l.b16 %v3847
    %v5239 = vunpack.c.h.b16 %v3847
    %v5240 = vunpack.c.l.b16 %v3848
    %v5241 = vunpack.c.h.b16 %v3848
    %v5242 = vunpack.c.l.b16 %v3849
    %v5243 = vunpack.c.h.b16 %v3849
    %v5244 = vunpack.c.l.b16 %v3850
    %v5245 = vunpack.c.h.b16 %v3850
    %v5246 = vunpack.c.l.b16 %v3851
    %v5247 = vunpack.c.h.b16 %v3851
    %v5248 = vunpack.c.l.b16 %v3852
    %v5249 = vunpack.c.h.b16 %v3852
    %v5250 = vunpack.c.l.b16 %v3853
    %v5251 = vunpack.c.h.b16 %v3853
    %v5252 = vunpack.c.l.b16 %v3854
    %v5253 = vunpack.c.h.b16 %v3854
    %v5254 = vunpack.c.l.b16 %v3855
    %v5255 = vunpack.c.h.b16 %v3855
    %v5256 = vunpack.c.l.b16 %v3856
    %v5257 = vunpack.c.h.b16 %v3856
    %v5258 = vunpack.c.l.b16 %v3857
    %v5259 = vunpack.c.h.b16 %v3857
    %v5260 = vunpack.c.l.b16 %v3858
    %v5261 = vunpack.c.h.b16 %v3858
    %v5262 = vunpack.c.l.b16 %v3859
    %v5263 = vunpack.c.h.b16 %v3859
    %v5264 = vunpack.c.l.b16 %v3860
    %v5265 = vunpack.c.h.b16 %v3860
    %v5266 = vunpack.c.l.b16 %v3861
    %v5267 = vunpack.c.h.b16 %v3861
    %v5268 = vunpack.c.l.b16 %v3862
    %v5269 = vunpack.c.h.b16 %v3862
    %v5270 = vunpack.c.l.b16 %v3863
    %v5271 = vunpack.c.h.b16 %v3863
    %v5272 = vunpack.c.l.b16 %v3864
    %v5273 = vunpack.c.h.b16 %v3864
    %v5274 = vunpack.c.l.b16 %v3865
    %v5275 = vunpack.c.h.b16 %v3865
    %v5276 = vunpack.c.l.b16 %v3866
    %v5277 = vunpack.c.h.b16 %v3866
    %v5278 = vunpack.c.l.b16 %v3867
    %v5279 = vunpack.c.h.b16 %v3867
    %v5280 = vunpack.c.l.b16 %v3868
    %v5281 = vunpack.c.h.b16 %v3868
    %v5282 = vunpack.c.l.b16 %v3869
    %v5283 = vunpack.c.h.b16 %v3869
    %v5284 = vunpack.c.l.b16 %v3870
    %v5285 = vunpack.c.h.b16 %v3870
    %v5286 = vunpack.c.l.b16 %v3871
    %v5287 = vunpack.c.h.b16 %v3871
    %v5288 = vunpack.c.l.b16 %v3872
    %v5289 = vunpack.c.h.b16 %v3872
    %v5290 = vunpack.c.l.b16 %v3873
    %v5291 = vunpack.c.h.b16 %v3873
    %v5292 = vunpack.c.l.b16 %v3874
    %v5293 = vunpack.c.h.b16 %v3874
    %v5294 = vunpack.c.l.b16 %v3875
    %v5295 = vunpack.c.h.b16 %v3875
    %v5296 = vunpack.c.l.b16 %v3876
    %v5297 = vunpack.c.h.b16 %v3876
    %v5298 = vunpack.c.l.b16 %v3877
    %v5299 = vunpack.c.h.b16 %v3877
    %v5300 = vunpack.c.l.b16 %v3878
    %v5301 = vunpack.c.h.b16 %v3878
    %v5302 = vunpack.c.l.b16 %v3879
    %v5303 = vunpack.c.h.b16 %v3879
    %v5304 = vunpack.c.l.b16 %v3880
    %v5305 = vunpack.c.h.b16 %v3880
    %v5306 = vunpack.c.l.b16 %v3881
    %v5307 = vunpack.c.h.b16 %v3881
    %v5308 = vunpack.c.l.b16 %v3882
    %v5309 = vunpack.c.h.b16 %v3882
    %v5310 = vunpack.c.l.b16 %v3883
    %v5311 = vunpack.c.h.b16 %v3883
    %v5312 = vunpack.c.l.b16 %v3884
    %v5313 = vunpack.c.h.b16 %v3884
    %v5314 = vunpack.c.l.b16 %v3885
    %v5315 = vunpack.c.h.b16 %v3885
    %v5316 = vunpack.c.l.b16 %v3886
    %v5317 = vunpack.c.h.b16 %v3886
    %v5318 = vunpack.c.l.b16 %v3887
    %v5319 = vunpack.c.h.b16 %v3887
    %v5320 = vunpack.c.l.b16 %v3888
    %v5321 = vunpack.c.h.b16 %v3888
    %v5322 = vunpack.c.l.b16 %v3889
    %v5323 = vunpack.c.h.b16 %v3889
    %v5324 = vunpack.c.l.b16 %v3890
    %v5325 = vunpack.c.h.b16 %v3890
    %v5326 = vunpack.c.l.b16 %v3891
    %v5327 = vunpack.c.h.b16 %v3891
    %v5328 = vunpack.c.l.b16 %v3892
    %v5329 = vunpack.c.h.b16 %v3892
    %v5330 = vunpack.c.l.b16 %v3893
    %v5331 = vunpack.c.h.b16 %v3893
    %v5332 = vunpack.c.l.b16 %v3894
    %v5333 = vunpack.c.h.b16 %v3894
    %v5334 = vunpack.c.l.b16 %v3895
    %v5335 = vunpack.c.h.b16 %v3895
    %v5336 = vunpack.c.l.b16 %v3896
    %v5337 = vunpack.c.h.b16 %v3896
    %v5338 = vunpack.c.l.b16 %v3897
    %v5339 = vunpack.c.h.b16 %v3897
    %v5340 = vunpack.c.l.b16 %v3898
    %v5341 = vunpack.c.h.b16 %v3898
    %v5342 = vunpack.c.l.b16 %v3899
    %v5343 = vunpack.c.h.b16 %v3899
    %v5344 = vunpack.c.l.b16 %v3900
    %v5345 = vunpack.c.h.b16 %v3900
    %v5346 = vunpack.c.l.b16 %v3901
    %v5347 = vunpack.c.h.b16 %v3901
    %v5348 = vunpack.c.l.b16 %v3902
    %v5349 = vunpack.c.h.b16 %v3902
    %v5350 = vunpack.c.l.b16 %v3903
    %v5351 = vunpack.c.h.b16 %v3903
    %v5352 = vunpack.c.l.b16 %v3904
    %v5353 = vunpack.c.h.b16 %v3904
    %v5354 = vunpack.c.l.b16 %v3905
    %v5355 = vunpack.c.h.b16 %v3905
    %v5356 = vunpack.c.l.b16 %v3906
    %v5357 = vunpack.c.h.b16 %v3906
    %v5358 = vunpack.c.l.b16 %v3907
    %v5359 = vunpack.c.h.b16 %v3907
    %v5360 = vunpack.c.l.b16 %v3908
    %v5361 = vunpack.c.h.b16 %v3908
    %v5362 = vunpack.c.l.b16 %v3909
    %v5363 = vunpack.c.h.b16 %v3909
    %v5364 = vunpack.c.l.b16 %v3910
    %v5365 = vunpack.c.h.b16 %v3910
    %v5366 = vunpack.c.l.b16 %v3911
    %v5367 = vunpack.c.h.b16 %v3911
    %v5368 = vunpack.c.l.b16 %v3912
    %v5369 = vunpack.c.h.b16 %v3912
    %v5370 = vunpack.c.l.b16 %v3913
    %v5371 = vunpack.c.h.b16 %v3913
    %v5372 = vunpack.c.l.b16 %v3914
    %v5373 = vunpack.c.h.b16 %v3914
    %v5374 = vunpack.c.l.b16 %v3915
    %v5375 = vunpack.c.h.b16 %v3915
    %v5376 = vunpack.c.l.b16 %v3916
    %v5377 = vunpack.c.h.b16 %v3916
    %v5378 = vunpack.c.l.b16 %v3917
    %v5379 = vunpack.c.h.b16 %v3917
    %v5380 = vunpack.c.l.b16 %v3918
    %v5381 = vunpack.c.h.b16 %v3918
    %v5382 = vunpack.c.l.b16 %v3919
    %v5383 = vunpack.c.h.b16 %v3919
    %v5384 = vunpack.c.l.b16 %v3920
    %v5385 = vunpack.c.h.b16 %v3920
    %v5386 = vunpack.c.l.b16 %v3921
    %v5387 = vunpack.c.h.b16 %v3921
    %v5388 = vunpack.c.l.b16 %v3922
    %v5389 = vunpack.c.h.b16 %v3922
    %v5390 = vunpack.c.l.b16 %v3923
    %v5391 = vunpack.c.h.b16 %v3923
    %v5392 = vunpack.c.l.b16 %v3924
    %v5393 = vunpack.c.h.b16 %v3924
    %v5394 = vunpack.c.l.b16 %v3925
    %v5395 = vunpack.c.h.b16 %v3925
    %v5396 = vunpack.c.l.b16 %v3926
    %v5397 = vunpack.c.h.b16 %v3926
    %v5398 = vunpack.c.l.b16 %v3927
    %v5399 = vunpack.c.h.b16 %v3927
    %v5400 = vunpack.c.l.b16 %v3928
    %v5401 = vunpack.c.h.b16 %v3928
    %v5402 = vunpack.c.l.b16 %v3929
    %v5403 = vunpack.c.h.b16 %v3929
    %v5404 = vunpack.c.l.b16 %v3930
    %v5405 = vunpack.c.h.b16 %v3930
    %v5406 = vunpack.c.l.b16 %v3931
    %v5407 = vunpack.c.h.b16 %v3931
    %v5408 = vunpack.c.l.b16 %v3932
    %v5409 = vunpack.c.h.b16 %v3932
    %v5410 = vunpack.c.l.b16 %v3933
    %v5411 = vunpack.c.h.b16 %v3933
    %v5412 = vunpack.c.l.b16 %v3934
    %v5413 = vunpack.c.h.b16 %v3934
    %v5414 = vunpack.c.l.b16 %v3935
    %v5415 = vunpack.c.h.b16 %v3935
    %v5416 = vunpack.c.l.b16 %v3936
    %v5417 = vunpack.c.h.b16 %v3936
    %v5418 = vunpack.c.l.b16 %v3937
    %v5419 = vunpack.c.h.b16 %v3937
    %v5420 = vunpack.c.l.b16 %v3938
    %v5421 = vunpack.c.h.b16 %v3938
    %v5422 = vunpack.c.l.b16 %v3939
    %v5423 = vunpack.c.h.b16 %v3939
    %v5424 = vunpack.c.l.b16 %v3940
    %v5425 = vunpack.c.h.b16 %v3940
    %v5426 = vunpack.c.l.b16 %v3941
    %v5427 = vunpack.c.h.b16 %v3941
    %v5428 = vunpack.c.l.b16 %v3942
    %v5429 = vunpack.c.h.b16 %v3942
    %v5430 = vunpack.c.l.b16 %v3943
    %v5431 = vunpack.c.h.b16 %v3943
    %v5432 = vunpack.c.l.b16 %v3944
    %v5433 = vunpack.c.h.b16 %v3944
    %v5434 = vunpack.c.l.b16 %v3945
    %v5435 = vunpack.c.h.b16 %v3945
    %v5436 = vunpack.c.l.b16 %v3946
    %v5437 = vunpack.c.h.b16 %v3946
    %v5438 = vunpack.c.l.b16 %v3947
    %v5439 = vunpack.c.h.b16 %v3947
    %v5440 = vunpack.c.l.b16 %v3948
    %v5441 = vunpack.c.h.b16 %v3948
    %v5442 = vunpack.c.l.b16 %v3949
    %v5443 = vunpack.c.h.b16 %v3949
    %v5444 = vunpack.c.l.b16 %v3950
    %v5445 = vunpack.c.h.b16 %v3950
    %v5446 = vunpack.c.l.b16 %v3951
    %v5447 = vunpack.c.h.b16 %v3951
    %v5448 = vunpack.c.l.b16 %v3952
    %v5449 = vunpack.c.h.b16 %v3952
    %v5450 = vunpack.c.l.b16 %v3953
    %v5451 = vunpack.c.h.b16 %v3953
    %v5452 = vunpack.c.l.b16 %v3954
    %v5453 = vunpack.c.h.b16 %v3954
    %v5454 = vunpack.c.l.b16 %v3955
    %v5455 = vunpack.c.h.b16 %v3955
    %v5456 = vunpack.c.l.b16 %v3956
    %v5457 = vunpack.c.h.b16 %v3956
    %v5458 = vunpack.c.l.b16 %v3957
    %v5459 = vunpack.c.h.b16 %v3957
    %v5460 = vunpack.c.l.b16 %v3958
    %v5461 = vunpack.c.h.b16 %v3958
    %v5462 = vunpack.c.l.b16 %v3959
    %v5463 = vunpack.c.h.b16 %v3959
    %v5464 = vunpack.c.l.b16 %v3960
    %v5465 = vunpack.c.h.b16 %v3960
    %v5466 = vunpack.c.l.b16 %v3961
    %v5467 = vunpack.c.h.b16 %v3961
    %v5468 = vunpack.c.l.b16 %v3962
    %v5469 = vunpack.c.h.b16 %v3962
    %v5470 = vunpack.c.l.b16 %v3963
    %v5471 = vunpack.c.h.b16 %v3963
    %v5472 = vunpack.c.l.b16 %v3964
    %v5473 = vunpack.c.h.b16 %v3964
    %v5474 = vunpack.c.l.b16 %v3965
    %v5475 = vunpack.c.h.b16 %v3965
    %v5476 = vunpack.c.l.b16 %v3966
    %v5477 = vunpack.c.h.b16 %v3966
    %v5478 = vunpack.c.l.b16 %v3967
    %v5479 = vunpack.c.h.b16 %v3967
    %v5480 = vunpack.c.l.b16 %v3968
    %v5481 = vunpack.c.h.b16 %v3968
    %v5482 = vunpack.c.l.b16 %v3969
    %v5483 = vunpack.c.h.b16 %v3969
    %v5484 = vunpack.c.l.b16 %v3970
    %v5485 = vunpack.c.h.b16 %v3970
    %v5486 = vunpack.c.l.b16 %v3971
    %v5487 = vunpack.c.h.b16 %v3971
    %v5488 = vunpack.c.l.b16 %v3972
    %v5489 = vunpack.c.h.b16 %v3972
    %v5490 = vunpack.c.l.b16 %v3973
    %v5491 = vunpack.c.h.b16 %v3973
    %v5492 = vunpack.c.l.b16 %v3974
    %v5493 = vunpack.c.h.b16 %v3974
    %v5494 = vunpack.c.l.b16 %v3975
    %v5495 = vunpack.c.h.b16 %v3975
    %v5496 = vunpack.c.l.b16 %v3976
    %v5497 = vunpack.c.h.b16 %v3976
    %v5498 = vunpack.c.l.b16 %v3977
    %v5499 = vunpack.c.h.b16 %v3977
    %v5500 = vunpack.c.l.b16 %v3978
    %v5501 = vunpack.c.h.b16 %v3978
    %v5502 = vunpack.c.l.b16 %v3979
    %v5503 = vunpack.c.h.b16 %v3979
    %v5504 = vunpack.c.l.b16 %v3980
    %v5505 = vunpack.c.h.b16 %v3980
    %v5506 = vunpack.c.l.b16 %v3981
    %v5507 = vunpack.c.h.b16 %v3981
    %v5508 = vunpack.c.l.b16 %v3982
    %v5509 = vunpack.c.h.b16 %v3982
    %v5510 = vunpack.c.l.b16 %v3983
    %v5511 = vunpack.c.h.b16 %v3983
    %v5512 = vunpack.c.l.b16 %v3984
    %v5513 = vunpack.c.h.b16 %v3984
    %v5514 = vunpack.c.l.b16 %v3985
    %v5515 = vunpack.c.h.b16 %v3985
    %v5516 = vunpack.c.l.b16 %v3986
    %v5517 = vunpack.c.h.b16 %v3986
    %v5518 = vunpack.c.l.b16 %v3987
    %v5519 = vunpack.c.h.b16 %v3987
    %v5520 = vunpack.c.l.b16 %v3988
    %v5521 = vunpack.c.h.b16 %v3988
    %v5522 = vunpack.c.l.b16 %v3989
    %v5523 = vunpack.c.h.b16 %v3989
    %v5524 = vunpack.c.l.b16 %v3990
    %v5525 = vunpack.c.h.b16 %v3990
    %v5526 = vunpack.c.l.b16 %v3991
    %v5527 = vunpack.c.h.b16 %v3991
    %v5528 = vunpack.c.l.b16 %v3992
    %v5529 = vunpack.c.h.b16 %v3992
    %v5530 = vunpack.c.l.b16 %v3993
    %v5531 = vunpack.c.h.b16 %v3993
    %v5532 = vunpack.c.l.b16 %v3994
    %v5533 = vunpack.c.h.b16 %v3994
    %v5534 = vunpack.c.l.b16 %v3995
    %v5535 = vunpack.c.h.b16 %v3995
    %v5536 = vunpack.c.l.b16 %v3996
    %v5537 = vunpack.c.h.b16 %v3996
    %v5538 = vunpack.c.l.b16 %v3997
    %v5539 = vunpack.c.h.b16 %v3997
    %v5540 = vunpack.c.l.b16 %v3998
    %v5541 = vunpack.c.h.b16 %v3998
    %v5542 = vunpack.c.l.b16 %v3999
    %v5543 = vunpack.c.h.b16 %v3999
    %v5544 = vunpack.c.l.b16 %v4000
    %v5545 = vunpack.c.h.b16 %v4000
    %v5546 = vunpack.c.l.b16 %v4001
    %v5547 = vunpack.c.h.b16 %v4001
    %v5548 = vunpack.c.l.b16 %v4002
    %v5549 = vunpack.c.h.b16 %v4002
    %v5550 = vunpack.c.l.b16 %v4003
    %v5551 = vunpack.c.h.b16 %v4003
    %v5552 = vunpack.c.l.b16 %v4004
    %v5553 = vunpack.c.h.b16 %v4004
    %v5554 = vunpack.c.l.b16 %v4005
    %v5555 = vunpack.c.h.b16 %v4005
    %v5556 = vunpack.c.l.b16 %v4006
    %v5557 = vunpack.c.h.b16 %v4006
    %v5558 = vunpack.c.l.b16 %v4007
    %v5559 = vunpack.c.h.b16 %v4007
    %v5560 = vunpack.c.l.b16 %v4008
    %v5561 = vunpack.c.h.b16 %v4008
    %v5562 = vunpack.c.l.b16 %v4009
    %v5563 = vunpack.c.h.b16 %v4009
    %v5564 = vunpack.c.l.b16 %v4010
    %v5565 = vunpack.c.h.b16 %v4010
    %v5566 = vunpack.c.l.b16 %v4011
    %v5567 = vunpack.c.h.b16 %v4011
    %v5568 = vunpack.c.l.b16 %v4012
    %v5569 = vunpack.c.h.b16 %v4012
    %v5570 = vunpack.c.l.b16 %v4013
    %v5571 = vunpack.c.h.b16 %v4013
    %v5572 = vunpack.c.l.b16 %v4014
    %v5573 = vunpack.c.h.b16 %v4014
    %v5574 = vunpack.c.l.b16 %v4015
    %v5575 = vunpack.c.h.b16 %v4015
    %v5576 = vunpack.c.l.b16 %v4016
    %v5577 = vunpack.c.h.b16 %v4016
    %v5578 = vunpack.c.l.b16 %v4017
    %v5579 = vunpack.c.h.b16 %v4017
    %v5580 = vunpack.c.l.b16 %v4018
    %v5581 = vunpack.c.h.b16 %v4018
    %v5582 = vunpack.c.l.b16 %v4019
    %v5583 = vunpack.c.h.b16 %v4019
    %v5584 = vunpack.c.l.b16 %v4020
    %v5585 = vunpack.c.h.b16 %v4020
    %v5586 = vunpack.c.l.b16 %v4021
    %v5587 = vunpack.c.h.b16 %v4021
    %v5588 = vunpack.c.l.b16 %v4022
    %v5589 = vunpack.c.h.b16 %v4022
    %v5590 = vunpack.c.l.b16 %v4023
    %v5591 = vunpack.c.h.b16 %v4023
    %v5592 = vunpack.c.l.b16 %v4024
    %v5593 = vunpack.c.h.b16 %v4024
    %v5594 = vunpack.c.l.b16 %v4025
    %v5595 = vunpack.c.h.b16 %v4025
    %v5596 = vunpack.c.l.b16 %v4026
    %v5597 = vunpack.c.h.b16 %v4026
    %v5598 = vunpack.c.l.b16 %v4027
    %v5599 = vunpack.c.h.b16 %v4027
    %v5600 = vunpack.c.l.b16 %v4028
    %v5601 = vunpack.c.h.b16 %v4028
    %v5602 = vunpack.c.l.b16 %v4029
    %v5603 = vunpack.c.h.b16 %v4029
    %v5604 = vunpack.c.l.b16 %v4030
    %v5605 = vunpack.c.h.b16 %v4030
    %v5606 = vunpack.c.l.b16 %v4031
    %v5607 = vunpack.c.h.b16 %v4031
    %v5608 = vunpack.c.l.b16 %v4032
    %v5609 = vunpack.c.h.b16 %v4032
    %v5610 = vunpack.c.l.b16 %v4033
    %v5611 = vunpack.c.h.b16 %v4033
    %v5612 = vunpack.c.l.b16 %v4034
    %v5613 = vunpack.c.h.b16 %v4034
    %v5614 = vunpack.c.l.b16 %v4035
    %v5615 = vunpack.c.h.b16 %v4035
    %v5616 = vunpack.c.l.b16 %v4036
    %v5617 = vunpack.c.h.b16 %v4036
    %v5618 = vunpack.c.l.b16 %v4037
    %v5619 = vunpack.c.h.b16 %v4037
    %v5620 = vunpack.c.l.b16 %v4038
    %v5621 = vunpack.c.h.b16 %v4038
    %v5622 = vunpack.c.l.b16 %v4039
    %v5623 = vunpack.c.h.b16 %v4039
    %v5624 = vunpack.c.l.b16 %v4040
    %v5625 = vunpack.c.h.b16 %v4040
    %v5626 = vunpack.c.l.b16 %v4041
    %v5627 = vunpack.c.h.b16 %v4041
    %v5628 = vunpack.c.l.b16 %v4042
    %v5629 = vunpack.c.h.b16 %v4042
    %v5630 = vunpack.c.l.b16 %v4043
    %v5631 = vunpack.c.h.b16 %v4043
    %v5632 = vunpack.c.l.b16 %v4044
    %v5633 = vunpack.c.h.b16 %v4044
    %v5634 = vunpack.c.l.b16 %v4045
    %v5635 = vunpack.c.h.b16 %v4045
    %v5636 = vunpack.c.l.b16 %v4046
    %v5637 = vunpack.c.h.b16 %v4046
    %v5638 = vunpack.c.l.b16 %v4047
    %v5639 = vunpack.c.h.b16 %v4047
    %v5640 = vunpack.c.l.b16 %v4048
    %v5641 = vunpack.c.h.b16 %v4048
    %v5642 = vunpack.c.l.b16 %v4049
    %v5643 = vunpack.c.h.b16 %v4049
    %v5644 = vunpack.c.l.b16 %v4050
    %v5645 = vunpack.c.h.b16 %v4050
    %v5646 = vunpack.c.l.b16 %v4051
    %v5647 = vunpack.c.h.b16 %v4051
    %v5648 = vunpack.c.l.b16 %v4052
    %v5649 = vunpack.c.h.b16 %v4052
    %v5650 = vunpack.c.l.b16 %v4053
    %v5651 = vunpack.c.h.b16 %v4053
    %v5652 = vunpack.c.l.b16 %v4054
    %v5653 = vunpack.c.h.b16 %v4054
    %v5654 = vunpack.c.l.b16 %v4055
    %v5655 = vunpack.c.h.b16 %v4055
    %v5656 = vunpack.c.l.b16 %v4056
    %v5657 = vunpack.c.h.b16 %v4056
    %v5658 = vunpack.c.l.b16 %v4057
    %v5659 = vunpack.c.h.b16 %v4057
    %v5660 = vunpack.c.l.b16 %v4058
    %v5661 = vunpack.c.h.b16 %v4058
    %v5662 = vunpack.c.l.b16 %v4059
    %v5663 = vunpack.c.h.b16 %v4059
    %v5664 = vunpack.c.l.b16 %v4060
    %v5665 = vunpack.c.h.b16 %v4060
    %v5666 = vunpack.c.l.b16 %v4061
    %v5667 = vunpack.c.h.b16 %v4061
    %v5668 = vunpack.c.l.b16 %v4062
    %v5669 = vunpack.c.h.b16 %v4062
    %v5670 = vunpack.c.l.b16 %v4063
    %v5671 = vunpack.c.h.b16 %v4063
    %v5672 = vunpack.c.l.b16 %v4064
    %v5673 = vunpack.c.h.b16 %v4064
    %v5674 = vunpack.c.l.b16 %v4065
    %v5675 = vunpack.c.h.b16 %v4065
    %v5676 = vunpack.c.l.b16 %v4066
    %v5677 = vunpack.c.h.b16 %v4066
    %v5678 = vunpack.c.l.b16 %v4067
    %v5679 = vunpack.c.h.b16 %v4067
    %v5680 = vunpack.c.l.b16 %v4068
    %v5681 = vunpack.c.h.b16 %v4068
    %v5682 = vunpack.c.l.b16 %v4069
    %v5683 = vunpack.c.h.b16 %v4069
    %v5684 = vunpack.c.l.b16 %v4070
    %v5685 = vunpack.c.h.b16 %v4070
    %v5686 = vunpack.c.l.b16 %v4071
    %v5687 = vunpack.c.h.b16 %v4071
    %v5688 = vunpack.c.l.b16 %v4072
    %v5689 = vunpack.c.h.b16 %v4072
    %v5690 = vunpack.c.l.b16 %v4073
    %v5691 = vunpack.c.h.b16 %v4073
    %v5692 = vunpack.c.l.b16 %v4074
    %v5693 = vunpack.c.h.b16 %v4074
    %v5694 = vunpack.c.l.b16 %v4075
    %v5695 = vunpack.c.h.b16 %v4075
    %v5696 = vunpack.c.l.b16 %v4076
    %v5697 = vunpack.c.h.b16 %v4076
    %v5698 = vunpack.c.l.b16 %v4077
    %v5699 = vunpack.c.h.b16 %v4077
    %v5700 = vunpack.c.l.b16 %v4078
    %v5701 = vunpack.c.h.b16 %v4078
    %v5702 = vunpack.c.l.b16 %v4079
    %v5703 = vunpack.c.h.b16 %v4079
    %v5704 = vunpack.c.l.b16 %v4080
    %v5705 = vunpack.c.h.b16 %v4080
    %v5706 = vunpack.c.l.b16 %v4081
    %v5707 = vunpack.c.h.b16 %v4081
    %v5708 = vunpack.c.l.b16 %v4082
    %v5709 = vunpack.c.h.b16 %v4082
    %v5710 = vunpack.c.l.b16 %v4083
    %v5711 = vunpack.c.h.b16 %v4083
    %v5712 = vunpack.c.l.b16 %v4084
    %v5713 = vunpack.c.h.b16 %v4084
    %v5714 = vunpack.c.l.b16 %v4085
    %v5715 = vunpack.c.h.b16 %v4085
    %v5716 = vunpack.c.l.b16 %v4086
    %v5717 = vunpack.c.h.b16 %v4086
    %v5718 = vunpack.c.l.b16 %v4087
    %v5719 = vunpack.c.h.b16 %v4087
    %v5720 = vunpack.c.l.b16 %v4088
    %v5721 = vunpack.c.h.b16 %v4088
    %v5722 = vunpack.c.l.b16 %v4089
    %v5723 = vunpack.c.h.b16 %v4089
    %v5724 = vunpack.c.l.b16 %v4090
    %v5725 = vunpack.c.h.b16 %v4090
    %v5726 = vunpack.c.l.b16 %v4091
    %v5727 = vunpack.c.h.b16 %v4091
    %v5728 = vunpack.c.l.b16 %v4092
    %v5729 = vunpack.c.h.b16 %v4092
    %v5730 = vunpack.c.l.b16 %v4093
    %v5731 = vunpack.c.h.b16 %v4093
    %v5732 = vunpack.c.l.b16 %v4094
    %v5733 = vunpack.c.h.b16 %v4094
    %v5734 = vunpack.c.l.b16 %v4095
    %v5735 = vunpack.c.h.b16 %v4095
    %v5736 = vunpack.c.l.b16 %v4096
    %v5737 = vunpack.c.h.b16 %v4096
    %v5738 = vunpack.c.l.b16 %v4097
    %v5739 = vunpack.c.h.b16 %v4097
    %v5740 = vunpack.c.l.b16 %v4098
    %v5741 = vunpack.c.h.b16 %v4098
    %v5742 = vunpack.c.l.b16 %v4099
    %v5743 = vunpack.c.h.b16 %v4099
    %v5744 = vunpack.c.l.b16 %v4100
    %v5745 = vunpack.c.h.b16 %v4100
    %v5746 = vunpack.c.l.b16 %v4101
    %v5747 = vunpack.c.h.b16 %v4101
    %v5748 = vunpack.c.l.b16 %v4102
    %v5749 = vunpack.c.h.b16 %v4102
    %v5750 = vunpack.c.l.b16 %v4103
    %v5751 = vunpack.c.h.b16 %v4103
    %v5752 = vunpack.c.l.b16 %v4104
    %v5753 = vunpack.c.h.b16 %v4104
    %v5754 = vunpack.c.l.b16 %v4105
    %v5755 = vunpack.c.h.b16 %v4105
    %v5756 = vunpack.c.l.b16 %v4106
    %v5757 = vunpack.c.h.b16 %v4106
    %v5758 = vunpack.c.l.b16 %v4107
    %v5759 = vunpack.c.h.b16 %v4107
    %v5760 = vunpack.c.l.b16 %v4108
    %v5761 = vunpack.c.h.b16 %v4108
    %v5762 = vunpack.c.l.b16 %v4109
    %v5763 = vunpack.c.h.b16 %v4109
    %v5764 = vunpack.c.l.b16 %v4110
    %v5765 = vunpack.c.h.b16 %v4110
    %v5766 = vunpack.c.l.b16 %v4111
    %v5767 = vunpack.c.h.b16 %v4111
    %v5768 = vunpack.c.l.b16 %v4112
    %v5769 = vunpack.c.h.b16 %v4112
    %v5770 = vunpack.c.l.b16 %v4113
    %v5771 = vunpack.c.h.b16 %v4113
    %v5772 = vunpack.c.l.b16 %v4114
    %v5773 = vunpack.c.h.b16 %v4114
    %v5774 = vunpack.c.l.b16 %v4115
    %v5775 = vunpack.c.h.b16 %v4115
    %v5776 = vunpack.c.l.b16 %v4116
    %v5777 = vunpack.c.h.b16 %v4116
    %v5778 = vunpack.c.l.b16 %v4117
    %v5779 = vunpack.c.h.b16 %v4117
    %v5780 = vunpack.c.l.b16 %v4118
    %v5781 = vunpack.c.h.b16 %v4118
    %v5782 = vunpack.c.l.b16 %v4119
    %v5783 = vunpack.c.h.b16 %v4119
    %v5784 = vunpack.c.l.b16 %v4120
    %v5785 = vunpack.c.h.b16 %v4120
    %v5786 = vunpack.c.l.b16 %v4121
    %v5787 = vunpack.c.h.b16 %v4121
    %v5788 = vunpack.c.l.b16 %v4122
    %v5789 = vunpack.c.h.b16 %v4122
    %v5790 = vunpack.c.l.b16 %v4123
    %v5791 = vunpack.c.h.b16 %v4123
    %v5792 = vunpack.c.l.b16 %v4124
    %v5793 = vunpack.c.h.b16 %v4124
    %v5794 = vunpack.c.l.b16 %v4125
    %v5795 = vunpack.c.h.b16 %v4125
    %v5796 = vunpack.c.l.b16 %v4126
    %v5797 = vunpack.c.h.b16 %v4126
    %v5798 = vunpack.c.l.b16 %v4127
    %v5799 = vunpack.c.h.b16 %v4127
    %v5800 = vunpack.c.l.b16 %v4128
    %v5801 = vunpack.c.h.b16 %v4128
    %v5802 = vunpack.c.l.b16 %v4129
    %v5803 = vunpack.c.h.b16 %v4129
    %v5804 = vunpack.c.l.b16 %v4130
    %v5805 = vunpack.c.h.b16 %v4130
    %v5806 = vunpack.c.l.b16 %v4131
    %v5807 = vunpack.c.h.b16 %v4131
    %v5808 = vunpack.c.l.b16 %v4132
    %v5809 = vunpack.c.h.b16 %v4132
    %v5810 = vunpack.c.l.b16 %v4133
    %v5811 = vunpack.c.h.b16 %v4133
    %v5812 = vunpack.c.l.b16 %v4134
    %v5813 = vunpack.c.h.b16 %v4134
    %v5814 = vunpack.c.l.b16 %v4135
    %v5815 = vunpack.c.h.b16 %v4135
    %v5816 = vunpack.c.l.b16 %v4136
    %v5817 = vunpack.c.h.b16 %v4136
    %v5818 = vunpack.c.l.b16 %v4137
    %v5819 = vunpack.c.h.b16 %v4137
    %v5820 = vunpack.c.l.b16 %v4138
    %v5821 = vunpack.c.h.b16 %v4138
    %v5822 = vunpack.c.l.b16 %v4139
    %v5823 = vunpack.c.h.b16 %v4139
    %v5824 = vunpack.c.l.b16 %v4140
    %v5825 = vunpack.c.h.b16 %v4140
    %v5826 = vunpack.c.l.b16 %v4141
    %v5827 = vunpack.c.h.b16 %v4141
    %v5828 = vunpack.c.l.b16 %v4142
    %v5829 = vunpack.c.h.b16 %v4142
    %v5830 = vunpack.c.l.b16 %v4143
    %v5831 = vunpack.c.h.b16 %v4143
    %v5832 = vunpack.c.l.b16 %v4144
    %v5833 = vunpack.c.h.b16 %v4144
    %v5834 = vunpack.c.l.b16 %v4145
    %v5835 = vunpack.c.h.b16 %v4145
    %v5836 = vunpack.c.l.b16 %v4146
    %v5837 = vunpack.c.h.b16 %v4146
    %v5838 = vunpack.c.l.b16 %v4147
    %v5839 = vunpack.c.h.b16 %v4147
    %v5840 = vunpack.c.l.b16 %v4148
    %v5841 = vunpack.c.h.b16 %v4148
    %v5842 = vunpack.c.l.b16 %v4149
    %v5843 = vunpack.c.h.b16 %v4149
    %v5844 = vunpack.c.l.b16 %v4150
    %v5845 = vunpack.c.h.b16 %v4150
    %v5846 = vunpack.c.l.b16 %v4151
    %v5847 = vunpack.c.h.b16 %v4151
    %v5848 = vunpack.c.l.b16 %v4152
    %v5849 = vunpack.c.h.b16 %v4152
    %v5850 = vunpack.c.l.b16 %v4153
    %v5851 = vunpack.c.h.b16 %v4153
    %v5852 = vunpack.c.l.b16 %v4154
    %v5853 = vunpack.c.h.b16 %v4154
    %v5854 = vunpack.c.l.b16 %v4155
    %v5855 = vunpack.c.h.b16 %v4155
    %v5856 = vunpack.c.l.b16 %v4156
    %v5857 = vunpack.c.h.b16 %v4156
    %v5858 = vunpack.c.l.b16 %v4157
    %v5859 = vunpack.c.h.b16 %v4157
    %v5860 = vunpack.c.l.b16 %v4158
    %v5861 = vunpack.c.h.b16 %v4158
    %v5862 = vunpack.c.l.b16 %v4159
    %v5863 = vunpack.c.h.b16 %v4159
    %v5864 = vpack.c.b16 %v4872, %v4840
    %v5865 = vpack.c.b16 %v4873, %v4841
    %v5866 = vpack.c.b16 %v4874, %v4842
    %v5867 = vpack.c.b16 %v4875, %v4843
    %v5868 = vpack.c.b16 %v4876, %v4844
    %v5869 = vpack.c.b16 %v4877, %v4845
    %v5870 = vpack.c.b16 %v4878, %v4846
    %v5871 = vpack.c.b16 %v4879, %v4847
    %v5872 = vpack.c.b16 %v4880, %v4848
    %v5873 = vpack.c.b16 %v4881, %v4849
    %v5874 = vpack.c.b16 %v4882, %v4850
    %v5875 = vpack.c.b16 %v4883, %v4851
    %v5876 = vpack.c.b16 %v4884, %v4852
    %v5877 = vpack.c.b16 %v4885, %v4853
    %v5878 = vpack.c.b16 %v4886, %v4854
    %v5879 = vpack.c.b16 %v4887, %v4855
    %v5880 = vpack.c.b16 %v4888, %v4856
    %v5881 = vpack.c.b16 %v4889, %v4857
    %v5882 = vpack.c.b16 %v4890, %v4858
    %v5883 = vpack.c.b16 %v4891, %v4859
    %v5884 = vpack.c.b16 %v4892, %v4860
    %v5885 = vpack.c.b16 %v4893, %v4861
    %v5886 = vpack.c.b16 %v4894, %v4862
    %v5887 = vpack.c.b16 %v4895, %v4863
    %v5888 = vpack.c.b16 %v4896, %v4864
    %v5889 = vpack.c.b16 %v4897, %v4865
    %v5890 = vpack.c.b16 %v4898, %v4866
    %v5891 = vpack.c.b16 %v4899, %v4867
    %v5892 = vpack.c.b16 %v4900, %v4868
    %v5893 = vpack.c.b16 %v4901, %v4869
    %v5894 = vpack.c.b16 %v4902, %v4870
    %v5895 = vpack.c.b16 %v4903, %v4871
    %v5896 = vpack.c.b16 %v4936, %v4904
    %v5897 = vpack.c.b16 %v4937, %v4905
    %v5898 = vpack.c.b16 %v4938, %v4906
    %v5899 = vpack.c.b16 %v4939, %v4907
    %v5900 = vpack.c.b16 %v4940, %v4908
    %v5901 = vpack.c.b16 %v4941, %v4909
    %v5902 = vpack.c.b16 %v4942, %v4910
    %v5903 = vpack.c.b16 %v4943, %v4911
    %v5904 = vpack.c.b16 %v4944, %v4912
    %v5905 = vpack.c.b16 %v4945, %v4913
    %v5906 = vpack.c.b16 %v4946, %v4914
    %v5907 = vpack.c.b16 %v4947, %v4915
    %v5908 = vpack.c.b16 %v4948, %v4916
    %v5909 = vpack.c.b16 %v4949, %v4917
    %v5910 = vpack.c.b16 %v4950, %v4918
    %v5911 = vpack.c.b16 %v4951, %v4919
    %v5912 = vpack.c.b16 %v4952, %v4920
    %v5913 = vpack.c.b16 %v4953, %v4921
    %v5914 = vpack.c.b16 %v4954, %v4922
    %v5915 = vpack.c.b16 %v4955, %v4923
    %v5916 = vpack.c.b16 %v4956, %v4924
    %v5917 = vpack.c.b16 %v4957, %v4925
    %v5918 = vpack.c.b16 %v4958, %v4926
    %v5919 = vpack.c.b16 %v4959, %v4927
    %v5920 = vpack.c.b16 %v4960, %v4928
    %v5921 = vpack.c.b16 %v4961, %v4929
    %v5922 = vpack.c.b16 %v4962, %v4930
    %v5923 = vpack.c.b16 %v4963, %v4931
    %v5924 = vpack.c.b16 %v4964, %v4932
    %v5925 = vpack.c.b16 %v4965, %v4933
    %v5926 = vpack.c.b16 %v4966, %v4934
    %v5927 = vpack.c.b16 %v4967, %v4935
    %v5928 = vpack.c.b16 %v5000, %v4968
    %v5929 = vpack.c.b16 %v5001, %v4969
    %v5930 = vpack.c.b16 %v5002, %v4970
    %v5931 = vpack.c.b16 %v5003, %v4971
    %v5932 = vpack.c.b16 %v5004, %v4972
    %v5933 = vpack.c.b16 %v5005, %v4973
    %v5934 = vpack.c.b16 %v5006, %v4974
    %v5935 = vpack.c.b16 %v5007, %v4975
    %v5936 = vpack.c.b16 %v5008, %v4976
    %v5937 = vpack.c.b16 %v5009, %v4977
    %v5938 = vpack.c.b16 %v5010, %v4978
    %v5939 = vpack.c.b16 %v5011, %v4979
    %v5940 = vpack.c.b16 %v5012, %v4980
    %v5941 = vpack.c.b16 %v5013, %v4981
    %v5942 = vpack.c.b16 %v5014, %v4982
    %v5943 = vpack.c.b16 %v5015, %v4983
    %v5944 = vpack.c.b16 %v5016, %v4984
    %v5945 = vpack.c.b16 %v5017, %v4985
    %v5946 = vpack.c.b16 %v5018, %v4986
    %v5947 = vpack.c.b16 %v5019, %v4987
    %v5948 = vpack.c.b16 %v5020, %v4988
    %v5949 = vpack.c.b16 %v5021, %v4989
    %v5950 = vpack.c.b16 %v5022, %v4990
    %v5951 = vpack.c.b16 %v5023, %v4991
    %v5952 = vpack.c.b16 %v5024, %v4992
    %v5953 = vpack.c.b16 %v5025, %v4993
    %v5954 = vpack.c.b16 %v5026, %v4994
    %v5955 = vpack.c.b16 %v5027, %v4995
    %v5956 = vpack.c.b16 %v5028, %v4996
    %v5957 = vpack.c.b16 %v5029, %v4997
    %v5958 = vpack.c.b16 %v5030, %v4998
    %v5959 = vpack.c.b16 %v5031, %v4999
    %v5960 = vpack.c.b16 %v5064, %v5032
    %v5961 = vpack.c.b16 %v5065, %v5033
    %v5962 = vpack.c.b16 %v5066, %v5034
    %v5963 = vpack.c.b16 %v5067, %v5035
    %v5964 = vpack.c.b16 %v5068, %v5036
    %v5965 = vpack.c.b16 %v5069, %v5037
    %v5966 = vpack.c.b16 %v5070, %v5038
    %v5967 = vpack.c.b16 %v5071, %v5039
    %v5968 = vpack.c.b16 %v5072, %v5040
    %v5969 = vpack.c.b16 %v5073, %v5041
    %v5970 = vpack.c.b16 %v5074, %v5042
    %v5971 = vpack.c.b16 %v5075, %v5043
    %v5972 = vpack.c.b16 %v5076, %v5044
    %v5973 = vpack.c.b16 %v5077, %v5045
    %v5974 = vpack.c.b16 %v5078, %v5046
    %v5975 = vpack.c.b16 %v5079, %v5047
    %v5976 = vpack.c.b16 %v5080, %v5048
    %v5977 = vpack.c.b16 %v5081, %v5049
    %v5978 = vpack.c.b16 %v5082, %v5050
    %v5979 = vpack.c.b16 %v5083, %v5051
    %v5980 = vpack.c.b16 %v5084, %v5052
    %v5981 = vpack.c.b16 %v5085, %v5053
    %v5982 = vpack.c.b16 %v5086, %v5054
    %v5983 = vpack.c.b16 %v5087, %v5055
    %v5984 = vpack.c.b16 %v5088, %v5056
    %v5985 = vpack.c.b16 %v5089, %v5057
    %v5986 = vpack.c.b16 %v5090, %v5058
    %v5987 = vpack.c.b16 %v5091, %v5059
    %v5988 = vpack.c.b16 %v5092, %v5060
    %v5989 = vpack.c.b16 %v5093, %v5061
    %v5990 = vpack.c.b16 %v5094, %v5062
    %v5991 = vpack.c.b16 %v5095, %v5063
    %v5992 = vpack.c.b16 %v5128, %v5096
    %v5993 = vpack.c.b16 %v5129, %v5097
    %v5994 = vpack.c.b16 %v5130, %v5098
    %v5995 = vpack.c.b16 %v5131, %v5099
    %v5996 = vpack.c.b16 %v5132, %v5100
    %v5997 = vpack.c.b16 %v5133, %v5101
    %v5998 = vpack.c.b16 %v5134, %v5102
    %v5999 = vpack.c.b16 %v5135, %v5103
    %v6000 = vpack.c.b16 %v5136, %v5104
    %v6001 = vpack.c.b16 %v5137, %v5105
    %v6002 = vpack.c.b16 %v5138, %v5106
    %v6003 = vpack.c.b16 %v5139, %v5107
    %v6004 = vpack.c.b16 %v5140, %v5108
    %v6005 = vpack.c.b16 %v5141, %v5109
    %v6006 = vpack.c.b16 %v5142, %v5110
    %v6007 = vpack.c.b16 %v5143, %v5111
    %v6008 = vpack.c.b16 %v5144, %v5112
    %v6009 = vpack.c.b16 %v5145, %v5113
    %v6010 = vpack.c.b16 %v5146, %v5114
    %v6011 = vpack.c.b16 %v5147, %v5115
    %v6012 = vpack.c.b16 %v5148, %v5116
    %v6013 = vpack.c.b16 %v5149, %v5117
    %v6014 = vpack.c.b16 %v5150, %v5118
    %v6015 = vpack.c.b16 %v5151, %v5119
    %v6016 = vpack.c.b16 %v5152, %v5120
    %v6017 = vpack.c.b16 %v5153, %v5121
    %v6018 = vpack.c.b16 %v5154, %v5122
    %v6019 = vpack.c.b16 %v5155, %v5123
    %v6020 = vpack.c.b16 %v5156, %v5124
    %v6021 = vpack.c.b16 %v5157, %v5125
    %v6022 = vpack.c.b16 %v5158, %v5126
    %v6023 = vpack.c.b16 %v5159, %v5127
    %v6024 = vpack.c.b16 %v5192, %v5160
    %v6025 = vpack.c.b16 %v5193, %v5161
    %v6026 = vpack.c.b16 %v5194, %v5162
    %v6027 = vpack.c.b16 %v5195, %v5163
    %v6028 = vpack.c.b16 %v5196, %v5164
    %v6029 = vpack.c.b16 %v5197, %v5165
    %v6030 = vpack.c.b16 %v5198, %v5166
    %v6031 = vpack.c.b16 %v5199, %v5167
    %v6032 = vpack.c.b16 %v5200, %v5168
    %v6033 = vpack.c.b16 %v5201, %v5169
    %v6034 = vpack.c.b16 %v5202, %v5170
    %v6035 = vpack.c.b16 %v5203, %v5171
    %v6036 = vpack.c.b16 %v5204, %v5172
    %v6037 = vpack.c.b16 %v5205, %v5173
    %v6038 = vpack.c.b16 %v5206, %v5174
    %v6039 = vpack.c.b16 %v5207, %v5175
    %v6040 = vpack.c.b16 %v5208, %v5176
    %v6041 = vpack.c.b16 %v5209, %v5177
    %v6042 = vpack.c.b16 %v5210, %v5178
    %v6043 = vpack.c.b16 %v5211, %v5179
    %v6044 = vpack.c.b16 %v5212, %v5180
    %v6045 = vpack.c.b16 %v5213, %v5181
    %v6046 = vpack.c.b16 %v5214, %v5182
    %v6047 = vpack.c.b16 %v5215, %v5183
    %v6048 = vpack.c.b16 %v5216, %v5184
    %v6049 = vpack.c.b16 %v5217, %v5185
    %v6050 = vpack.c.b16 %v5218, %v5186
    %v6051 = vpack.c.b16 %v5219, %v5187
    %v6052 = vpack.c.b16 %v5220, %v5188
    %v6053 = vpack.c.b16 %v5221, %v5189
    %v6054 = vpack.c.b16 %v5222, %v5190
    %v6055 = vpack.c.b16 %v5223, %v5191
    %v6056 = vpack.c.b16 %v5256, %v5224
    %v6057 = vpack.c.b16 %v5257, %v5225
    %v6058 = vpack.c.b16 %v5258, %v5226
    %v6059 = vpack.c.b16 %v5259, %v5227
    %v6060 = vpack.c.b16 %v5260, %v5228
    %v6061 = vpack.c.b16 %v5261, %v5229
    %v6062 = vpack.c.b16 %v5262, %v5230
    %v6063 = vpack.c.b16 %v5263, %v5231
    %v6064 = vpack.c.b16 %v5264, %v5232
    %v6065 = vpack.c.b16 %v5265, %v5233
    %v6066 = vpack.c.b16 %v5266, %v5234
    %v6067 = vpack.c.b16 %v5267, %v5235
    %v6068 = vpack.c.b16 %v5268, %v5236
    %v6069 = vpack.c.b16 %v5269, %v5237
    %v6070 = vpack.c.b16 %v5270, %v5238
    %v6071 = vpack.c.b16 %v5271, %v5239
    %v6072 = vpack.c.b16 %v5272, %v5240
    %v6073 = vpack.c.b16 %v5273, %v5241
    %v6074 = vpack.c.b16 %v5274, %v5242
    %v6075 = vpack.c.b16 %v5275, %v5243
    %v6076 = vpack.c.b16 %v5276, %v5244
    %v6077 = vpack.c.b16 %v5277, %v5245
    %v6078 = vpack.c.b16 %v5278, %v5246
    %v6079 = vpack.c.b16 %v5279, %v5247
    %v6080 = vpack.c.b16 %v5280, %v5248
    %v6081 = vpack.c.b16 %v5281, %v5249
    %v6082 = vpack.c.b16 %v5282, %v5250
    %v6083 = vpack.c.b16 %v5283, %v5251
    %v6084 = vpack.c.b16 %v5284, %v5252
    %v6085 = vpack.c.b16 %v5285, %v5253
    %v6086 = vpack.c.b16 %v5286, %v5254
    %v6087 = vpack.c.b16 %v5287, %v5255
    %v6088 = vpack.c.b16 %v5320, %v5288
    %v6089 = vpack.c.b16 %v5321, %v5289
    %v6090 = vpack.c.b16 %v5322, %v5290
    %v6091 = vpack.c.b16 %v5323, %v5291
    %v6092 = vpack.c.b16 %v5324, %v5292
    %v6093 = vpack.c.b16 %v5325, %v5293
    %v6094 = vpack.c.b16 %v5326, %v5294
    %v6095 = vpack.c.b16 %v5327, %v5295
    %v6096 = vpack.c.b16 %v5328, %v5296
    %v6097 = vpack.c.b16 %v5329, %v5297
    %v6098 = vpack.c.b16 %v5330, %v5298
    %v6099 = vpack.c.b16 %v5331, %v5299
    %v6100 = vpack.c.b16 %v5332, %v5300
    %v6101 = vpack.c.b16 %v5333, %v5301
    %v6102 = vpack.c.b16 %v5334, %v5302
    %v6103 = vpack.c.b16 %v5335, %v5303
    %v6104 = vpack.c.b16 %v5336, %v5304
    %v6105 = vpack.c.b16 %v5337, %v5305
    %v6106 = vpack.c.b16 %v5338, %v5306
    %v6107 = vpack.c.b16 %v5339, %v5307
    %v6108 = vpack.c.b16 %v5340, %v5308
    %v6109 = vpack.c.b16 %v5341, %v5309
    %v6110 = vpack.c.b16 %v5342, %v5310
    %v6111 = vpack.c.b16 %v5343, %v5311
    %v6112 = vpack.c.b16 %v5344, %v5312
    %v6113 = vpack.c.b16 %v5345, %v5313
    %v6114 = vpack.c.b16 %v5346, %v5314
    %v6115 = vpack.c.b16 %v5347, %v5315
    %v6116 = vpack.c.b16 %v5348, %v5316
    %v6117 = vpack.c.b16 %v5349, %v5317
    %v6118 = vpack.c.b16 %v5350, %v5318
    %v6119 = vpack.c.b16 %v5351, %v5319
    %v6120 = vpack.c.b16 %v5384, %v5352
    %v6121 = vpack.c.b16 %v5385, %v5353
    %v6122 = vpack.c.b16 %v5386, %v5354
    %v6123 = vpack.c.b16 %v5387, %v5355
    %v6124 = vpack.c.b16 %v5388, %v5356
    %v6125 = vpack.c.b16 %v5389, %v5357
    %v6126 = vpack.c.b16 %v5390, %v5358
    %v6127 = vpack.c.b16 %v5391, %v5359
    %v6128 = vpack.c.b16 %v5392, %v5360
    %v6129 = vpack.c.b16 %v5393, %v5361
    %v6130 = vpack.c.b16 %v5394, %v5362
    %v6131 = vpack.c.b16 %v5395, %v5363
    %v6132 = vpack.c.b16 %v5396, %v5364
    %v6133 = vpack.c.b16 %v5397, %v5365
    %v6134 = vpack.c.b16 %v5398, %v5366
    %v6135 = vpack.c.b16 %v5399, %v5367
    %v6136 = vpack.c.b16 %v5400, %v5368
    %v6137 = vpack.c.b16 %v5401, %v5369
    %v6138 = vpack.c.b16 %v5402, %v5370
    %v6139 = vpack.c.b16 %v5403, %v5371
    %v6140 = vpack.c.b16 %v5404, %v5372
    %v6141 = vpack.c.b16 %v5405, %v5373
    %v6142 = vpack.c.b16 %v5406, %v5374
    %v6143 = vpack.c.b16 %v5407, %v5375
    %v6144 = vpack.c.b16 %v5408, %v5376
    %v6145 = vpack.c.b16 %v5409, %v5377
    %v6146 = vpack.c.b16 %v5410, %v5378
    %v6147 = vpack.c.b16 %v5411, %v5379
    %v6148 = vpack.c.b16 %v5412, %v5380
    %v6149 = vpack.c.b16 %v5413, %v5381
    %v6150 = vpack.c.b16 %v5414, %v5382
    %v6151 = vpack.c.b16 %v5415, %v5383
    %v6152 = vpack.c.b16 %v5448, %v5416
    %v6153 = vpack.c.b16 %v5449, %v5417
    %v6154 = vpack.c.b16 %v5450, %v5418
    %v6155 = vpack.c.b16 %v5451, %v5419
    %v6156 = vpack.c.b16 %v5452, %v5420
    %v6157 = vpack.c.b16 %v5453, %v5421
    %v6158 = vpack.c.b16 %v5454, %v5422
    %v6159 = vpack.c.b16 %v5455, %v5423
    %v6160 = vpack.c.b16 %v5456, %v5424
    %v6161 = vpack.c.b16 %v5457, %v5425
    %v6162 = vpack.c.b16 %v5458, %v5426
    %v6163 = vpack.c.b16 %v5459, %v5427
    %v6164 = vpack.c.b16 %v5460, %v5428
    %v6165 = vpack.c.b16 %v5461, %v5429
    %v6166 = vpack.c.b16 %v5462, %v5430
    %v6167 = vpack.c.b16 %v5463, %v5431
    %v6168 = vpack.c.b16 %v5464, %v5432
    %v6169 = vpack.c.b16 %v5465, %v5433
    %v6170 = vpack.c.b16 %v5466, %v5434
    %v6171 = vpack.c.b16 %v5467, %v5435
    %v6172 = vpack.c.b16 %v5468, %v5436
    %v6173 = vpack.c.b16 %v5469, %v5437
    %v6174 = vpack.c.b16 %v5470, %v5438
    %v6175 = vpack.c.b16 %v5471, %v5439
    %v6176 = vpack.c.b16 %v5472, %v5440
    %v6177 = vpack.c.b16 %v5473, %v5441
    %v6178 = vpack.c.b16 %v5474, %v5442
    %v6179 = vpack.c.b16 %v5475, %v5443
    %v6180 = vpack.c.b16 %v5476, %v5444
    %v6181 = vpack.c.b16 %v5477, %v5445
    %v6182 = vpack.c.b16 %v5478, %v5446
    %v6183 = vpack.c.b16 %v5479, %v5447
    %v6184 = vpack.c.b16 %v5512, %v5480
    %v6185 = vpack.c.b16 %v5513, %v5481
    %v6186 = vpack.c.b16 %v5514, %v5482
    %v6187 = vpack.c.b16 %v5515, %v5483
    %v6188 = vpack.c.b16 %v5516, %v5484
    %v6189 = vpack.c.b16 %v5517, %v5485
    %v6190 = vpack.c.b16 %v5518, %v5486
    %v6191 = vpack.c.b16 %v5519, %v5487
    %v6192 = vpack.c.b16 %v5520, %v5488
    %v6193 = vpack.c.b16 %v5521, %v5489
    %v6194 = vpack.c.b16 %v5522, %v5490
    %v6195 = vpack.c.b16 %v5523, %v5491
    %v6196 = vpack.c.b16 %v5524, %v5492
    %v6197 = vpack.c.b16 %v5525, %v5493
    %v6198 = vpack.c.b16 %v5526, %v5494
    %v6199 = vpack.c.b16 %v5527, %v5495
    %v6200 = vpack.c.b16 %v5528, %v5496
    %v6201 = vpack.c.b16 %v5529, %v5497
    %v6202 = vpack.c.b16 %v5530, %v5498
    %v6203 = vpack.c.b16 %v5531, %v5499
    %v6204 = vpack.c.b16 %v5532, %v5500
    %v6205 = vpack.c.b16 %v5533, %v5501
    %v6206 = vpack.c.b16 %v5534, %v5502
    %v6207 = vpack.c.b16 %v5535, %v5503
    %v6208 = vpack.c.b16 %v5536, %v5504
    %v6209 = vpack.c.b16 %v5537, %v5505
    %v6210 = vpack.c.b16 %v5538, %v5506
    %v6211 = vpack.c.b16 %v5539, %v5507
    %v6212 = vpack.c.b16 %v5540, %v5508
    %v6213 = vpack.c.b16 %v5541, %v5509
    %v6214 = vpack.c.b16 %v5542, %v5510
    %v6215 = vpack.c.b16 %v5543, %v5511
    %v6216 = vpack.c.b16 %v5576, %v5544
    %v6217 = vpack.c.b16 %v5577, %v5545
    %v6218 = vpack.c.b16 %v5578, %v5546
    %v6219 = vpack.c.b16 %v5579, %v5547
    %v6220 = vpack.c.b16 %v5580, %v5548
    %v6221 = vpack.c.b16 %v5581, %v5549
    %v6222 = vpack.c.b16 %v5582, %v5550
    %v6223 = vpack.c.b16 %v5583, %v5551
    %v6224 = vpack.c.b16 %v5584, %v5552
    %v6225 = vpack.c.b16 %v5585, %v5553
    %v6226 = vpack.c.b16 %v5586, %v5554
    %v6227 = vpack.c.b16 %v5587, %v5555
    %v6228 = vpack.c.b16 %v5588, %v5556
    %v6229 = vpack.c.b16 %v5589, %v5557
    %v6230 = vpack.c.b16 %v5590, %v5558
    %v6231 = vpack.c.b16 %v5591, %v5559
    %v6232 = vpack.c.b16 %v5592, %v5560
    %v6233 = vpack.c.b16 %v5593, %v5561
    %v6234 = vpack.c.b16 %v5594, %v5562
    %v6235 = vpack.c.b16 %v5595, %v5563
    %v6236 = vpack.c.b16 %v5596, %v5564
    %v6237 = vpack.c.b16 %v5597, %v5565
    %v6238 = vpack.c.b16 %v5598, %v5566
    %v6239 = vpack.c.b16 %v5599, %v5567
    %v6240 = vpack.c.b16 %v5600, %v5568
    %v6241 = vpack.c.b16 %v5601, %v5569
    %v6242 = vpack.c.b16 %v5602, %v5570
    %v6243 = vpack.c.b16 %v5603, %v5571
    %v6244 = vpack.c.b16 %v5604, %v5572
    %v6245 = vpack.c.b16 %v5605, %v5573
    %v6246 = vpack.c.b16 %v5606, %v5574
    %v6247 = vpack.c.b16 %v5607, %v5575
    %v6248 = vpack.c.b16 %v5640, %v5608
    %v6249 = vpack.c.b16 %v5641, %v5609
    %v6250 = vpack.c.b16 %v5642, %v5610
    %v6251 = vpack.c.b16 %v5643, %v5611
    %v6252 = vpack.c.b16 %v5644, %v5612
    %v6253 = vpack.c.b16 %v5645, %v5613
    %v6254 = vpack.c.b16 %v5646, %v5614
    %v6255 = vpack.c.b16 %v5647, %v5615
    %v6256 = vpack.c.b16 %v5648, %v5616
    %v6257 = vpack.c.b16 %v5649, %v5617
    %v6258 = vpack.c.b16 %v5650, %v5618
    %v6259 = vpack.c.b16 %v5651, %v5619
    %v6260 = vpack.c.b16 %v5652, %v5620
    %v6261 = vpack.c.b16 %v5653, %v5621
    %v6262 = vpack.c.b16 %v5654, %v5622
    %v6263 = vpack.c.b16 %v5655, %v5623
    %v6264 = vpack.c.b16 %v5656, %v5624
    %v6265 = vpack.c.b16 %v5657, %v5625
    %v6266 = vpack.c.b16 %v5658, %v5626
    %v6267 = vpack.c.b16 %v5659, %v5627
    %v6268 = vpack.c.b16 %v5660, %v5628
    %v6269 = vpack.c.b16 %v5661, %v5629
    %v6270 = vpack.c.b16 %v5662, %v5630
    %v6271 = vpack.c.b16 %v5663, %v5631
    %v6272 = vpack.c.b16 %v5664, %v5632
    %v6273 = vpack.c.b16 %v5665, %v5633
    %v6274 = vpack.c.b16 %v5666, %v5634
    %v6275 = vpack.c.b16 %v5667, %v5635
    %v6276 = vpack.c.b16 %v5668, %v5636
    %v6277 = vpack.c.b16 %v5669, %v5637
    %v6278 = vpack.c.b16 %v5670, %v5638
    %v6279 = vpack.c.b16 %v5671, %v5639
    %v6280 = vpack.c.b16 %v5704, %v5672
    %v6281 = vpack.c.b16 %v5705, %v5673
    %v6282 = vpack.c.b16 %v5706, %v5674
    %v6283 = vpack.c.b16 %v5707, %v5675
    %v6284 = vpack.c.b16 %v5708, %v5676
    %v6285 = vpack.c.b16 %v5709, %v5677
    %v6286 = vpack.c.b16 %v5710, %v5678
    %v6287 = vpack.c.b16 %v5711, %v5679
    %v6288 = vpack.c.b16 %v5712, %v5680
    %v6289 = vpack.c.b16 %v5713, %v5681
    %v6290 = vpack.c.b16 %v5714, %v5682
    %v6291 = vpack.c.b16 %v5715, %v5683
    %v6292 = vpack.c.b16 %v5716, %v5684
    %v6293 = vpack.c.b16 %v5717, %v5685
    %v6294 = vpack.c.b16 %v5718, %v5686
    %v6295 = vpack.c.b16 %v5719, %v5687
    %v6296 = vpack.c.b16 %v5720, %v5688
    %v6297 = vpack.c.b16 %v5721, %v5689
    %v6298 = vpack.c.b16 %v5722, %v5690
    %v6299 = vpack.c.b16 %v5723, %v5691
    %v6300 = vpack.c.b16 %v5724, %v5692
    %v6301 = vpack.c.b16 %v5725, %v5693
    %v6302 = vpack.c.b16 %v5726, %v5694
    %v6303 = vpack.c.b16 %v5727, %v5695
    %v6304 = vpack.c.b16 %v5728, %v5696
    %v6305 = vpack.c.b16 %v5729, %v5697
    %v6306 = vpack.c.b16 %v5730, %v5698
    %v6307 = vpack.c.b16 %v5731, %v5699
    %v6308 = vpack.c.b16 %v5732, %v5700
    %v6309 = vpack.c.b16 %v5733, %v5701
    %v6310 = vpack.c.b16 %v5734, %v5702
    %v6311 = vpack.c.b16 %v5735, %v5703
    %v6312 = vpack.c.b16 %v5768, %v5736
    %v6313 = vpack.c.b16 %v5769, %v5737
    %v6314 = vpack.c.b16 %v5770, %v5738
    %v6315 = vpack.c.b16 %v5771, %v5739
    %v6316 = vpack.c.b16 %v5772, %v5740
    %v6317 = vpack.c.b16 %v5773, %v5741
    %v6318 = vpack.c.b16 %v5774, %v5742
    %v6319 = vpack.c.b16 %v5775, %v5743
    %v6320 = vpack.c.b16 %v5776, %v5744
    %v6321 = vpack.c.b16 %v5777, %v5745
    %v6322 = vpack.c.b16 %v5778, %v5746
    %v6323 = vpack.c.b16 %v5779, %v5747
    %v6324 = vpack.c.b16 %v5780, %v5748
    %v6325 = vpack.c.b16 %v5781, %v5749
    %v6326 = vpack.c.b16 %v5782, %v5750
    %v6327 = vpack.c.b16 %v5783, %v5751
    %v6328 = vpack.c.b16 %v5784, %v5752
    %v6329 = vpack.c.b16 %v5785, %v5753
    %v6330 = vpack.c.b16 %v5786, %v5754
    %v6331 = vpack.c.b16 %v5787, %v5755
    %v6332 = vpack.c.b16 %v5788, %v5756
    %v6333 = vpack.c.b16 %v5789, %v5757
    %v6334 = vpack.c.b16 %v5790, %v5758
    %v6335 = vpack.c.b16 %v5791, %v5759
    %v6336 = vpack.c.b16 %v5792, %v5760
    %v6337 = vpack.c.b16 %v5793, %v5761
    %v6338 = vpack.c.b16 %v5794, %v5762
    %v6339 = vpack.c.b16 %v5795, %v5763
    %v6340 = vpack.c.b16 %v5796, %v5764
    %v6341 = vpack.c.b16 %v5797, %v5765
    %v6342 = vpack.c.b16 %v5798, %v5766
    %v6343 = vpack.c.b16 %v5799, %v5767
    %v6344 = vpack.c.b16 %v5832, %v5800
    %v6345 = vpack.c.b16 %v5833, %v5801
    %v6346 = vpack.c.b16 %v5834, %v5802
    %v6347 = vpack.c.b16 %v5835, %v5803
    %v6348 = vpack.c.b16 %v5836, %v5804
    %v6349 = vpack.c.b16 %v5837, %v5805
    %v6350 = vpack.c.b16 %v5838, %v5806
    %v6351 = vpack.c.b16 %v5839, %v5807
    %v6352 = vpack.c.b16 %v5840, %v5808
    %v6353 = vpack.c.b16 %v5841, %v5809
    %v6354 = vpack.c.b16 %v5842, %v5810
    %v6355 = vpack.c.b16 %v5843, %v5811
    %v6356 = vpack.c.b16 %v5844, %v5812
    %v6357 = vpack.c.b16 %v5845, %v5813
    %v6358 = vpack.c.b16 %v5846, %v5814
    %v6359 = vpack.c.b16 %v5847, %v5815
    %v6360 = vpack.c.b16 %v5848, %v5816
    %v6361 = vpack.c.b16 %v5849, %v5817
    %v6362 = vpack.c.b16 %v5850, %v5818
    %v6363 = vpack.c.b16 %v5851, %v5819
    %v6364 = vpack.c.b16 %v5852, %v5820
    %v6365 = vpack.c.b16 %v5853, %v5821
    %v6366 = vpack.c.b16 %v5854, %v5822
    %v6367 = vpack.c.b16 %v5855, %v5823
    %v6368 = vpack.c.b16 %v5856, %v5824
    %v6369 = vpack.c.b16 %v5857, %v5825
    %v6370 = vpack.c.b16 %v5858, %v5826
    %v6371 = vpack.c.b16 %v5859, %v5827
    %v6372 = vpack.c.b16 %v5860, %v5828
    %v6373 = vpack.c.b16 %v5861, %v5829
    %v6374 = vpack.c.b16 %v5862, %v5830
    %v6375 = vpack.c.b16 %v5863, %v5831
    %6888 = vmatprep.subr.bf16.mxu0 %v5865
    %6889 = vmatpush1.bf16.msra.mxu0 %v5864
    %6890 = vmatprep.subr.bf16.mxu0 %v5897
    %6891 = vmatpush1.bf16.msra.mxu0 %v5896
    %6892 = vmatprep.subr.bf16.mxu0 %v5929
    %6893 = vmatpush1.bf16.msra.mxu0 %v5928
    %6894 = vmatprep.subr.bf16.mxu0 %v5961
    %6895 = vmatpush1.bf16.msra.mxu0 %v5960
    %6896 = vmatprep.subr.bf16.mxu0 %v5993
    %6897 = vmatpush1.bf16.msra.mxu0 %v5992
    %6898 = vmatprep.subr.bf16.mxu0 %v6025
    %6899 = vmatpush1.bf16.msra.mxu0 %v6024
    %6900 = vmatprep.subr.bf16.mxu0 %v6057
    %6901 = vmatpush1.bf16.msra.mxu0 %v6056
    %6902 = vmatprep.subr.bf16.mxu0 %v6089
    %6903 = vmatpush1.bf16.msra.mxu0 %v6088
    %6904 = vmatprep.subr.bf16.mxu0 %v6121
    %6905 = vmatpush1.bf16.msra.mxu0 %v6120
    %6906 = vmatprep.subr.bf16.mxu0 %v6153
    %6907 = vmatpush1.bf16.msra.mxu0 %v6152
    %6908 = vmatprep.subr.bf16.mxu0 %v6185
    %6909 = vmatpush1.bf16.msra.mxu0 %v6184
    %6910 = vmatprep.subr.bf16.mxu0 %v6217
    %6911 = vmatpush1.bf16.msra.mxu0 %v6216
    %6912 = vmatprep.subr.bf16.mxu0 %v6249
    %6913 = vmatpush1.bf16.msra.mxu0 %v6248
    %6914 = vmatprep.subr.bf16.mxu0 %v6281
    %6915 = vmatpush1.bf16.msra.mxu0 %v6280
    %6916 = vmatprep.subr.bf16.mxu0 %v6313
    %6917 = vmatpush1.bf16.msra.mxu0 %v6312
    %6918 = vmatprep.subr.bf16.mxu0 %v6345
    %6919 = vmatpush1.bf16.msra.mxu0 %v6344
    %6920 = vmatprep.mubr.bf16.mxu0 %v3647
    %6921 = vmatmul.mubr.bf16.gmra.mrb[0].mxu0 %v3646
    %v6922 = vpop.f32.mrb[0].mxu0
    %v6923 = vadd.f32 %v4171, %v6922
    %v6924 = vpop.f32.mrb[0].mxu0
    %v6925 = vadd.f32 %v4175, %v6924
    %v6926 = vpop.f32.mrb[0].mxu0
    %v6927 = vpop.f32.mrb[0].mxu0
    %6928 = vdwg.mxu0
    %6929 = vmatprep.subr.bf16.mxu0 %v5867
    %6930 = vmatpush1.bf16.msra.mxu0 %v5866
    %6931 = vmatprep.subr.bf16.mxu0 %v5899
    %6932 = vmatpush1.bf16.msra.mxu0 %v5898
    %6933 = vmatprep.subr.bf16.mxu0 %v5931
    %6934 = vmatpush1.bf16.msra.mxu0 %v5930
    %6935 = vmatprep.subr.bf16.mxu0 %v5963
    %6936 = vmatpush1.bf16.msra.mxu0 %v5962
    %6937 = vmatprep.subr.bf16.mxu0 %v5995
    %6938 = vmatpush1.bf16.msra.mxu0 %v5994
    %6939 = vmatprep.subr.bf16.mxu0 %v6027
    %6940 = vmatpush1.bf16.msra.mxu0 %v6026
    %6941 = vmatprep.subr.bf16.mxu0 %v6059
    %6942 = vmatpush1.bf16.msra.mxu0 %v6058
    %6943 = vmatprep.subr.bf16.mxu0 %v6091
    %6944 = vmatpush1.bf16.msra.mxu0 %v6090
    %6945 = vmatprep.subr.bf16.mxu0 %v6123
    %6946 = vmatpush1.bf16.msra.mxu0 %v6122
    %6947 = vmatprep.subr.bf16.mxu0 %v6155
    %6948 = vmatpush1.bf16.msra.mxu0 %v6154
    %6949 = vmatprep.subr.bf16.mxu0 %v6187
    %6950 = vmatpush1.bf16.msra.mxu0 %v6186
    %6951 = vmatprep.subr.bf16.mxu0 %v6219
    %6952 = vmatpush1.bf16.msra.mxu0 %v6218
    %6953 = vmatprep.subr.bf16.mxu0 %v6251
    %6954 = vmatpush1.bf16.msra.mxu0 %v6250
    %6955 = vmatprep.subr.bf16.mxu0 %v6283
    %6956 = vmatpush1.bf16.msra.mxu0 %v6282
    %6957 = vmatprep.subr.bf16.mxu0 %v6315
    %6958 = vmatpush1.bf16.msra.mxu0 %v6314
    %6959 = vmatprep.subr.bf16.mxu0 %v6347
    %6960 = vmatpush1.bf16.msra.mxu0 %v6346
    %6961 = vmatprep.mubr.bf16.mxu0 %v3647
    %6962 = vmatmul.mubr.bf16.gmra.mrb[0].mxu0 %v3646
    %v6963 = vpop.f32.mrb[0].mxu0
    %v6964 = vadd.f32 %v4179, %v6963
    %v6965 = vpop.f32.mrb[0].mxu0
    %v6966 = vadd.f32 %v4183, %v6965
    %v6967 = vpop.f32.mrb[0].mxu0
    %v6968 = vpop.f32.mrb[0].mxu0
    %6969 = vdwg.mxu0
    %6970 = vmatprep.subr.bf16.mxu0 %v5869
    %6971 = vmatpush1.bf16.msra.mxu0 %v5868
    %6972 = vmatprep.subr.bf16.mxu0 %v5901
    %6973 = vmatpush1.bf16.msra.mxu0 %v5900
    %6974 = vmatprep.subr.bf16.mxu0 %v5933
    %6975 = vmatpush1.bf16.msra.mxu0 %v5932
    %6976 = vmatprep.subr.bf16.mxu0 %v5965
    %6977 = vmatpush1.bf16.msra.mxu0 %v5964
    %6978 = vmatprep.subr.bf16.mxu0 %v5997
    %6979 = vmatpush1.bf16.msra.mxu0 %v5996
    %6980 = vmatprep.subr.bf16.mxu0 %v6029
    %6981 = vmatpush1.bf16.msra.mxu0 %v6028
    %6982 = vmatprep.subr.bf16.mxu0 %v6061
    %6983 = vmatpush1.bf16.msra.mxu0 %v6060
    %6984 = vmatprep.subr.bf16.mxu0 %v6093
    %6985 = vmatpush1.bf16.msra.mxu0 %v6092
    %6986 = vmatprep.subr.bf16.mxu0 %v6125
    %6987 = vmatpush1.bf16.msra.mxu0 %v6124
    %6988 = vmatprep.subr.bf16.mxu0 %v6157
    %6989 = vmatpush1.bf16.msra.mxu0 %v6156
    %6990 = vmatprep.subr.bf16.mxu0 %v6189
    %6991 = vmatpush1.bf16.msra.mxu0 %v6188
    %6992 = vmatprep.subr.bf16.mxu0 %v6221
    %6993 = vmatpush1.bf16.msra.mxu0 %v6220
    %6994 = vmatprep.subr.bf16.mxu0 %v6253
    %6995 = vmatpush1.bf16.msra.mxu0 %v6252
    %6996 = vmatprep.subr.bf16.mxu0 %v6285
    %6997 = vmatpush1.bf16.msra.mxu0 %v6284
    %6998 = vmatprep.subr.bf16.mxu0 %v6317
    %6999 = vmatpush1.bf16.msra.mxu0 %v6316
    %7000 = vmatprep.subr.bf16.mxu0 %v6349
    %7001 = vmatpush1.bf16.msra.mxu0 %v6348
    %7002 = vmatprep.mubr.bf16.mxu0 %v3647
    %7003 = vmatmul.mubr.bf16.gmra.mrb[0].mxu0 %v3646
    %v7004 = vpop.f32.mrb[0].mxu0
    %v7005 = vadd.f32 %v4187, %v7004
    %v7006 = vpop.f32.mrb[0].mxu0
    %v7007 = vadd.f32 %v4191, %v7006
    %v7008 = vpop.f32.mrb[0].mxu0
    %v7009 = vpop.f32.mrb[0].mxu0
    %7010 = vdwg.mxu0
    %7011 = vmatprep.subr.bf16.mxu0 %v5871
    %7012 = vmatpush1.bf16.msra.mxu0 %v5870
    %7013 = vmatprep.subr.bf16.mxu0 %v5903
    %7014 = vmatpush1.bf16.msra.mxu0 %v5902
    %7015 = vmatprep.subr.bf16.mxu0 %v5935
    %7016 = vmatpush1.bf16.msra.mxu0 %v5934
    %7017 = vmatprep.subr.bf16.mxu0 %v5967
    %7018 = vmatpush1.bf16.msra.mxu0 %v5966
    %7019 = vmatprep.subr.bf16.mxu0 %v5999
    %7020 = vmatpush1.bf16.msra.mxu0 %v5998
    %7021 = vmatprep.subr.bf16.mxu0 %v6031
    %7022 = vmatpush1.bf16.msra.mxu0 %v6030
    %7023 = vmatprep.subr.bf16.mxu0 %v6063
    %7024 = vmatpush1.bf16.msra.mxu0 %v6062
    %7025 = vmatprep.subr.bf16.mxu0 %v6095
    %7026 = vmatpush1.bf16.msra.mxu0 %v6094
    %7027 = vmatprep.subr.bf16.mxu0 %v6127
    %7028 = vmatpush1.bf16.msra.mxu0 %v6126
    %7029 = vmatprep.subr.bf16.mxu0 %v6159
    %7030 = vmatpush1.bf16.msra.mxu0 %v6158
    %7031 = vmatprep.subr.bf16.mxu0 %v6191
    %7032 = vmatpush1.bf16.msra.mxu0 %v6190
    %7033 = vmatprep.subr.bf16.mxu0 %v6223
    %7034 = vmatpush1.bf16.msra.mxu0 %v6222
    %7035 = vmatprep.subr.bf16.mxu0 %v6255
    %7036 = vmatpush1.bf16.msra.mxu0 %v6254
    %7037 = vmatprep.subr.bf16.mxu0 %v6287
    %7038 = vmatpush1.bf16.msra.mxu0 %v6286
    %7039 = vmatprep.subr.bf16.mxu0 %v6319
    %7040 = vmatpush1.bf16.msra.mxu0 %v6318
    %7041 = vmatprep.subr.bf16.mxu0 %v6351
    %7042 = vmatpush1.bf16.msra.mxu0 %v6350
    %7043 = vmatprep.mubr.bf16.mxu0 %v3647
    %7044 = vmatmul.mubr.bf16.gmra.mrb[0].mxu0 %v3646
    %v7045 = vpop.f32.mrb[0].mxu0
    %v7046 = vadd.f32 %v4195, %v7045
    %v7047 = vpop.f32.mrb[0].mxu0
    %v7048 = vadd.f32 %v4199, %v7047
    %v7049 = vpop.f32.mrb[0].mxu0
    %v7050 = vpop.f32.mrb[0].mxu0
    %7051 = vdwg.mxu0
    %7052 = vmatprep.subr.bf16.mxu0 %v5873
    %7053 = vmatpush1.bf16.msra.mxu0 %v5872
    %7054 = vmatprep.subr.bf16.mxu0 %v5905
    %7055 = vmatpush1.bf16.msra.mxu0 %v5904
    %7056 = vmatprep.subr.bf16.mxu0 %v5937
    %7057 = vmatpush1.bf16.msra.mxu0 %v5936
    %7058 = vmatprep.subr.bf16.mxu0 %v5969
    %7059 = vmatpush1.bf16.msra.mxu0 %v5968
    %7060 = vmatprep.subr.bf16.mxu0 %v6001
    %7061 = vmatpush1.bf16.msra.mxu0 %v6000
    %7062 = vmatprep.subr.bf16.mxu0 %v6033
    %7063 = vmatpush1.bf16.msra.mxu0 %v6032
    %7064 = vmatprep.subr.bf16.mxu0 %v6065
    %7065 = vmatpush1.bf16.msra.mxu0 %v6064
    %7066 = vmatprep.subr.bf16.mxu0 %v6097
    %7067 = vmatpush1.bf16.msra.mxu0 %v6096
    %7068 = vmatprep.subr.bf16.mxu0 %v6129
    %7069 = vmatpush1.bf16.msra.mxu0 %v6128
    %7070 = vmatprep.subr.bf16.mxu0 %v6161
    %7071 = vmatpush1.bf16.msra.mxu0 %v6160
    %7072 = vmatprep.subr.bf16.mxu0 %v6193
    %7073 = vmatpush1.bf16.msra.mxu0 %v6192
    %7074 = vmatprep.subr.bf16.mxu0 %v6225
    %7075 = vmatpush1.bf16.msra.mxu0 %v6224
    %7076 = vmatprep.subr.bf16.mxu0 %v6257
    %7077 = vmatpush1.bf16.msra.mxu0 %v6256
    %7078 = vmatprep.subr.bf16.mxu0 %v6289
    %7079 = vmatpush1.bf16.msra.mxu0 %v6288
    %7080 = vmatprep.subr.bf16.mxu0 %v6321
    %7081 = vmatpush1.bf16.msra.mxu0 %v6320
    %7082 = vmatprep.subr.bf16.mxu0 %v6353
    %7083 = vmatpush1.bf16.msra.mxu0 %v6352
    %7084 = vmatprep.mubr.bf16.mxu0 %v3647
    %7085 = vmatmul.mubr.bf16.gmra.mrb[0].mxu0 %v3646
    %v7086 = vpop.f32.mrb[0].mxu0
    %v7087 = vadd.f32 %v4203, %v7086
    %v7088 = vpop.f32.mrb[0].mxu0
    %v7089 = vadd.f32 %v4207, %v7088
    %v7090 = vpop.f32.mrb[0].mxu0
    %v7091 = vpop.f32.mrb[0].mxu0
    %7092 = vdwg.mxu0
    %7093 = vmatprep.subr.bf16.mxu0 %v5875
    %7094 = vmatpush1.bf16.msra.mxu0 %v5874
    %7095 = vmatprep.subr.bf16.mxu0 %v5907
    %7096 = vmatpush1.bf16.msra.mxu0 %v5906
    %7097 = vmatprep.subr.bf16.mxu0 %v5939
    %7098 = vmatpush1.bf16.msra.mxu0 %v5938
    %7099 = vmatprep.subr.bf16.mxu0 %v5971
    %7100 = vmatpush1.bf16.msra.mxu0 %v5970
    %7101 = vmatprep.subr.bf16.mxu0 %v6003
    %7102 = vmatpush1.bf16.msra.mxu0 %v6002
    %7103 = vmatprep.subr.bf16.mxu0 %v6035
    %7104 = vmatpush1.bf16.msra.mxu0 %v6034
    %7105 = vmatprep.subr.bf16.mxu0 %v6067
    %7106 = vmatpush1.bf16.msra.mxu0 %v6066
    %7107 = vmatprep.subr.bf16.mxu0 %v6099
    %7108 = vmatpush1.bf16.msra.mxu0 %v6098
    %7109 = vmatprep.subr.bf16.mxu0 %v6131
    %7110 = vmatpush1.bf16.msra.mxu0 %v6130
    %7111 = vmatprep.subr.bf16.mxu0 %v6163
    %7112 = vmatpush1.bf16.msra.mxu0 %v6162
    %7113 = vmatprep.subr.bf16.mxu0 %v6195
    %7114 = vmatpush1.bf16.msra.mxu0 %v6194
    %7115 = vmatprep.subr.bf16.mxu0 %v6227
    %7116 = vmatpush1.bf16.msra.mxu0 %v6226
    %7117 = vmatprep.subr.bf16.mxu0 %v6259
    %7118 = vmatpush1.bf16.msra.mxu0 %v6258
    %7119 = vmatprep.subr.bf16.mxu0 %v6291
    %7120 = vmatpush1.bf16.msra.mxu0 %v6290
    %7121 = vmatprep.subr.bf16.mxu0 %v6323
    %7122 = vmatpush1.bf16.msra.mxu0 %v6322
    %7123 = vmatprep.subr.bf16.mxu0 %v6355
    %7124 = vmatpush1.bf16.msra.mxu0 %v6354
    %7125 = vmatprep.mubr.bf16.mxu0 %v3647
    %7126 = vmatmul.mubr.bf16.gmra.mrb[0].mxu0 %v3646
    %v7127 = vpop.f32.mrb[0].mxu0
    %v7128 = vadd.f32 %v4211, %v7127
    %v7129 = vpop.f32.mrb[0].mxu0
    %v7130 = vadd.f32 %v4215, %v7129
    %v7131 = vpop.f32.mrb[0].mxu0
    %v7132 = vpop.f32.mrb[0].mxu0
    %7133 = vdwg.mxu0
    %7134 = vmatprep.subr.bf16.mxu0 %v5877
    %7135 = vmatpush1.bf16.msra.mxu0 %v5876
    %7136 = vmatprep.subr.bf16.mxu0 %v5909
    %7137 = vmatpush1.bf16.msra.mxu0 %v5908
    %7138 = vmatprep.subr.bf16.mxu0 %v5941
    %7139 = vmatpush1.bf16.msra.mxu0 %v5940
    %7140 = vmatprep.subr.bf16.mxu0 %v5973
    %7141 = vmatpush1.bf16.msra.mxu0 %v5972
    %7142 = vmatprep.subr.bf16.mxu0 %v6005
    %7143 = vmatpush1.bf16.msra.mxu0 %v6004
    %7144 = vmatprep.subr.bf16.mxu0 %v6037
    %7145 = vmatpush1.bf16.msra.mxu0 %v6036
    %7146 = vmatprep.subr.bf16.mxu0 %v6069
    %7147 = vmatpush1.bf16.msra.mxu0 %v6068
    %7148 = vmatprep.subr.bf16.mxu0 %v6101
    %7149 = vmatpush1.bf16.msra.mxu0 %v6100
    %7150 = vmatprep.subr.bf16.mxu0 %v6133
    %7151 = vmatpush1.bf16.msra.mxu0 %v6132
    %7152 = vmatprep.subr.bf16.mxu0 %v6165
    %7153 = vmatpush1.bf16.msra.mxu0 %v6164
    %7154 = vmatprep.subr.bf16.mxu0 %v6197
    %7155 = vmatpush1.bf16.msra.mxu0 %v6196
    %7156 = vmatprep.subr.bf16.mxu0 %v6229
    %7157 = vmatpush1.bf16.msra.mxu0 %v6228
    %7158 = vmatprep.subr.bf16.mxu0 %v6261
    %7159 = vmatpush1.bf16.msra.mxu0 %v6260
    %7160 = vmatprep.subr.bf16.mxu0 %v6293
    %7161 = vmatpush1.bf16.msra.mxu0 %v6292
    %7162 = vmatprep.subr.bf16.mxu0 %v6325
    %7163 = vmatpush1.bf16.msra.mxu0 %v6324
    %7164 = vmatprep.subr.bf16.mxu0 %v6357
    %7165 = vmatpush1.bf16.msra.mxu0 %v6356
    %7166 = vmatprep.mubr.bf16.mxu0 %v3647
    %7167 = vmatmul.mubr.bf16.gmra.mrb[0].mxu0 %v3646
    %v7168 = vpop.f32.mrb[0].mxu0
    %v7169 = vadd.f32 %v4219, %v7168
    %v7170 = vpop.f32.mrb[0].mxu0
    %v7171 = vadd.f32 %v4223, %v7170
    %v7172 = vpop.f32.mrb[0].mxu0
    %v7173 = vpop.f32.mrb[0].mxu0
    %7174 = vdwg.mxu0
    %7175 = vmatprep.subr.bf16.mxu0 %v5879
    %7176 = vmatpush1.bf16.msra.mxu0 %v5878
    %7177 = vmatprep.subr.bf16.mxu0 %v5911
    %7178 = vmatpush1.bf16.msra.mxu0 %v5910
    %7179 = vmatprep.subr.bf16.mxu0 %v5943
    %7180 = vmatpush1.bf16.msra.mxu0 %v5942
    %7181 = vmatprep.subr.bf16.mxu0 %v5975
    %7182 = vmatpush1.bf16.msra.mxu0 %v5974
    %7183 = vmatprep.subr.bf16.mxu0 %v6007
    %7184 = vmatpush1.bf16.msra.mxu0 %v6006
    %7185 = vmatprep.subr.bf16.mxu0 %v6039
    %7186 = vmatpush1.bf16.msra.mxu0 %v6038
    %7187 = vmatprep.subr.bf16.mxu0 %v6071
    %7188 = vmatpush1.bf16.msra.mxu0 %v6070
    %7189 = vmatprep.subr.bf16.mxu0 %v6103
    %7190 = vmatpush1.bf16.msra.mxu0 %v6102
    %7191 = vmatprep.subr.bf16.mxu0 %v6135
    %7192 = vmatpush1.bf16.msra.mxu0 %v6134
    %7193 = vmatprep.subr.bf16.mxu0 %v6167
    %7194 = vmatpush1.bf16.msra.mxu0 %v6166
    %7195 = vmatprep.subr.bf16.mxu0 %v6199
    %7196 = vmatpush1.bf16.msra.mxu0 %v6198
    %7197 = vmatprep.subr.bf16.mxu0 %v6231
    %7198 = vmatpush1.bf16.msra.mxu0 %v6230
    %7199 = vmatprep.subr.bf16.mxu0 %v6263
    %7200 = vmatpush1.bf16.msra.mxu0 %v6262
    %7201 = vmatprep.subr.bf16.mxu0 %v6295
    %7202 = vmatpush1.bf16.msra.mxu0 %v6294
    %7203 = vmatprep.subr.bf16.mxu0 %v6327
    %7204 = vmatpush1.bf16.msra.mxu0 %v6326
    %7205 = vmatprep.subr.bf16.mxu0 %v6359
    %7206 = vmatpush1.bf16.msra.mxu0 %v6358
    %7207 = vmatprep.mubr.bf16.mxu0 %v3647
    %7208 = vmatmul.mubr.bf16.gmra.mrb[0].mxu0 %v3646
    %v7209 = vpop.f32.mrb[0].mxu0
    %v7210 = vadd.f32 %v4227, %v7209
    %v7211 = vpop.f32.mrb[0].mxu0
    %v7212 = vadd.f32 %v4231, %v7211
    %v7213 = vpop.f32.mrb[0].mxu0
    %v7214 = vpop.f32.mrb[0].mxu0
    %7215 = vdwg.mxu0
    %7216 = vmatprep.subr.bf16.mxu0 %v5881
    %7217 = vmatpush1.bf16.msra.mxu0 %v5880
    %7218 = vmatprep.subr.bf16.mxu0 %v5913
    %7219 = vmatpush1.bf16.msra.mxu0 %v5912
    %7220 = vmatprep.subr.bf16.mxu0 %v5945
    %7221 = vmatpush1.bf16.msra.mxu0 %v5944
    %7222 = vmatprep.subr.bf16.mxu0 %v5977
    %7223 = vmatpush1.bf16.msra.mxu0 %v5976
    %7224 = vmatprep.subr.bf16.mxu0 %v6009
    %7225 = vmatpush1.bf16.msra.mxu0 %v6008
    %7226 = vmatprep.subr.bf16.mxu0 %v6041
    %7227 = vmatpush1.bf16.msra.mxu0 %v6040
    %7228 = vmatprep.subr.bf16.mxu0 %v6073
    %7229 = vmatpush1.bf16.msra.mxu0 %v6072
    %7230 = vmatprep.subr.bf16.mxu0 %v6105
    %7231 = vmatpush1.bf16.msra.mxu0 %v6104
    %7232 = vmatprep.subr.bf16.mxu0 %v6137
    %7233 = vmatpush1.bf16.msra.mxu0 %v6136
    %7234 = vmatprep.subr.bf16.mxu0 %v6169
    %7235 = vmatpush1.bf16.msra.mxu0 %v6168
    %7236 = vmatprep.subr.bf16.mxu0 %v6201
    %7237 = vmatpush1.bf16.msra.mxu0 %v6200
    %7238 = vmatprep.subr.bf16.mxu0 %v6233
    %7239 = vmatpush1.bf16.msra.mxu0 %v6232
    %7240 = vmatprep.subr.bf16.mxu0 %v6265
    %7241 = vmatpush1.bf16.msra.mxu0 %v6264
    %7242 = vmatprep.subr.bf16.mxu0 %v6297
    %7243 = vmatpush1.bf16.msra.mxu0 %v6296
    %7244 = vmatprep.subr.bf16.mxu0 %v6329
    %7245 = vmatpush1.bf16.msra.mxu0 %v6328
    %7246 = vmatprep.subr.bf16.mxu0 %v6361
    %7247 = vmatpush1.bf16.msra.mxu0 %v6360
    %7248 = vmatprep.mubr.bf16.mxu0 %v3647
    %7249 = vmatmul.mubr.bf16.gmra.mrb[0].mxu0 %v3646
    %v7250 = vpop.f32.mrb[0].mxu0
    %v7251 = vadd.f32 %v4235, %v7250
    %v7252 = vpop.f32.mrb[0].mxu0
    %v7253 = vadd.f32 %v4239, %v7252
    %v7254 = vpop.f32.mrb[0].mxu0
    %v7255 = vpop.f32.mrb[0].mxu0
    %7256 = vdwg.mxu0
    %7257 = vmatprep.subr.bf16.mxu0 %v5883
    %7258 = vmatpush1.bf16.msra.mxu0 %v5882
    %7259 = vmatprep.subr.bf16.mxu0 %v5915
    %7260 = vmatpush1.bf16.msra.mxu0 %v5914
    %7261 = vmatprep.subr.bf16.mxu0 %v5947
    %7262 = vmatpush1.bf16.msra.mxu0 %v5946
    %7263 = vmatprep.subr.bf16.mxu0 %v5979
    %7264 = vmatpush1.bf16.msra.mxu0 %v5978
    %7265 = vmatprep.subr.bf16.mxu0 %v6011
    %7266 = vmatpush1.bf16.msra.mxu0 %v6010
    %7267 = vmatprep.subr.bf16.mxu0 %v6043
    %7268 = vmatpush1.bf16.msra.mxu0 %v6042
    %7269 = vmatprep.subr.bf16.mxu0 %v6075
    %7270 = vmatpush1.bf16.msra.mxu0 %v6074
    %7271 = vmatprep.subr.bf16.mxu0 %v6107
    %7272 = vmatpush1.bf16.msra.mxu0 %v6106
    %7273 = vmatprep.subr.bf16.mxu0 %v6139
    %7274 = vmatpush1.bf16.msra.mxu0 %v6138
    %7275 = vmatprep.subr.bf16.mxu0 %v6171
    %7276 = vmatpush1.bf16.msra.mxu0 %v6170
    %7277 = vmatprep.subr.bf16.mxu0 %v6203
    %7278 = vmatpush1.bf16.msra.mxu0 %v6202
    %7279 = vmatprep.subr.bf16.mxu0 %v6235
    %7280 = vmatpush1.bf16.msra.mxu0 %v6234
    %7281 = vmatprep.subr.bf16.mxu0 %v6267
    %7282 = vmatpush1.bf16.msra.mxu0 %v6266
    %7283 = vmatprep.subr.bf16.mxu0 %v6299
    %7284 = vmatpush1.bf16.msra.mxu0 %v6298
    %7285 = vmatprep.subr.bf16.mxu0 %v6331
    %7286 = vmatpush1.bf16.msra.mxu0 %v6330
    %7287 = vmatprep.subr.bf16.mxu0 %v6363
    %7288 = vmatpush1.bf16.msra.mxu0 %v6362
    %7289 = vmatprep.mubr.bf16.mxu0 %v3647
    %7290 = vmatmul.mubr.bf16.gmra.mrb[0].mxu0 %v3646
    %v7291 = vpop.f32.mrb[0].mxu0
    %v7292 = vadd.f32 %v4243, %v7291
    %v7293 = vpop.f32.mrb[0].mxu0
    %v7294 = vadd.f32 %v4247, %v7293
    %v7295 = vpop.f32.mrb[0].mxu0
    %v7296 = vpop.f32.mrb[0].mxu0
    %7297 = vdwg.mxu0
    %7298 = vmatprep.subr.bf16.mxu0 %v5885
    %7299 = vmatpush1.bf16.msra.mxu0 %v5884
    %7300 = vmatprep.subr.bf16.mxu0 %v5917
    %7301 = vmatpush1.bf16.msra.mxu0 %v5916
    %7302 = vmatprep.subr.bf16.mxu0 %v5949
    %7303 = vmatpush1.bf16.msra.mxu0 %v5948
    %7304 = vmatprep.subr.bf16.mxu0 %v5981
    %7305 = vmatpush1.bf16.msra.mxu0 %v5980
    %7306 = vmatprep.subr.bf16.mxu0 %v6013
    %7307 = vmatpush1.bf16.msra.mxu0 %v6012
    %7308 = vmatprep.subr.bf16.mxu0 %v6045
    %7309 = vmatpush1.bf16.msra.mxu0 %v6044
    %7310 = vmatprep.subr.bf16.mxu0 %v6077
    %7311 = vmatpush1.bf16.msra.mxu0 %v6076
    %7312 = vmatprep.subr.bf16.mxu0 %v6109
    %7313 = vmatpush1.bf16.msra.mxu0 %v6108
    %7314 = vmatprep.subr.bf16.mxu0 %v6141
    %7315 = vmatpush1.bf16.msra.mxu0 %v6140
    %7316 = vmatprep.subr.bf16.mxu0 %v6173
    %7317 = vmatpush1.bf16.msra.mxu0 %v6172
    %7318 = vmatprep.subr.bf16.mxu0 %v6205
    %7319 = vmatpush1.bf16.msra.mxu0 %v6204
    %7320 = vmatprep.subr.bf16.mxu0 %v6237
    %7321 = vmatpush1.bf16.msra.mxu0 %v6236
    %7322 = vmatprep.subr.bf16.mxu0 %v6269
    %7323 = vmatpush1.bf16.msra.mxu0 %v6268
    %7324 = vmatprep.subr.bf16.mxu0 %v6301
    %7325 = vmatpush1.bf16.msra.mxu0 %v6300
    %7326 = vmatprep.subr.bf16.mxu0 %v6333
    %7327 = vmatpush1.bf16.msra.mxu0 %v6332
    %7328 = vmatprep.subr.bf16.mxu0 %v6365
    %7329 = vmatpush1.bf16.msra.mxu0 %v6364
    %7330 = vmatprep.mubr.bf16.mxu0 %v3647
    %7331 = vmatmul.mubr.bf16.gmra.mrb[0].mxu0 %v3646
    %v7332 = vpop.f32.mrb[0].mxu0
    %v7333 = vadd.f32 %v4251, %v7332
    %v7334 = vpop.f32.mrb[0].mxu0
    %v7335 = vadd.f32 %v4255, %v7334
    %v7336 = vpop.f32.mrb[0].mxu0
    %v7337 = vpop.f32.mrb[0].mxu0
    %7338 = vdwg.mxu0
    %7339 = vmatprep.subr.bf16.mxu0 %v5887
    %7340 = vmatpush1.bf16.msra.mxu0 %v5886
    %7341 = vmatprep.subr.bf16.mxu0 %v5919
    %7342 = vmatpush1.bf16.msra.mxu0 %v5918
    %7343 = vmatprep.subr.bf16.mxu0 %v5951
    %7344 = vmatpush1.bf16.msra.mxu0 %v5950
    %7345 = vmatprep.subr.bf16.mxu0 %v5983
    %7346 = vmatpush1.bf16.msra.mxu0 %v5982
    %7347 = vmatprep.subr.bf16.mxu0 %v6015
    %7348 = vmatpush1.bf16.msra.mxu0 %v6014
    %7349 = vmatprep.subr.bf16.mxu0 %v6047
    %7350 = vmatpush1.bf16.msra.mxu0 %v6046
    %7351 = vmatprep.subr.bf16.mxu0 %v6079
    %7352 = vmatpush1.bf16.msra.mxu0 %v6078
    %7353 = vmatprep.subr.bf16.mxu0 %v6111
    %7354 = vmatpush1.bf16.msra.mxu0 %v6110
    %7355 = vmatprep.subr.bf16.mxu0 %v6143
    %7356 = vmatpush1.bf16.msra.mxu0 %v6142
    %7357 = vmatprep.subr.bf16.mxu0 %v6175
    %7358 = vmatpush1.bf16.msra.mxu0 %v6174
    %7359 = vmatprep.subr.bf16.mxu0 %v6207
    %7360 = vmatpush1.bf16.msra.mxu0 %v6206
    %7361 = vmatprep.subr.bf16.mxu0 %v6239
    %7362 = vmatpush1.bf16.msra.mxu0 %v6238
    %7363 = vmatprep.subr.bf16.mxu0 %v6271
    %7364 = vmatpush1.bf16.msra.mxu0 %v6270
    %7365 = vmatprep.subr.bf16.mxu0 %v6303
    %7366 = vmatpush1.bf16.msra.mxu0 %v6302
    %7367 = vmatprep.subr.bf16.mxu0 %v6335
    %7368 = vmatpush1.bf16.msra.mxu0 %v6334
    %7369 = vmatprep.subr.bf16.mxu0 %v6367
    %7370 = vmatpush1.bf16.msra.mxu0 %v6366
    %7371 = vmatprep.mubr.bf16.mxu0 %v3647
    %7372 = vmatmul.mubr.bf16.gmra.mrb[0].mxu0 %v3646
    %v7373 = vpop.f32.mrb[0].mxu0
    %v7374 = vadd.f32 %v4259, %v7373
    %v7375 = vpop.f32.mrb[0].mxu0
    %v7376 = vadd.f32 %v4263, %v7375
    %v7377 = vpop.f32.mrb[0].mxu0
    %v7378 = vpop.f32.mrb[0].mxu0
    %7379 = vdwg.mxu0
    %7380 = vmatprep.subr.bf16.mxu0 %v5889
    %7381 = vmatpush1.bf16.msra.mxu0 %v5888
    %7382 = vmatprep.subr.bf16.mxu0 %v5921
    %7383 = vmatpush1.bf16.msra.mxu0 %v5920
    %7384 = vmatprep.subr.bf16.mxu0 %v5953
    %7385 = vmatpush1.bf16.msra.mxu0 %v5952
    %7386 = vmatprep.subr.bf16.mxu0 %v5985
    %7387 = vmatpush1.bf16.msra.mxu0 %v5984
    %7388 = vmatprep.subr.bf16.mxu0 %v6017
    %7389 = vmatpush1.bf16.msra.mxu0 %v6016
    %7390 = vmatprep.subr.bf16.mxu0 %v6049
    %7391 = vmatpush1.bf16.msra.mxu0 %v6048
    %7392 = vmatprep.subr.bf16.mxu0 %v6081
    %7393 = vmatpush1.bf16.msra.mxu0 %v6080
    %7394 = vmatprep.subr.bf16.mxu0 %v6113
    %7395 = vmatpush1.bf16.msra.mxu0 %v6112
    %7396 = vmatprep.subr.bf16.mxu0 %v6145
    %7397 = vmatpush1.bf16.msra.mxu0 %v6144
    %7398 = vmatprep.subr.bf16.mxu0 %v6177
    %7399 = vmatpush1.bf16.msra.mxu0 %v6176
    %7400 = vmatprep.subr.bf16.mxu0 %v6209
    %7401 = vmatpush1.bf16.msra.mxu0 %v6208
    %7402 = vmatprep.subr.bf16.mxu0 %v6241
    %7403 = vmatpush1.bf16.msra.mxu0 %v6240
    %7404 = vmatprep.subr.bf16.mxu0 %v6273
    %7405 = vmatpush1.bf16.msra.mxu0 %v6272
    %7406 = vmatprep.subr.bf16.mxu0 %v6305
    %7407 = vmatpush1.bf16.msra.mxu0 %v6304
    %7408 = vmatprep.subr.bf16.mxu0 %v6337
    %7409 = vmatpush1.bf16.msra.mxu0 %v6336
    %7410 = vmatprep.subr.bf16.mxu0 %v6369
    %7411 = vmatpush1.bf16.msra.mxu0 %v6368
    %7412 = vmatprep.mubr.bf16.mxu0 %v3647
    %7413 = vmatmul.mubr.bf16.gmra.mrb[0].mxu0 %v3646
    %v7414 = vpop.f32.mrb[0].mxu0
    %v7415 = vadd.f32 %v4267, %v7414
    %v7416 = vpop.f32.mrb[0].mxu0
    %v7417 = vadd.f32 %v4271, %v7416
    %v7418 = vpop.f32.mrb[0].mxu0
    %v7419 = vpop.f32.mrb[0].mxu0
    %7420 = vdwg.mxu0
    %7421 = vmatprep.subr.bf16.mxu0 %v5891
    %7422 = vmatpush1.bf16.msra.mxu0 %v5890
    %7423 = vmatprep.subr.bf16.mxu0 %v5923
    %7424 = vmatpush1.bf16.msra.mxu0 %v5922
    %7425 = vmatprep.subr.bf16.mxu0 %v5955
    %7426 = vmatpush1.bf16.msra.mxu0 %v5954
    %7427 = vmatprep.subr.bf16.mxu0 %v5987
    %7428 = vmatpush1.bf16.msra.mxu0 %v5986
    %7429 = vmatprep.subr.bf16.mxu0 %v6019
    %7430 = vmatpush1.bf16.msra.mxu0 %v6018
    %7431 = vmatprep.subr.bf16.mxu0 %v6051
    %7432 = vmatpush1.bf16.msra.mxu0 %v6050
    %7433 = vmatprep.subr.bf16.mxu0 %v6083
    %7434 = vmatpush1.bf16.msra.mxu0 %v6082
    %7435 = vmatprep.subr.bf16.mxu0 %v6115
    %7436 = vmatpush1.bf16.msra.mxu0 %v6114
    %7437 = vmatprep.subr.bf16.mxu0 %v6147
    %7438 = vmatpush1.bf16.msra.mxu0 %v6146
    %7439 = vmatprep.subr.bf16.mxu0 %v6179
    %7440 = vmatpush1.bf16.msra.mxu0 %v6178
    %7441 = vmatprep.subr.bf16.mxu0 %v6211
    %7442 = vmatpush1.bf16.msra.mxu0 %v6210
    %7443 = vmatprep.subr.bf16.mxu0 %v6243
    %7444 = vmatpush1.bf16.msra.mxu0 %v6242
    %7445 = vmatprep.subr.bf16.mxu0 %v6275
    %7446 = vmatpush1.bf16.msra.mxu0 %v6274
    %7447 = vmatprep.subr.bf16.mxu0 %v6307
    %7448 = vmatpush1.bf16.msra.mxu0 %v6306
    %7449 = vmatprep.subr.bf16.mxu0 %v6339
    %7450 = vmatpush1.bf16.msra.mxu0 %v6338
    %7451 = vmatprep.subr.bf16.mxu0 %v6371
    %7452 = vmatpush1.bf16.msra.mxu0 %v6370
    %7453 = vmatprep.mubr.bf16.mxu0 %v3647
    %7454 = vmatmul.mubr.bf16.gmra.mrb[0].mxu0 %v3646
    %v7455 = vpop.f32.mrb[0].mxu0
    %v7456 = vadd.f32 %v4275, %v7455
    %v7457 = vpop.f32.mrb[0].mxu0
    %v7458 = vadd.f32 %v4279, %v7457
    %v7459 = vpop.f32.mrb[0].mxu0
    %v7460 = vpop.f32.mrb[0].mxu0
    %7461 = vdwg.mxu0
    %7462 = vmatprep.subr.bf16.mxu0 %v5893
    %7463 = vmatpush1.bf16.msra.mxu0 %v5892
    %7464 = vmatprep.subr.bf16.mxu0 %v5925
    %7465 = vmatpush1.bf16.msra.mxu0 %v5924
    %7466 = vmatprep.subr.bf16.mxu0 %v5957
    %7467 = vmatpush1.bf16.msra.mxu0 %v5956
    %7468 = vmatprep.subr.bf16.mxu0 %v5989
    %7469 = vmatpush1.bf16.msra.mxu0 %v5988
    %7470 = vmatprep.subr.bf16.mxu0 %v6021
    %7471 = vmatpush1.bf16.msra.mxu0 %v6020
    %7472 = vmatprep.subr.bf16.mxu0 %v6053
    %7473 = vmatpush1.bf16.msra.mxu0 %v6052
    %7474 = vmatprep.subr.bf16.mxu0 %v6085
    %7475 = vmatpush1.bf16.msra.mxu0 %v6084
    %7476 = vmatprep.subr.bf16.mxu0 %v6117
    %7477 = vmatpush1.bf16.msra.mxu0 %v6116
    %7478 = vmatprep.subr.bf16.mxu0 %v6149
    %7479 = vmatpush1.bf16.msra.mxu0 %v6148
    %7480 = vmatprep.subr.bf16.mxu0 %v6181
    %7481 = vmatpush1.bf16.msra.mxu0 %v6180
    %7482 = vmatprep.subr.bf16.mxu0 %v6213
    %7483 = vmatpush1.bf16.msra.mxu0 %v6212
    %7484 = vmatprep.subr.bf16.mxu0 %v6245
    %7485 = vmatpush1.bf16.msra.mxu0 %v6244
    %7486 = vmatprep.subr.bf16.mxu0 %v6277
    %7487 = vmatpush1.bf16.msra.mxu0 %v6276
    %7488 = vmatprep.subr.bf16.mxu0 %v6309
    %7489 = vmatpush1.bf16.msra.mxu0 %v6308
    %7490 = vmatprep.subr.bf16.mxu0 %v6341
    %7491 = vmatpush1.bf16.msra.mxu0 %v6340
    %7492 = vmatprep.subr.bf16.mxu0 %v6373
    %7493 = vmatpush1.bf16.msra.mxu0 %v6372
    %7494 = vmatprep.mubr.bf16.mxu0 %v3647
    %7495 = vmatmul.mubr.bf16.gmra.mrb[0].mxu0 %v3646
    %v7496 = vpop.f32.mrb[0].mxu0
    %v7497 = vadd.f32 %v4283, %v7496
    %v7498 = vpop.f32.mrb[0].mxu0
    %v7499 = vadd.f32 %v4287, %v7498
    %v7500 = vpop.f32.mrb[0].mxu0
    %v7501 = vpop.f32.mrb[0].mxu0
    %7502 = vdwg.mxu0
    %7503 = vmatprep.subr.bf16.mxu0 %v5895
    %7504 = vmatpush1.bf16.msra.mxu0 %v5894
    %7505 = vmatprep.subr.bf16.mxu0 %v5927
    %7506 = vmatpush1.bf16.msra.mxu0 %v5926
    %7507 = vmatprep.subr.bf16.mxu0 %v5959
    %7508 = vmatpush1.bf16.msra.mxu0 %v5958
    %7509 = vmatprep.subr.bf16.mxu0 %v5991
    %7510 = vmatpush1.bf16.msra.mxu0 %v5990
    %7511 = vmatprep.subr.bf16.mxu0 %v6023
    %7512 = vmatpush1.bf16.msra.mxu0 %v6022
    %7513 = vmatprep.subr.bf16.mxu0 %v6055
    %7514 = vmatpush1.bf16.msra.mxu0 %v6054
    %7515 = vmatprep.subr.bf16.mxu0 %v6087
    %7516 = vmatpush1.bf16.msra.mxu0 %v6086
    %7517 = vmatprep.subr.bf16.mxu0 %v6119
    %7518 = vmatpush1.bf16.msra.mxu0 %v6118
    %7519 = vmatprep.subr.bf16.mxu0 %v6151
    %7520 = vmatpush1.bf16.msra.mxu0 %v6150
    %7521 = vmatprep.subr.bf16.mxu0 %v6183
    %7522 = vmatpush1.bf16.msra.mxu0 %v6182
    %7523 = vmatprep.subr.bf16.mxu0 %v6215
    %7524 = vmatpush1.bf16.msra.mxu0 %v6214
    %7525 = vmatprep.subr.bf16.mxu0 %v6247
    %7526 = vmatpush1.bf16.msra.mxu0 %v6246
    %7527 = vmatprep.subr.bf16.mxu0 %v6279
    %7528 = vmatpush1.bf16.msra.mxu0 %v6278
    %7529 = vmatprep.subr.bf16.mxu0 %v6311
    %7530 = vmatpush1.bf16.msra.mxu0 %v6310
    %7531 = vmatprep.subr.bf16.mxu0 %v6343
    %7532 = vmatpush1.bf16.msra.mxu0 %v6342
    %7533 = vmatprep.subr.bf16.mxu0 %v6375
    %7534 = vmatpush1.bf16.msra.mxu0 %v6374
    %7535 = vmatprep.mubr.bf16.mxu0 %v3647
    %7536 = vmatmul.mubr.bf16.gmra.mrb[0].mxu0 %v3646
    %v7537 = vpop.f32.mrb[0].mxu0
    %v7538 = vadd.f32 %v4291, %v7537
    %v7539 = vpop.f32.mrb[0].mxu0
    %v7540 = vadd.f32 %v4295, %v7539
    %v7541 = vpop.f32.mrb[0].mxu0
    %v7542 = vpop.f32.mrb[0].mxu0
    %7543 = vdwg.mxu0
    %v7576 = vcombine.low %v6923, %v6925
    %v7577 = vcombine.low %v6964, %v6966
    %v7579 = vunpack.c.l.s4 1983009808
    %v7580 = vunpack.c.0.s8 %v7579
    %v7581 = vlaneseq
    %v7582 = vshrl.u32 %v7581, 7
    %v7583 = vsub.s32 %v7580, %v7582
    %v7584 = vrot.slane %v7576, %v7583
    %v7586 = vunpack.c.l.s4 1983009808
    %v7587 = vunpack.c.0.s8 %v7586
    %v7588 = vlaneseq
    %v7589 = vshrl.u32 %v7588, 7
    %v7590 = vsub.s32 %v7587, %v7589
    %v7591 = vrot.slane %v7577, %v7590
    %v7592 = vcombine.low %v7584, %v7591
    %v7593 = vcombine.low %v7005, %v7007
    %v7594 = vcombine.low %v7046, %v7048
    %v7596 = vunpack.c.l.s4 1983009808
    %v7597 = vunpack.c.0.s8 %v7596
    %v7598 = vlaneseq
    %v7599 = vshrl.u32 %v7598, 7
    %v7600 = vsub.s32 %v7597, %v7599
    %v7601 = vrot.slane %v7593, %v7600
    %v7603 = vunpack.c.l.s4 1983009808
    %v7604 = vunpack.c.0.s8 %v7603
    %v7605 = vlaneseq
    %v7606 = vshrl.u32 %v7605, 7
    %v7607 = vsub.s32 %v7604, %v7606
    %v7608 = vrot.slane %v7594, %v7607
    %v7609 = vcombine.low %v7601, %v7608
    %v7610 = vcombine.low %v7087, %v7089
    %v7611 = vcombine.low %v7128, %v7130
    %v7613 = vunpack.c.l.s4 1983009808
    %v7614 = vunpack.c.0.s8 %v7613
    %v7615 = vlaneseq
    %v7616 = vshrl.u32 %v7615, 7
    %v7617 = vsub.s32 %v7614, %v7616
    %v7618 = vrot.slane %v7610, %v7617
    %v7620 = vunpack.c.l.s4 1983009808
    %v7621 = vunpack.c.0.s8 %v7620
    %v7622 = vlaneseq
    %v7623 = vshrl.u32 %v7622, 7
    %v7624 = vsub.s32 %v7621, %v7623
    %v7625 = vrot.slane %v7611, %v7624
    %v7626 = vcombine.low %v7618, %v7625
    %v7627 = vcombine.low %v7169, %v7171
    %v7628 = vcombine.low %v7210, %v7212
    %v7630 = vunpack.c.l.s4 1983009808
    %v7631 = vunpack.c.0.s8 %v7630
    %v7632 = vlaneseq
    %v7633 = vshrl.u32 %v7632, 7
    %v7634 = vsub.s32 %v7631, %v7633
    %v7635 = vrot.slane %v7627, %v7634
    %v7637 = vunpack.c.l.s4 1983009808
    %v7638 = vunpack.c.0.s8 %v7637
    %v7639 = vlaneseq
    %v7640 = vshrl.u32 %v7639, 7
    %v7641 = vsub.s32 %v7638, %v7640
    %v7642 = vrot.slane %v7628, %v7641
    %v7643 = vcombine.low %v7635, %v7642
    %v7644 = vcombine.low %v7251, %v7253
    %v7645 = vcombine.low %v7292, %v7294
    %v7647 = vunpack.c.l.s4 1983009808
    %v7648 = vunpack.c.0.s8 %v7647
    %v7649 = vlaneseq
    %v7650 = vshrl.u32 %v7649, 7
    %v7651 = vsub.s32 %v7648, %v7650
    %v7652 = vrot.slane %v7644, %v7651
    %v7654 = vunpack.c.l.s4 1983009808
    %v7655 = vunpack.c.0.s8 %v7654
    %v7656 = vlaneseq
    %v7657 = vshrl.u32 %v7656, 7
    %v7658 = vsub.s32 %v7655, %v7657
    %v7659 = vrot.slane %v7645, %v7658
    %v7660 = vcombine.low %v7652, %v7659
    %v7661 = vcombine.low %v7333, %v7335
    %v7662 = vcombine.low %v7374, %v7376
    %v7664 = vunpack.c.l.s4 1983009808
    %v7665 = vunpack.c.0.s8 %v7664
    %v7666 = vlaneseq
    %v7667 = vshrl.u32 %v7666, 7
    %v7668 = vsub.s32 %v7665, %v7667
    %v7669 = vrot.slane %v7661, %v7668
    %v7671 = vunpack.c.l.s4 1983009808
    %v7672 = vunpack.c.0.s8 %v7671
    %v7673 = vlaneseq
    %v7674 = vshrl.u32 %v7673, 7
    %v7675 = vsub.s32 %v7672, %v7674
    %v7676 = vrot.slane %v7662, %v7675
    %v7677 = vcombine.low %v7669, %v7676
    %v7678 = vcombine.low %v7415, %v7417
    %v7679 = vcombine.low %v7456, %v7458
    %v7681 = vunpack.c.l.s4 1983009808
    %v7682 = vunpack.c.0.s8 %v7681
    %v7683 = vlaneseq
    %v7684 = vshrl.u32 %v7683, 7
    %v7685 = vsub.s32 %v7682, %v7684
    %v7686 = vrot.slane %v7678, %v7685
    %v7688 = vunpack.c.l.s4 1983009808
    %v7689 = vunpack.c.0.s8 %v7688
    %v7690 = vlaneseq
    %v7691 = vshrl.u32 %v7690, 7
    %v7692 = vsub.s32 %v7689, %v7691
    %v7693 = vrot.slane %v7679, %v7692
    %v7694 = vcombine.low %v7686, %v7693
    %v7695 = vcombine.low %v7497, %v7499
    %v7696 = vcombine.low %v7538, %v7540
    %v7698 = vunpack.c.l.s4 1983009808
    %v7699 = vunpack.c.0.s8 %v7698
    %v7700 = vlaneseq
    %v7701 = vshrl.u32 %v7700, 7
    %v7702 = vsub.s32 %v7699, %v7701
    %v7703 = vrot.slane %v7695, %v7702
    %v7705 = vunpack.c.l.s4 1983009808
    %v7706 = vunpack.c.0.s8 %v7705
    %v7707 = vlaneseq
    %v7708 = vshrl.u32 %v7707, 7
    %v7709 = vsub.s32 %v7706, %v7708
    %v7710 = vrot.slane %v7696, %v7709
    %v7711 = vcombine.low %v7703, %v7710
    %7720 = vst [vmem:[#allocation23] sm:$0xff] %v7592
    %7721 = vst [vmem:[#allocation23 + $0x8] sm:$0xff] %v7609
    %7722 = vst [vmem:[#allocation23 + $0x10] sm:$0xff] %v7626
    %7723 = vst [vmem:[#allocation23 + $0x18] sm:$0xff] %v7643
    %7724 = vst [vmem:[#allocation23 + $0x20] sm:$0xff] %v7660
    %7725 = vst [vmem:[#allocation23 + $0x28] sm:$0xff] %v7677
    %7726 = vst [vmem:[#allocation23 + $0x30] sm:$0xff] %v7694
    %7727 = vst [vmem:[#allocation23 + $0x38] sm:$0xff] %v7711
    // Predicated region
    $region106: #{tpu_custom_call.1} parent=1 // pred_check
      _
    $region107: #{tpu_custom_call.1} parent=1 // pred_check_branch
      %7729 = sbr.rel (0) target = $region109
    $region108: #{tpu_custom_call.1} parent=1 // pred_region
      %s7731 = ssub.s32 1024, 1024
      %7732 = vsyncadd [#allocation4], %s7731
      %s7734 = sshll.u32 [#allocation23], 4
      %s7735 = int_to_ptr.vmem [resolvable:$true] %s7734
      %7737 = dma.vmem_to_hbm [thread:$0]  %s7735, 1024, %s13, [#allocation4]
    $region109: #{tpu_custom_call.1} parent=1 // pred_fallthru
      _
    // Predicated region
    $region110: #{tpu_custom_call.1} parent=1 // pred_check
      _
    $region111: #{tpu_custom_call.1} parent=1 // pred_check_branch
      %7739 = sbr.rel (0) target = $region113
    $region112: #{tpu_custom_call.1} parent=1 // pred_region
      %7740 = dma.done [#allocation4], 1024
    $region113: #{tpu_custom_call.1} parent=1 // pred_fallthru
      _
    %7741 = vsyncpa [#allocation3], 1
    %7742 = vsyncpa [#allocation6], 1
    %7743 = vsyncpa [#allocation9], 1
    %7744 = vsyncpa [#allocation12], 1
    %7745 = vsyncpa [#allocation15], 1
    %7746 = vsyncpa [#allocation18], 1
    %7747 = vsyncpa [#allocation21], 1
    %7748 = vsyncpa [#allocation4], 1

</llo_original>
